<compile_context>
chip_gen: v6e
topology: v6e:2x2x1
jax: 0.10.0
libtpu: 0.0.40
codegen_flags: <defaults>
</compile_context>

<pallas_src>
import functools

import jax
import jax.numpy as jnp
from jax import lax
from jax.experimental import pallas as pl
from jax.experimental.pallas import tpu as pltpu


def _round_up(x, m):
    return (x + m - 1) // m * m


# ----------------------------------------------------------------------------
# Fused kernel: conv1 + ReLU + conv2 + ReLU + Linear for Bb batch elements.
# Rows are stacked as Bb blocks of (T+2): [pad, t=0..T-1, pad] per batch.
# ----------------------------------------------------------------------------
def _encoder_kernel(x_ref, w1_ref, b1_ref, w2_ref, b2_ref, wo_ref, bo_ref,
                    o_ref, y1_ref, *, T, F1, F2, Cp, Bb):
    R = Bb * (T + 2)            # stacked rows (incl. per-batch pad rows)
    nf = F1 * Cp
    cdt = y1_ref.dtype          # matmul input dtype (bf16 fast / f32 exact)
    idim_p = x_ref.shape[-1]

    # ---- conv1 + ReLU: 3 accumulating matmuls (one per height tap) ---------
    # x_ref already holds the per-batch zero time-padding rows, so shifted row
    # views give the height taps.  Rows whose taps would cross a batch
    # boundary land exactly on the pad rows of the scratch and are zeroed
    # below.
    x2d = x_ref[...].reshape(R, idim_p)                       # (R, idim_p)
    acc1 = jnp.dot(x2d[0:R - 2], w1_ref[0], preferred_element_type=jnp.float32)
    acc1 = acc1 + jnp.dot(x2d[1:R - 1], w1_ref[1],
                          preferred_element_type=jnp.float32)
    acc1 = acc1 + jnp.dot(x2d[2:R], w1_ref[2],
                          preferred_element_type=jnp.float32)
    # ReLU + cast once, write straight into the scratch (shifted by +1 row so
    # each batch block is laid out [zero, y1(T rows), zero] for conv2).
    y1_ref[1:R - 1, :] = jnp.maximum(acc1 + b1_ref[...], 0.0).astype(cdt)
    zrow = jnp.zeros((1, nf), cdt)
    for bl in range(Bb):                                      # Bb static, small
        r0 = bl * (T + 2)
        y1_ref[r0:r0 + 1, :] = zrow                           # top pad of block
        y1_ref[r0 + T + 1:r0 + T + 2, :] = zrow               # bottom pad

    # ---- conv2 + ReLU (height taps fused: N = 3*Cp), then Linear (K=F2*Cp) --
    y2_cols = []
    for f2 in range(F2):                                      # F2 small & static
        c0 = 5 * f2 * Cp                                      # stride-5 window
        win = y1_ref[:, c0:c0 + 7 * Cp]                       # (R, 7*Cp), 1 read
        z = jnp.dot(win, w2_ref[...],
                    preferred_element_type=jnp.float32)       # (R, 3*Cp)
        # tap shift applied to the (narrow) result, not the wide patch
        acc2 = (z[0:R - 2, 0:Cp] + z[1:R - 1, Cp:2 * Cp]
                + z[2:R, 2 * Cp:3 * Cp])                      # (R-2, Cp)
        y2_cols.append(jnp.maximum(acc2 + b2_ref[...], 0.0).astype(cdt))
    y2_all = jnp.concatenate(y2_cols, axis=1)                 # (R-2, F2*Cp)
    out_full = jnp.dot(y2_all, wo_ref[...],
                       preferred_element_type=jnp.float32) + bo_ref[...]

    # Store the T valid rows of each batch block.
    for bl in range(Bb):
        r0 = bl * (T + 2)
        o_ref[bl] = out_full[r0:r0 + T].astype(o_ref.dtype)


# ----------------------------------------------------------------------------
# Host-side weight repacking (tiny, plain JAX, constant-folded under jit)
# ----------------------------------------------------------------------------
def _pack_params(params, idim, odim, F1, F2, Cp, idim_p, cdt):
    w1, b1 = params["w1"], params["b1"]            # (odim,1,3,7), (odim,)
    w2, b2 = params["w2"], params["b2"]            # (odim,odim,3,7), (odim,)
    wout, bout = params["wout"], params["bout"]    # (odim,odim*F2), (odim,)
    cpad = Cp - odim

    # conv1 -> (3, idim_p, F1*Cp): W1[kh, 5*f1+kw, f1*Cp+oc] = w1[oc,0,kh,kw]
    w1_t = jnp.pad(jnp.transpose(w1[:, 0], (1, 2, 0)),
                   ((0, 0), (0, 0), (0, cpad)))               # (3, 7, Cp)
    W1 = jnp.zeros((3, idim_p, F1, Cp), jnp.float32)
    for f1 in range(F1):
        W1 = W1.at[:, 5 * f1:5 * f1 + 7, f1, :].set(w1_t)
    W1 = W1.reshape(3, idim_p, F1 * Cp).astype(cdt)

    # conv2 (taps fused) -> (7*Cp, 3*Cp): W2[kw*Cp+ic, kh*Cp+oc] = w2[oc,ic,kh,kw]
    W2 = jnp.pad(jnp.transpose(w2, (3, 1, 2, 0)),             # (kw, ic, kh, oc)
                 ((0, 0), (0, cpad), (0, 0), (0, cpad)))
    W2 = W2.reshape(7 * Cp, 3 * Cp).astype(cdt)

    # out Linear (K fused) -> (F2*Cp, Cp): Wout[f2*Cp+ic, oc] = wout[oc, ic*F2+f2]
    # (matches PyTorch's x.transpose(1,2).view(b,t,c*f) channel-major flatten)
    Wout = jnp.pad(jnp.transpose(wout.reshape(odim, odim, F2), (2, 1, 0)),
                   ((0, 0), (0, cpad), (0, cpad)))
    Wout = Wout.reshape(F2 * Cp, Cp).astype(cdt)

    b1p = jnp.tile(jnp.pad(b1, (0, cpad)), F1).reshape(1, F1 * Cp)
    b2p = jnp.pad(b2, (0, cpad)).reshape(1, Cp)
    bop = jnp.pad(bout, (0, cpad)).reshape(1, Cp)
    return (W1, b1p.astype(jnp.float32), W2, b2p.astype(jnp.float32),
            Wout, bop.astype(jnp.float32))


# ----------------------------------------------------------------------------
# Conv2dEncoder forward
# ----------------------------------------------------------------------------
@functools.partial(jax.jit, static_argnames=("odim", "use_bf16"))
def conv2d_encoder_forward(x, params, *, odim, use_bf16=True):
    """x: (B, T, idim) float32 -> (B, T, odim). Matches Conv2dEncoder.forward."""
    B, T, idim = x.shape
    F1 = (idim - 7) // 5 + 1               # freq dim after conv1
    F2 = (F1 - 7) // 5 + 1                 # == down_dim
    Cp = max(128, _round_up(odim, 128))    # lane-dense padded channel count
    idim_p = _round_up(idim, 128)          # lane-dense padded input features
    cdt = jnp.bfloat16 if use_bf16 else jnp.float32
    assert params["wout"].shape == (odim, odim * F2)

    # Fold batch into the matmul M dimension: Bb batch elements per grid step,
    # each contributing T+2 stacked rows (target M ~ 256 per step).
    Bb = max(1, min(B, -(-256 // (T + 2))))
    G = -(-B // Bb)                        # grid steps
    B_pad = G * Bb
    R = Bb * (T + 2)

    W1, b1p, W2c, b2p, Woc, bop = _pack_params(
        params, idim, odim, F1, F2, Cp, idim_p, cdt)

    # +1 zero row each side of T (conv1 height padding); pad freq to idim_p;
    # pad batch to a multiple of Bb; cast to the matmul dtype on the host.
    x_pad = jnp.pad(x, ((0, B_pad - B), (1, 1), (0, idim_p - idim))).astype(cdt)

    kernel = functools.partial(_encoder_kernel, T=T, F1=F1, F2=F2, Cp=Cp, Bb=Bb)
    out = pl.pallas_call(
        kernel,
        out_shape=jax.ShapeDtypeStruct((B_pad, T, Cp), jnp.float32),
        grid_spec=pltpu.PrefetchScalarGridSpec(
            num_scalar_prefetch=0,
            grid=(G,),
            in_specs=[
                pl.BlockSpec((Bb, T + 2, idim_p), lambda g: (g, 0, 0)),
                pl.BlockSpec((3, idim_p, F1 * Cp), lambda g: (0, 0, 0)),
                pl.BlockSpec((1, F1 * Cp), lambda g: (0, 0)),
                pl.BlockSpec((7 * Cp, 3 * Cp), lambda g: (0, 0)),
                pl.BlockSpec((1, Cp), lambda g: (0, 0)),
                pl.BlockSpec((F2 * Cp, Cp), lambda g: (0, 0)),
                pl.BlockSpec((1, Cp), lambda g: (0, 0)),
            ],
            out_specs=pl.BlockSpec((Bb, T, Cp), lambda g: (g, 0, 0)),
            scratch_shapes=[pltpu.VMEM((R, F1 * Cp), cdt)],
        ),
        compiler_params=pltpu.CompilerParams(
            dimension_semantics=("parallel",),
            vmem_limit_bytes=32 * 1024 * 1024,
        ),
    )(x_pad, W1, b1p, W2c, b2p, Woc, bop)

    # A consumer that can take the lane-padded (B, T, Cp) slab should use
    # out[:B] directly and skip this extra HBM slice pass.
    return out[:B, :, :odim]


# ----------------------------------------------------------------------------
# Parameter init + pure-JAX reference (for correctness check)
# ----------------------------------------------------------------------------
def init_params(key, idim, odim):
    k1, k2, k3, k4, k5, k6 = jax.random.split(key, 6)
    down_dim = ((idim - 2) // 5 - 2) // 5
    params = {
        "w1": jax.random.normal(k1, (odim, 1, 3, 7), jnp.float32) * 0.1,
        "b1": jax.random.normal(k2, (odim,), jnp.float32) * 0.1,
        "w2": jax.random.normal(k3, (odim, odim, 3, 7), jnp.float32) * 0.1,
        "b2": jax.random.normal(k4, (odim,), jnp.float32) * 0.1,
        "wout": jax.random.normal(k5, (odim, odim * down_dim), jnp.float32) * 0.1,
        "bout": jax.random.normal(k6, (odim,), jnp.float32) * 0.1,
    }
    return params, down_dim


def ref_forward(x, params):
    y = x[:, None, :, :]
    y = lax.conv_general_dilated(y, params["w1"], (1, 5), ((1, 1), (0, 0)))
    y = jnp.maximum(y + params["b1"][None, :, None, None], 0.0)
    y = lax.conv_general_dilated(y, params["w2"], (1, 5), ((1, 1), (0, 0)))
    y = jnp.maximum(y + params["b2"][None, :, None, None], 0.0)
    b, c, t, f = y.shape
    y = y.transpose(0, 2, 1, 3).reshape(b, t, c * f)
    return y @ params["wout"].T + params["bout"]


if __name__ == "__main__":
    B, T, idim, odim = 2, 8, 62, 16  # down_dim = ((62-2)//5 - 2)//5 = 2
    key = jax.random.PRNGKey(0)
    kx, kp = jax.random.split(key)
    x = jax.random.normal(kx, (B, T, idim), jnp.float32)
    params, down_dim = init_params(kp, idim, odim)

    ref = jax.block_until_ready(ref_forward(x, params))

    # Exact (f32-matmul) path: tight check against the XLA reference.
    out_f32 = jax.block_until_ready(
        conv2d_encoder_forward(x, params, odim=odim, use_bf16=False))
    assert out_f32.shape == (B, T, odim), out_f32.shape
    err_f32 = float(jnp.max(jnp.abs(out_f32 - ref)))
    assert err_f32 < 2e-3, err_f32

    # Fast path (bf16 matmul inputs, f32 accumulate) — recommended config.
    out_bf16 = jax.block_until_ready(
        conv2d_encoder_forward(x, params, odim=odim, use_bf16=True))
    assert out_bf16.shape == (B, T, odim), out_bf16.shape
    err_bf16 = float(jnp.max(jnp.abs(out_bf16 - ref)))
    assert err_bf16 < 5e-2, err_bf16

    print("KERNEL_OK")
</pallas_src>

<mosaic_0001>
module attributes {stable_mosaic.version = 11 : i64} {
  func.func @_encoder_kernel(%arg0: i32, %arg1: memref<2x10x128xf32, #tpu.memory_space<vmem>>, %arg2: memref<3x128x1536xf32, #tpu.memory_space<vmem>>, %arg3: memref<1x1536xf32, #tpu.memory_space<vmem>>, %arg4: memref<896x384xf32, #tpu.memory_space<vmem>>, %arg5: memref<1x128xf32, #tpu.memory_space<vmem>>, %arg6: memref<256x128xf32, #tpu.memory_space<vmem>>, %arg7: memref<1x128xf32, #tpu.memory_space<vmem>>, %arg8: memref<2x8x128xf32, #tpu.memory_space<vmem>>, %arg9: memref<20x1536xf32, #tpu.memory_space<vmem>>) attributes {dimension_semantics = [#tpu.dimension_semantics<parallel>], iteration_bounds = array<i64: 1>, scalar_prefetch = 0 : i64, scratch_operands = 1 : i64, tpu.core_type = #tpu.core_type<tc>, window_params = [{transform_indices = @transform_0, window_bounds = array<i64: 2, 10, 128>}, {pipeline_mode = #tpu.pipeline_mode<synchronous>, transform_indices = @transform_1, window_bounds = array<i64: 3, 128, 1536>}, {pipeline_mode = #tpu.pipeline_mode<synchronous>, transform_indices = @transform_2, window_bounds = array<i64: 1, 1536>}, {pipeline_mode = #tpu.pipeline_mode<synchronous>, transform_indices = @transform_3, window_bounds = array<i64: 896, 384>}, {pipeline_mode = #tpu.pipeline_mode<synchronous>, transform_indices = @transform_4, window_bounds = array<i64: 1, 128>}, {pipeline_mode = #tpu.pipeline_mode<synchronous>, transform_indices = @transform_5, window_bounds = array<i64: 256, 128>}, {pipeline_mode = #tpu.pipeline_mode<synchronous>, transform_indices = @transform_6, window_bounds = array<i64: 1, 128>}, {transform_indices = @transform_7, window_bounds = array<i64: 2, 8, 128>}]} {
    %c0 = arith.constant 0 : index
    %c0_0 = arith.constant 0 : index
    %c0_1 = arith.constant 0 : index
    %0 = vector.load %arg1[%c0, %c0_0, %c0_1] : memref<2x10x128xf32, #tpu.memory_space<vmem>>, vector<2x10x128xf32>
    %1 = vector.shape_cast %0 : vector<2x10x128xf32> to vector<20x128xf32>
    %2 = vector.extract_strided_slice %1 {offsets = [0, 0], sizes = [18, 128], strides = [1, 1]} : vector<20x128xf32> to vector<18x128xf32>
    %c0_2 = arith.constant 0 : index
    %c0_3 = arith.constant 0 : index
    %c0_4 = arith.constant 0 : index
    %3 = vector.load %arg2[%c0_2, %c0_3, %c0_4] : memref<3x128x1536xf32, #tpu.memory_space<vmem>>, vector<1x128x1536xf32>
    %4 = vector.shape_cast %3 : vector<1x128x1536xf32> to vector<128x1536xf32>
    %cst = arith.constant dense<0.000000e+00> : vector<18x1536xf32>
    %5 = tpu.matmul %2, %4, %cst {dimension_numbers = #tpu.dot_dimension_numbers<[1], [0], [0], [1], [0, 0, 1, 1], [], []>} : vector<18x128xf32>, vector<128x1536xf32>, vector<18x1536xf32> -> vector<18x1536xf32>
    %6 = vector.extract_strided_slice %1 {offsets = [1, 0], sizes = [18, 128], strides = [1, 1]} : vector<20x128xf32> to vector<18x128xf32>
    %c1 = arith.constant 1 : index
    %c0_5 = arith.constant 0 : index
    %c0_6 = arith.constant 0 : index
    %7 = vector.load %arg2[%c1, %c0_5, %c0_6] : memref<3x128x1536xf32, #tpu.memory_space<vmem>>, vector<1x128x1536xf32>
    %8 = vector.shape_cast %7 : vector<1x128x1536xf32> to vector<128x1536xf32>
    %cst_7 = arith.constant dense<0.000000e+00> : vector<18x1536xf32>
    %9 = tpu.matmul %6, %8, %cst_7 {dimension_numbers = #tpu.dot_dimension_numbers<[1], [0], [0], [1], [0, 0, 1, 1], [], []>} : vector<18x128xf32>, vector<128x1536xf32>, vector<18x1536xf32> -> vector<18x1536xf32>
    %10 = arith.addf %5, %9 : vector<18x1536xf32>
    %11 = vector.extract_strided_slice %1 {offsets = [2, 0], sizes = [18, 128], strides = [1, 1]} : vector<20x128xf32> to vector<18x128xf32>
    %c2 = arith.constant 2 : index
    %c0_8 = arith.constant 0 : index
    %c0_9 = arith.constant 0 : index
    %12 = vector.load %arg2[%c2, %c0_8, %c0_9] : memref<3x128x1536xf32, #tpu.memory_space<vmem>>, vector<1x128x1536xf32>
    %13 = vector.shape_cast %12 : vector<1x128x1536xf32> to vector<128x1536xf32>
    %cst_10 = arith.constant dense<0.000000e+00> : vector<18x1536xf32>
    %14 = tpu.matmul %11, %13, %cst_10 {dimension_numbers = #tpu.dot_dimension_numbers<[1], [0], [0], [1], [0, 0, 1, 1], [], []>} : vector<18x128xf32>, vector<128x1536xf32>, vector<18x1536xf32> -> vector<18x1536xf32>
    %15 = arith.addf %10, %14 : vector<18x1536xf32>
    %c0_11 = arith.constant 0 : index
    %c0_12 = arith.constant 0 : index
    %16 = vector.load %arg3[%c0_11, %c0_12] : memref<1x1536xf32, #tpu.memory_space<vmem>>, vector<1x1536xf32>
    %17 = vector.broadcast %16 : vector<1x1536xf32> to vector<18x1536xf32>
    %18 = arith.addf %15, %17 : vector<18x1536xf32>
    %cst_13 = arith.constant 0.000000e+00 : f32
    %19 = vector.broadcast %cst_13 : f32 to vector<18x1536xf32>
    %20 = arith.maximumf %18, %19 : vector<18x1536xf32>
    %c1_14 = arith.constant 1 : index
    %c0_15 = arith.constant 0 : index
    %21 = vector.load %arg9[%c1_14, %c0_15] : memref<20x1536xf32, #tpu.memory_space<vmem>>, vector<18x1536xf32>
    tpu.vector_store %arg9[%c1_14, %c0_15], %20 {strides = array<i32>} : memref<20x1536xf32, #tpu.memory_space<vmem>>, vector<18x1536xf32>,
    %cst_16 = arith.constant 0.000000e+00 : f32
    %22 = vector.broadcast %cst_16 : f32 to vector<1x1536xf32>
    %c0_17 = arith.constant 0 : index
    %c0_18 = arith.constant 0 : index
    %23 = vector.load %arg9[%c0_17, %c0_18] : memref<20x1536xf32, #tpu.memory_space<vmem>>, vector<1x1536xf32>
    tpu.vector_store %arg9[%c0_17, %c0_18], %22 {strides = array<i32>} : memref<20x1536xf32, #tpu.memory_space<vmem>>, vector<1x1536xf32>,
    %c9 = arith.constant 9 : index
    %c0_19 = arith.constant 0 : index
    %24 = vector.load %arg9[%c9, %c0_19] : memref<20x1536xf32, #tpu.memory_space<vmem>>, vector<1x1536xf32>
    tpu.vector_store %arg9[%c9, %c0_19], %22 {strides = array<i32>} : memref<20x1536xf32, #tpu.memory_space<vmem>>, vector<1x1536xf32>,
    %c10 = arith.constant 10 : index
    %c0_20 = arith.constant 0 : index
    %25 = vector.load %arg9[%c10, %c0_20] : memref<20x1536xf32, #tpu.memory_space<vmem>>, vector<1x1536xf32>
    tpu.vector_store %arg9[%c10, %c0_20], %22 {strides = array<i32>} : memref<20x1536xf32, #tpu.memory_space<vmem>>, vector<1x1536xf32>,
    %c19 = arith.constant 19 : index
    %c0_21 = arith.constant 0 : index
    %26 = vector.load %arg9[%c19, %c0_21] : memref<20x1536xf32, #tpu.memory_space<vmem>>, vector<1x1536xf32>
    tpu.vector_store %arg9[%c19, %c0_21], %22 {strides = array<i32>} : memref<20x1536xf32, #tpu.memory_space<vmem>>, vector<1x1536xf32>,
    %c0_22 = arith.constant 0 : index
    %c0_23 = arith.constant 0 : index
    %27 = vector.load %arg9[%c0_22, %c0_23] : memref<20x1536xf32, #tpu.memory_space<vmem>>, vector<20x896xf32>
    %c0_24 = arith.constant 0 : index
    %c0_25 = arith.constant 0 : index
    %28 = vector.load %arg4[%c0_24, %c0_25] : memref<896x384xf32, #tpu.memory_space<vmem>>, vector<896x384xf32>
    %cst_26 = arith.constant dense<0.000000e+00> : vector<20x384xf32>
    %29 = tpu.matmul %27, %28, %cst_26 {dimension_numbers = #tpu.dot_dimension_numbers<[1], [0], [0], [1], [0, 0, 1, 1], [], []>} : vector<20x896xf32>, vector<896x384xf32>, vector<20x384xf32> -> vector<20x384xf32>
    %30 = vector.extract_strided_slice %29 {offsets = [0, 0], sizes = [18, 128], strides = [1, 1]} : vector<20x384xf32> to vector<18x128xf32>
    %31 = vector.extract_strided_slice %29 {offsets = [1, 128], sizes = [18, 128], strides = [1, 1]} : vector<20x384xf32> to vector<18x128xf32>
    %32 = arith.addf %30, %31 : vector<18x128xf32>
    %33 = vector.extract_strided_slice %29 {offsets = [2, 256], sizes = [18, 128], strides = [1, 1]} : vector<20x384xf32> to vector<18x128xf32>
    %34 = arith.addf %32, %33 : vector<18x128xf32>
    %c0_27 = arith.constant 0 : index
    %c0_28 = arith.constant 0 : index
    %35 = vector.load %arg5[%c0_27, %c0_28] : memref<1x128xf32, #tpu.memory_space<vmem>>, vector<1x128xf32>
    %36 = vector.broadcast %35 : vector<1x128xf32> to vector<18x128xf32>
    %37 = arith.addf %34, %36 : vector<18x128xf32>
    %cst_29 = arith.constant 0.000000e+00 : f32
    %38 = vector.broadcast %cst_29 : f32 to vector<18x128xf32>
    %39 = arith.maximumf %37, %38 : vector<18x128xf32>
    %c0_30 = arith.constant 0 : index
    %c640 = arith.constant 640 : index
    %40 = vector.load %arg9[%c0_30, %c640] : memref<20x1536xf32, #tpu.memory_space<vmem>>, vector<20x896xf32>
    %c0_31 = arith.constant 0 : index
    %c0_32 = arith.constant 0 : index
    %41 = vector.load %arg4[%c0_31, %c0_32] : memref<896x384xf32, #tpu.memory_space<vmem>>, vector<896x384xf32>
    %cst_33 = arith.constant dense<0.000000e+00> : vector<20x384xf32>
    %42 = tpu.matmul %40, %41, %cst_33 {dimension_numbers = #tpu.dot_dimension_numbers<[1], [0], [0], [1], [0, 0, 1, 1], [], []>} : vector<20x896xf32>, vector<896x384xf32>, vector<20x384xf32> -> vector<20x384xf32>
    %43 = vector.extract_strided_slice %42 {offsets = [0, 0], sizes = [18, 128], strides = [1, 1]} : vector<20x384xf32> to vector<18x128xf32>
    %44 = vector.extract_strided_slice %42 {offsets = [1, 128], sizes = [18, 128], strides = [1, 1]} : vector<20x384xf32> to vector<18x128xf32>
    %45 = arith.addf %43, %44 : vector<18x128xf32>
    %46 = vector.extract_strided_slice %42 {offsets = [2, 256], sizes = [18, 128], strides = [1, 1]} : vector<20x384xf32> to vector<18x128xf32>
    %47 = arith.addf %45, %46 : vector<18x128xf32>
    %c0_34 = arith.constant 0 : index
    %c0_35 = arith.constant 0 : index
    %48 = vector.load %arg5[%c0_34, %c0_35] : memref<1x128xf32, #tpu.memory_space<vmem>>, vector<1x128xf32>
    %49 = vector.broadcast %48 : vector<1x128xf32> to vector<18x128xf32>
    %50 = arith.addf %47, %49 : vector<18x128xf32>
    %cst_36 = arith.constant 0.000000e+00 : f32
    %51 = vector.broadcast %cst_36 : f32 to vector<18x128xf32>
    %52 = arith.maximumf %50, %51 : vector<18x128xf32>
    %53 = tpu.concatenate %39, %52 in 1 : vector<18x128xf32>, vector<18x128xf32> -> vector<18x256xf32>
    %c0_37 = arith.constant 0 : index
    %c0_38 = arith.constant 0 : index
    %54 = vector.load %arg6[%c0_37, %c0_38] : memref<256x128xf32, #tpu.memory_space<vmem>>, vector<256x128xf32>
    %cst_39 = arith.constant dense<0.000000e+00> : vector<18x128xf32>
    %55 = tpu.matmul %53, %54, %cst_39 {dimension_numbers = #tpu.dot_dimension_numbers<[1], [0], [0], [1], [0, 0, 1, 1], [], []>} : vector<18x256xf32>, vector<256x128xf32>, vector<18x128xf32> -> vector<18x128xf32>
    %c0_40 = arith.constant 0 : index
    %c0_41 = arith.constant 0 : index
    %56 = vector.load %arg7[%c0_40, %c0_41] : memref<1x128xf32, #tpu.memory_space<vmem>>, vector<1x128xf32>
    %57 = vector.broadcast %56 : vector<1x128xf32> to vector<18x128xf32>
    %58 = arith.addf %55, %57 : vector<18x128xf32>
    %59 = vector.extract_strided_slice %58 {offsets = [0, 0], sizes = [8, 128], strides = [1, 1]} : vector<18x128xf32> to vector<8x128xf32>
    %c0_42 = arith.constant 0 : index
    %c0_43 = arith.constant 0 : index
    %c0_44 = arith.constant 0 : index
    %60 = vector.load %arg8[%c0_42, %c0_43, %c0_44] : memref<2x8x128xf32, #tpu.memory_space<vmem>>, vector<1x8x128xf32>
    %61 = vector.shape_cast %60 : vector<1x8x128xf32> to vector<8x128xf32>
    %62 = vector.shape_cast %59 : vector<8x128xf32> to vector<1x8x128xf32>
    tpu.vector_store %arg8[%c0_42, %c0_43, %c0_44], %62 {strides = array<i32>} : memref<2x8x128xf32, #tpu.memory_space<vmem>>, vector<1x8x128xf32>,
    %63 = vector.extract_strided_slice %58 {offsets = [10, 0], sizes = [8, 128], strides = [1, 1]} : vector<18x128xf32> to vector<8x128xf32>
    %c1_45 = arith.constant 1 : index
    %c0_46 = arith.constant 0 : index
    %c0_47 = arith.constant 0 : index
    %64 = vector.load %arg8[%c1_45, %c0_46, %c0_47] : memref<2x8x128xf32, #tpu.memory_space<vmem>>, vector<1x8x128xf32>
    %65 = vector.shape_cast %64 : vector<1x8x128xf32> to vector<8x128xf32>
    %66 = vector.shape_cast %63 : vector<8x128xf32> to vector<1x8x128xf32>
    tpu.vector_store %arg8[%c1_45, %c0_46, %c0_47], %66 {strides = array<i32>} : memref<2x8x128xf32, #tpu.memory_space<vmem>>, vector<1x8x128xf32>,
    return
  }
  func.func @transform_0(%arg0: i32) -> (i32, i32, i32) {
    %c0_i32 = arith.constant 0 : i32
    %c0_i32_0 = arith.constant 0 : i32
    %c0_i32_1 = arith.constant 0 : i32
    return %arg0, %c0_i32, %c0_i32_0 : i32, i32, i32
  }
  func.func @transform_1(%arg0: i32) -> (i32, i32, i32) {
    %c0_i32 = arith.constant 0 : i32
    %c0_i32_0 = arith.constant 0 : i32
    %c0_i32_1 = arith.constant 0 : i32
    %c0_i32_2 = arith.constant 0 : i32
    return %c0_i32, %c0_i32_0, %c0_i32_1 : i32, i32, i32
  }
  func.func @transform_2(%arg0: i32) -> (i32, i32) {
    %c0_i32 = arith.constant 0 : i32
    %c0_i32_0 = arith.constant 0 : i32
    %c0_i32_1 = arith.constant 0 : i32
    return %c0_i32, %c0_i32_0 : i32, i32
  }
  func.func @transform_3(%arg0: i32) -> (i32, i32) {
    %c0_i32 = arith.constant 0 : i32
    %c0_i32_0 = arith.constant 0 : i32
    %c0_i32_1 = arith.constant 0 : i32
    return %c0_i32, %c0_i32_0 : i32, i32
  }
  func.func @transform_4(%arg0: i32) -> (i32, i32) {
    %c0_i32 = arith.constant 0 : i32
    %c0_i32_0 = arith.constant 0 : i32
    %c0_i32_1 = arith.constant 0 : i32
    return %c0_i32, %c0_i32_0 : i32, i32
  }
  func.func @transform_5(%arg0: i32) -> (i32, i32) {
    %c0_i32 = arith.constant 0 : i32
    %c0_i32_0 = arith.constant 0 : i32
    %c0_i32_1 = arith.constant 0 : i32
    return %c0_i32, %c0_i32_0 : i32, i32
  }
  func.func @transform_6(%arg0: i32) -> (i32, i32) {
    %c0_i32 = arith.constant 0 : i32
    %c0_i32_0 = arith.constant 0 : i32
    %c0_i32_1 = arith.constant 0 : i32
    return %c0_i32, %c0_i32_0 : i32, i32
  }
  func.func @transform_7(%arg0: i32) -> (i32, i32, i32) {
    %c0_i32 = arith.constant 0 : i32
    %c0_i32_0 = arith.constant 0 : i32
    %c0_i32_1 = arith.constant 0 : i32
    return %arg0, %c0_i32, %c0_i32_0 : i32, i32, i32
  }
}

</mosaic_0001>

<llo_original>
// kernel: conv2d_encoder_forward.1
$region0: #{conv2d_encoder_forward.1}
  #allocation0 [shape = 'u32[]', space=smem, size = 0x4, offset = 0x4, fixed_abs, tag = 'smem constant byte address 0x4 - core index']
  #allocation1 [shape = 'u32[144,128]{1,0:T(1,128)}', space=vmem, size = 0x12000, scoped, tag = 'internal scratch']
  #allocation2 [shape = 'f32[20,1536]{1,0:T(8,128)}', space=vmem, size = 0x24000, scoped, tag = 'scratch operand']
  %s0 = inlined_call_operand.vmem [shape: f32[2,10,128], index: 0, kind: input, shape index: {}]
  %s1 = inlined_call_operand.vmem [shape: f32[3,128,1536], index: 1, kind: input, shape index: {}]
  %s2 = inlined_call_operand.vmem [shape: f32[1,1536], index: 2, kind: input, shape index: {}]
  %s3 = inlined_call_operand.vmem [shape: f32[896,384], index: 3, kind: input, shape index: {}]
  %s4 = inlined_call_operand.vmem [shape: f32[1,128], index: 4, kind: input, shape index: {}]
  %s5 = inlined_call_operand.vmem [shape: f32[256,128], index: 5, kind: input, shape index: {}]
  %s6 = inlined_call_operand.vmem [shape: f32[1,128], index: 6, kind: input, shape index: {}]
  %s7 = inlined_call_operand.hbm [shape: f32[2,8,128], index: 7, kind: output, shape index: {}]
  %s8 = sld [smem:[#allocation0]]
  $region38: #{conv2d_encoder_forward.1} parent=0
    _
  %s10 = ssub.s32 1, %s8
  %s11 = scalar_select 0, %s10, %s8
  $region1: #{conv2d_encoder_forward.1} parent=0
    #allocation3 [shape = 'u8[8192]{0}', space=vmem, size = 0x2000, scoped, tag = 'output window, operand 0, single buffered']
    #allocation4 [shape = 's32[1]{0}', space=sflag, size = 0x4, scoped, tag = 'scoped memory for conv2d_encoder_forward.1']
    %12 = vsyncpa [#allocation4], 0
    // Predicated region
    $region2: #{conv2d_encoder_forward.1} parent=1 // pred_check
      _
    $region3: #{conv2d_encoder_forward.1} parent=1 // pred_check_branch
      %14 = sbr.rel (0) target = $region5
    $region4: #{conv2d_encoder_forward.1} parent=1 // pred_region
      _
    $region5: #{conv2d_encoder_forward.1} parent=1 // pred_fallthru
      _
    // Predicated region
    $region6: #{conv2d_encoder_forward.1} parent=1 // pred_check
      _
    $region7: #{conv2d_encoder_forward.1} parent=1 // pred_check_branch
      %16 = sbr.rel (0) target = $region9
    $region8: #{conv2d_encoder_forward.1} parent=1 // pred_region
      _
    $region9: #{conv2d_encoder_forward.1} parent=1 // pred_fallthru
      _
    // Predicated region
    $region10: #{conv2d_encoder_forward.1} parent=1 // pred_check
      _
    $region11: #{conv2d_encoder_forward.1} parent=1 // pred_check_branch
      %18 = sbr.rel (0) target = $region13
    $region12: #{conv2d_encoder_forward.1} parent=1 // pred_region
      _
    $region13: #{conv2d_encoder_forward.1} parent=1 // pred_fallthru
      _
    // Predicated region
    $region14: #{conv2d_encoder_forward.1} parent=1 // pred_check
      _
    $region15: #{conv2d_encoder_forward.1} parent=1 // pred_check_branch
      %20 = sbr.rel (0) target = $region17
    $region16: #{conv2d_encoder_forward.1} parent=1 // pred_region
      _
    $region17: #{conv2d_encoder_forward.1} parent=1 // pred_fallthru
      _
    // Predicated region
    $region18: #{conv2d_encoder_forward.1} parent=1 // pred_check
      _
    $region19: #{conv2d_encoder_forward.1} parent=1 // pred_check_branch
      %22 = sbr.rel (0) target = $region21
    $region20: #{conv2d_encoder_forward.1} parent=1 // pred_region
      _
    $region21: #{conv2d_encoder_forward.1} parent=1 // pred_fallthru
      _
    // Predicated region
    $region22: #{conv2d_encoder_forward.1} parent=1 // pred_check
      _
    $region23: #{conv2d_encoder_forward.1} parent=1 // pred_check_branch
      %24 = sbr.rel (0) target = $region25
    $region24: #{conv2d_encoder_forward.1} parent=1 // pred_region
      _
    $region25: #{conv2d_encoder_forward.1} parent=1 // pred_fallthru
      _
    // Predicated region
    $region26: #{conv2d_encoder_forward.1} parent=1 // pred_check
      _
    $region27: #{conv2d_encoder_forward.1} parent=1 // pred_check_branch
      %26 = sbr.rel (0) target = $region29
    $region28: #{conv2d_encoder_forward.1} parent=1 // pred_region
      _
    $region29: #{conv2d_encoder_forward.1} parent=1 // pred_fallthru
      _
    %v27 = vld [vmem:[%s0] sm:$0xff]
    %v28 = vld [vmem:[%s0 + $0x8] sm:$0x3]
    %v29 = vld [vmem:[%s0 + $0x10] sm:$0xff]
    %v30 = vld [vmem:[%s0 + $0x18] sm:$0x3]
    %v35 = vcombine.high %v27, %v27
    %v37 = vunpack.c.l.s4 1983009808
    %v38 = vunpack.c.0.s8 %v37
    %v39 = vlaneseq
    %v40 = vshrl.u32 %v39, 7
    %v41 = vsub.s32 %v38, %v40
    %v42 = vrot.slane %v27, %v41
    %v44 = vunpack.c.l.s4 1983009808
    %v45 = vunpack.c.0.s8 %v44
    %v46 = vlaneseq
    %v47 = vshrl.u32 %v46, 7
    %v48 = vsub.s32 %v45, %v47
    %v49 = vrot.slane %v35, %v48
    %v50 = vcombine.high %v42, %v42
    %v51 = vcombine.high %v49, %v49
    %v53 = vunpack.c.l.s4 1983009808
    %v54 = vunpack.c.0.s8 %v53
    %v55 = vlaneseq
    %v56 = vshrl.u32 %v55, 7
    %v57 = vsub.s32 %v54, %v56
    %v58 = vrot.slane %v28, %v57
    %v59 = vcombine.high %v29, %v29
    %v61 = vunpack.c.l.s4 1983009808
    %v62 = vunpack.c.0.s8 %v61
    %v63 = vlaneseq
    %v64 = vshrl.u32 %v63, 7
    %v65 = vsub.s32 %v62, %v64
    %v66 = vrot.slane %v29, %v65
    %v68 = vunpack.c.l.s4 1983009808
    %v69 = vunpack.c.0.s8 %v68
    %v70 = vlaneseq
    %v71 = vshrl.u32 %v70, 7
    %v72 = vsub.s32 %v69, %v71
    %v73 = vrot.slane %v59, %v72
    %v74 = vcombine.high %v66, %v66
    %v75 = vcombine.high %v73, %v73
    %v77 = vunpack.c.l.s4 1983009808
    %v78 = vunpack.c.0.s8 %v77
    %v79 = vlaneseq
    %v80 = vshrl.u32 %v79, 7
    %v81 = vsub.s32 %v78, %v80
    %v82 = vrot.slane %v30, %v81
    %v83 = vld [vmem:[%s1] sm:$0xff]
    %v84 = vld [vmem:[%s1 + $0x8] sm:$0xff]
    %v85 = vld [vmem:[%s1 + $0x10] sm:$0xff]
    %v86 = vld [vmem:[%s1 + $0x18] sm:$0xff]
    %v87 = vld [vmem:[%s1 + $0x20] sm:$0xff]
    %v88 = vld [vmem:[%s1 + $0x28] sm:$0xff]
    %v89 = vld [vmem:[%s1 + $0x30] sm:$0xff]
    %v90 = vld [vmem:[%s1 + $0x38] sm:$0xff]
    %v91 = vld [vmem:[%s1 + $0x40] sm:$0xff]
    %v92 = vld [vmem:[%s1 + $0x48] sm:$0xff]
    %v93 = vld [vmem:[%s1 + $0x50] sm:$0xff]
    %v94 = vld [vmem:[%s1 + $0x58] sm:$0xff]
    %v95 = vld [vmem:[%s1 + $0x60] sm:$0xff]
    %v96 = vld [vmem:[%s1 + $0x68] sm:$0xff]
    %v97 = vld [vmem:[%s1 + $0x70] sm:$0xff]
    %v98 = vld [vmem:[%s1 + $0x78] sm:$0xff]
    %v99 = vld [vmem:[%s1 + $0x80] sm:$0xff]
    %v100 = vld [vmem:[%s1 + $0x88] sm:$0xff]
    %v101 = vld [vmem:[%s1 + $0x90] sm:$0xff]
    %v102 = vld [vmem:[%s1 + $0x98] sm:$0xff]
    %v103 = vld [vmem:[%s1 + $0xa0] sm:$0xff]
    %v104 = vld [vmem:[%s1 + $0xa8] sm:$0xff]
    %v105 = vld [vmem:[%s1 + $0xb0] sm:$0xff]
    %v106 = vld [vmem:[%s1 + $0xb8] sm:$0xff]
    %v107 = vld [vmem:[%s1 + $0xc0] sm:$0xff]
    %v108 = vld [vmem:[%s1 + $0xc8] sm:$0xff]
    %v109 = vld [vmem:[%s1 + $0xd0] sm:$0xff]
    %v110 = vld [vmem:[%s1 + $0xd8] sm:$0xff]
    %v111 = vld [vmem:[%s1 + $0xe0] sm:$0xff]
    %v112 = vld [vmem:[%s1 + $0xe8] sm:$0xff]
    %v113 = vld [vmem:[%s1 + $0xf0] sm:$0xff]
    %v114 = vld [vmem:[%s1 + $0xf8] sm:$0xff]
    %v115 = vld [vmem:[%s1 + $0x100] sm:$0xff]
    %v116 = vld [vmem:[%s1 + $0x108] sm:$0xff]
    %v117 = vld [vmem:[%s1 + $0x110] sm:$0xff]
    %v118 = vld [vmem:[%s1 + $0x118] sm:$0xff]
    %v119 = vld [vmem:[%s1 + $0x120] sm:$0xff]
    %v120 = vld [vmem:[%s1 + $0x128] sm:$0xff]
    %v121 = vld [vmem:[%s1 + $0x130] sm:$0xff]
    %v122 = vld [vmem:[%s1 + $0x138] sm:$0xff]
    %v123 = vld [vmem:[%s1 + $0x140] sm:$0xff]
    %v124 = vld [vmem:[%s1 + $0x148] sm:$0xff]
    %v125 = vld [vmem:[%s1 + $0x150] sm:$0xff]
    %v126 = vld [vmem:[%s1 + $0x158] sm:$0xff]
    %v127 = vld [vmem:[%s1 + $0x160] sm:$0xff]
    %v128 = vld [vmem:[%s1 + $0x168] sm:$0xff]
    %v129 = vld [vmem:[%s1 + $0x170] sm:$0xff]
    %v130 = vld [vmem:[%s1 + $0x178] sm:$0xff]
    %v131 = vld [vmem:[%s1 + $0x180] sm:$0xff]
    %v132 = vld [vmem:[%s1 + $0x188] sm:$0xff]
    %v133 = vld [vmem:[%s1 + $0x190] sm:$0xff]
    %v134 = vld [vmem:[%s1 + $0x198] sm:$0xff]
    %v135 = vld [vmem:[%s1 + $0x1a0] sm:$0xff]
    %v136 = vld [vmem:[%s1 + $0x1a8] sm:$0xff]
    %v137 = vld [vmem:[%s1 + $0x1b0] sm:$0xff]
    %v138 = vld [vmem:[%s1 + $0x1b8] sm:$0xff]
    %v139 = vld [vmem:[%s1 + $0x1c0] sm:$0xff]
    %v140 = vld [vmem:[%s1 + $0x1c8] sm:$0xff]
    %v141 = vld [vmem:[%s1 + $0x1d0] sm:$0xff]
    %v142 = vld [vmem:[%s1 + $0x1d8] sm:$0xff]
    %v143 = vld [vmem:[%s1 + $0x1e0] sm:$0xff]
    %v144 = vld [vmem:[%s1 + $0x1e8] sm:$0xff]
    %v145 = vld [vmem:[%s1 + $0x1f0] sm:$0xff]
    %v146 = vld [vmem:[%s1 + $0x1f8] sm:$0xff]
    %v147 = vld [vmem:[%s1 + $0x200] sm:$0xff]
    %v148 = vld [vmem:[%s1 + $0x208] sm:$0xff]
    %v149 = vld [vmem:[%s1 + $0x210] sm:$0xff]
    %v150 = vld [vmem:[%s1 + $0x218] sm:$0xff]
    %v151 = vld [vmem:[%s1 + $0x220] sm:$0xff]
    %v152 = vld [vmem:[%s1 + $0x228] sm:$0xff]
    %v153 = vld [vmem:[%s1 + $0x230] sm:$0xff]
    %v154 = vld [vmem:[%s1 + $0x238] sm:$0xff]
    %v155 = vld [vmem:[%s1 + $0x240] sm:$0xff]
    %v156 = vld [vmem:[%s1 + $0x248] sm:$0xff]
    %v157 = vld [vmem:[%s1 + $0x250] sm:$0xff]
    %v158 = vld [vmem:[%s1 + $0x258] sm:$0xff]
    %v159 = vld [vmem:[%s1 + $0x260] sm:$0xff]
    %v160 = vld [vmem:[%s1 + $0x268] sm:$0xff]
    %v161 = vld [vmem:[%s1 + $0x270] sm:$0xff]
    %v162 = vld [vmem:[%s1 + $0x278] sm:$0xff]
    %v163 = vld [vmem:[%s1 + $0x280] sm:$0xff]
    %v164 = vld [vmem:[%s1 + $0x288] sm:$0xff]
    %v165 = vld [vmem:[%s1 + $0x290] sm:$0xff]
    %v166 = vld [vmem:[%s1 + $0x298] sm:$0xff]
    %v167 = vld [vmem:[%s1 + $0x2a0] sm:$0xff]
    %v168 = vld [vmem:[%s1 + $0x2a8] sm:$0xff]
    %v169 = vld [vmem:[%s1 + $0x2b0] sm:$0xff]
    %v170 = vld [vmem:[%s1 + $0x2b8] sm:$0xff]
    %v171 = vld [vmem:[%s1 + $0x2c0] sm:$0xff]
    %v172 = vld [vmem:[%s1 + $0x2c8] sm:$0xff]
    %v173 = vld [vmem:[%s1 + $0x2d0] sm:$0xff]
    %v174 = vld [vmem:[%s1 + $0x2d8] sm:$0xff]
    %v175 = vld [vmem:[%s1 + $0x2e0] sm:$0xff]
    %v176 = vld [vmem:[%s1 + $0x2e8] sm:$0xff]
    %v177 = vld [vmem:[%s1 + $0x2f0] sm:$0xff]
    %v178 = vld [vmem:[%s1 + $0x2f8] sm:$0xff]
    %v179 = vld [vmem:[%s1 + $0x300] sm:$0xff]
    %v180 = vld [vmem:[%s1 + $0x308] sm:$0xff]
    %v181 = vld [vmem:[%s1 + $0x310] sm:$0xff]
    %v182 = vld [vmem:[%s1 + $0x318] sm:$0xff]
    %v183 = vld [vmem:[%s1 + $0x320] sm:$0xff]
    %v184 = vld [vmem:[%s1 + $0x328] sm:$0xff]
    %v185 = vld [vmem:[%s1 + $0x330] sm:$0xff]
    %v186 = vld [vmem:[%s1 + $0x338] sm:$0xff]
    %v187 = vld [vmem:[%s1 + $0x340] sm:$0xff]
    %v188 = vld [vmem:[%s1 + $0x348] sm:$0xff]
    %v189 = vld [vmem:[%s1 + $0x350] sm:$0xff]
    %v190 = vld [vmem:[%s1 + $0x358] sm:$0xff]
    %v191 = vld [vmem:[%s1 + $0x360] sm:$0xff]
    %v192 = vld [vmem:[%s1 + $0x368] sm:$0xff]
    %v193 = vld [vmem:[%s1 + $0x370] sm:$0xff]
    %v194 = vld [vmem:[%s1 + $0x378] sm:$0xff]
    %v195 = vld [vmem:[%s1 + $0x380] sm:$0xff]
    %v196 = vld [vmem:[%s1 + $0x388] sm:$0xff]
    %v197 = vld [vmem:[%s1 + $0x390] sm:$0xff]
    %v198 = vld [vmem:[%s1 + $0x398] sm:$0xff]
    %v199 = vld [vmem:[%s1 + $0x3a0] sm:$0xff]
    %v200 = vld [vmem:[%s1 + $0x3a8] sm:$0xff]
    %v201 = vld [vmem:[%s1 + $0x3b0] sm:$0xff]
    %v202 = vld [vmem:[%s1 + $0x3b8] sm:$0xff]
    %v203 = vld [vmem:[%s1 + $0x3c0] sm:$0xff]
    %v204 = vld [vmem:[%s1 + $0x3c8] sm:$0xff]
    %v205 = vld [vmem:[%s1 + $0x3d0] sm:$0xff]
    %v206 = vld [vmem:[%s1 + $0x3d8] sm:$0xff]
    %v207 = vld [vmem:[%s1 + $0x3e0] sm:$0xff]
    %v208 = vld [vmem:[%s1 + $0x3e8] sm:$0xff]
    %v209 = vld [vmem:[%s1 + $0x3f0] sm:$0xff]
    %v210 = vld [vmem:[%s1 + $0x3f8] sm:$0xff]
    %v211 = vld [vmem:[%s1 + $0x400] sm:$0xff]
    %v212 = vld [vmem:[%s1 + $0x408] sm:$0xff]
    %v213 = vld [vmem:[%s1 + $0x410] sm:$0xff]
    %v214 = vld [vmem:[%s1 + $0x418] sm:$0xff]
    %v215 = vld [vmem:[%s1 + $0x420] sm:$0xff]
    %v216 = vld [vmem:[%s1 + $0x428] sm:$0xff]
    %v217 = vld [vmem:[%s1 + $0x430] sm:$0xff]
    %v218 = vld [vmem:[%s1 + $0x438] sm:$0xff]
    %v219 = vld [vmem:[%s1 + $0x440] sm:$0xff]
    %v220 = vld [vmem:[%s1 + $0x448] sm:$0xff]
    %v221 = vld [vmem:[%s1 + $0x450] sm:$0xff]
    %v222 = vld [vmem:[%s1 + $0x458] sm:$0xff]
    %v223 = vld [vmem:[%s1 + $0x460] sm:$0xff]
    %v224 = vld [vmem:[%s1 + $0x468] sm:$0xff]
    %v225 = vld [vmem:[%s1 + $0x470] sm:$0xff]
    %v226 = vld [vmem:[%s1 + $0x478] sm:$0xff]
    %v227 = vld [vmem:[%s1 + $0x480] sm:$0xff]
    %v228 = vld [vmem:[%s1 + $0x488] sm:$0xff]
    %v229 = vld [vmem:[%s1 + $0x490] sm:$0xff]
    %v230 = vld [vmem:[%s1 + $0x498] sm:$0xff]
    %v231 = vld [vmem:[%s1 + $0x4a0] sm:$0xff]
    %v232 = vld [vmem:[%s1 + $0x4a8] sm:$0xff]
    %v233 = vld [vmem:[%s1 + $0x4b0] sm:$0xff]
    %v234 = vld [vmem:[%s1 + $0x4b8] sm:$0xff]
    %v235 = vld [vmem:[%s1 + $0x4c0] sm:$0xff]
    %v236 = vld [vmem:[%s1 + $0x4c8] sm:$0xff]
    %v237 = vld [vmem:[%s1 + $0x4d0] sm:$0xff]
    %v238 = vld [vmem:[%s1 + $0x4d8] sm:$0xff]
    %v239 = vld [vmem:[%s1 + $0x4e0] sm:$0xff]
    %v240 = vld [vmem:[%s1 + $0x4e8] sm:$0xff]
    %v241 = vld [vmem:[%s1 + $0x4f0] sm:$0xff]
    %v242 = vld [vmem:[%s1 + $0x4f8] sm:$0xff]
    %v243 = vld [vmem:[%s1 + $0x500] sm:$0xff]
    %v244 = vld [vmem:[%s1 + $0x508] sm:$0xff]
    %v245 = vld [vmem:[%s1 + $0x510] sm:$0xff]
    %v246 = vld [vmem:[%s1 + $0x518] sm:$0xff]
    %v247 = vld [vmem:[%s1 + $0x520] sm:$0xff]
    %v248 = vld [vmem:[%s1 + $0x528] sm:$0xff]
    %v249 = vld [vmem:[%s1 + $0x530] sm:$0xff]
    %v250 = vld [vmem:[%s1 + $0x538] sm:$0xff]
    %v251 = vld [vmem:[%s1 + $0x540] sm:$0xff]
    %v252 = vld [vmem:[%s1 + $0x548] sm:$0xff]
    %v253 = vld [vmem:[%s1 + $0x550] sm:$0xff]
    %v254 = vld [vmem:[%s1 + $0x558] sm:$0xff]
    %v255 = vld [vmem:[%s1 + $0x560] sm:$0xff]
    %v256 = vld [vmem:[%s1 + $0x568] sm:$0xff]
    %v257 = vld [vmem:[%s1 + $0x570] sm:$0xff]
    %v258 = vld [vmem:[%s1 + $0x578] sm:$0xff]
    %v259 = vld [vmem:[%s1 + $0x580] sm:$0xff]
    %v260 = vld [vmem:[%s1 + $0x588] sm:$0xff]
    %v261 = vld [vmem:[%s1 + $0x590] sm:$0xff]
    %v262 = vld [vmem:[%s1 + $0x598] sm:$0xff]
    %v263 = vld [vmem:[%s1 + $0x5a0] sm:$0xff]
    %v264 = vld [vmem:[%s1 + $0x5a8] sm:$0xff]
    %v265 = vld [vmem:[%s1 + $0x5b0] sm:$0xff]
    %v266 = vld [vmem:[%s1 + $0x5b8] sm:$0xff]
    %v267 = vld [vmem:[%s1 + $0x5c0] sm:$0xff]
    %v268 = vld [vmem:[%s1 + $0x5c8] sm:$0xff]
    %v269 = vld [vmem:[%s1 + $0x5d0] sm:$0xff]
    %v270 = vld [vmem:[%s1 + $0x5d8] sm:$0xff]
    %v271 = vld [vmem:[%s1 + $0x5e0] sm:$0xff]
    %v272 = vld [vmem:[%s1 + $0x5e8] sm:$0xff]
    %v273 = vld [vmem:[%s1 + $0x5f0] sm:$0xff]
    %v274 = vld [vmem:[%s1 + $0x5f8] sm:$0xff]
    %s275 = scalar_lea.vmem %s1, 1536
    %v276 = vld [vmem:[%s275] sm:$0xff]
    %v277 = vld [vmem:[%s275 + $0x8] sm:$0xff]
    %v278 = vld [vmem:[%s275 + $0x10] sm:$0xff]
    %v279 = vld [vmem:[%s275 + $0x18] sm:$0xff]
    %v280 = vld [vmem:[%s275 + $0x20] sm:$0xff]
    %v281 = vld [vmem:[%s275 + $0x28] sm:$0xff]
    %v282 = vld [vmem:[%s275 + $0x30] sm:$0xff]
    %v283 = vld [vmem:[%s275 + $0x38] sm:$0xff]
    %v284 = vld [vmem:[%s275 + $0x40] sm:$0xff]
    %v285 = vld [vmem:[%s275 + $0x48] sm:$0xff]
    %v286 = vld [vmem:[%s275 + $0x50] sm:$0xff]
    %v287 = vld [vmem:[%s275 + $0x58] sm:$0xff]
    %v288 = vld [vmem:[%s275 + $0x60] sm:$0xff]
    %v289 = vld [vmem:[%s275 + $0x68] sm:$0xff]
    %v290 = vld [vmem:[%s275 + $0x70] sm:$0xff]
    %v291 = vld [vmem:[%s275 + $0x78] sm:$0xff]
    %v292 = vld [vmem:[%s275 + $0x80] sm:$0xff]
    %v293 = vld [vmem:[%s275 + $0x88] sm:$0xff]
    %v294 = vld [vmem:[%s275 + $0x90] sm:$0xff]
    %v295 = vld [vmem:[%s275 + $0x98] sm:$0xff]
    %v296 = vld [vmem:[%s275 + $0xa0] sm:$0xff]
    %v297 = vld [vmem:[%s275 + $0xa8] sm:$0xff]
    %v298 = vld [vmem:[%s275 + $0xb0] sm:$0xff]
    %v299 = vld [vmem:[%s275 + $0xb8] sm:$0xff]
    %v300 = vld [vmem:[%s275 + $0xc0] sm:$0xff]
    %v301 = vld [vmem:[%s275 + $0xc8] sm:$0xff]
    %v302 = vld [vmem:[%s275 + $0xd0] sm:$0xff]
    %v303 = vld [vmem:[%s275 + $0xd8] sm:$0xff]
    %v304 = vld [vmem:[%s275 + $0xe0] sm:$0xff]
    %v305 = vld [vmem:[%s275 + $0xe8] sm:$0xff]
    %v306 = vld [vmem:[%s275 + $0xf0] sm:$0xff]
    %v307 = vld [vmem:[%s275 + $0xf8] sm:$0xff]
    %v308 = vld [vmem:[%s275 + $0x100] sm:$0xff]
    %v309 = vld [vmem:[%s275 + $0x108] sm:$0xff]
    %v310 = vld [vmem:[%s275 + $0x110] sm:$0xff]
    %v311 = vld [vmem:[%s275 + $0x118] sm:$0xff]
    %v312 = vld [vmem:[%s275 + $0x120] sm:$0xff]
    %v313 = vld [vmem:[%s275 + $0x128] sm:$0xff]
    %v314 = vld [vmem:[%s275 + $0x130] sm:$0xff]
    %v315 = vld [vmem:[%s275 + $0x138] sm:$0xff]
    %v316 = vld [vmem:[%s275 + $0x140] sm:$0xff]
    %v317 = vld [vmem:[%s275 + $0x148] sm:$0xff]
    %v318 = vld [vmem:[%s275 + $0x150] sm:$0xff]
    %v319 = vld [vmem:[%s275 + $0x158] sm:$0xff]
    %v320 = vld [vmem:[%s275 + $0x160] sm:$0xff]
    %v321 = vld [vmem:[%s275 + $0x168] sm:$0xff]
    %v322 = vld [vmem:[%s275 + $0x170] sm:$0xff]
    %v323 = vld [vmem:[%s275 + $0x178] sm:$0xff]
    %v324 = vld [vmem:[%s275 + $0x180] sm:$0xff]
    %v325 = vld [vmem:[%s275 + $0x188] sm:$0xff]
    %v326 = vld [vmem:[%s275 + $0x190] sm:$0xff]
    %v327 = vld [vmem:[%s275 + $0x198] sm:$0xff]
    %v328 = vld [vmem:[%s275 + $0x1a0] sm:$0xff]
    %v329 = vld [vmem:[%s275 + $0x1a8] sm:$0xff]
    %v330 = vld [vmem:[%s275 + $0x1b0] sm:$0xff]
    %v331 = vld [vmem:[%s275 + $0x1b8] sm:$0xff]
    %v332 = vld [vmem:[%s275 + $0x1c0] sm:$0xff]
    %v333 = vld [vmem:[%s275 + $0x1c8] sm:$0xff]
    %v334 = vld [vmem:[%s275 + $0x1d0] sm:$0xff]
    %v335 = vld [vmem:[%s275 + $0x1d8] sm:$0xff]
    %v336 = vld [vmem:[%s275 + $0x1e0] sm:$0xff]
    %v337 = vld [vmem:[%s275 + $0x1e8] sm:$0xff]
    %v338 = vld [vmem:[%s275 + $0x1f0] sm:$0xff]
    %v339 = vld [vmem:[%s275 + $0x1f8] sm:$0xff]
    %v340 = vld [vmem:[%s275 + $0x200] sm:$0xff]
    %v341 = vld [vmem:[%s275 + $0x208] sm:$0xff]
    %v342 = vld [vmem:[%s275 + $0x210] sm:$0xff]
    %v343 = vld [vmem:[%s275 + $0x218] sm:$0xff]
    %v344 = vld [vmem:[%s275 + $0x220] sm:$0xff]
    %v345 = vld [vmem:[%s275 + $0x228] sm:$0xff]
    %v346 = vld [vmem:[%s275 + $0x230] sm:$0xff]
    %v347 = vld [vmem:[%s275 + $0x238] sm:$0xff]
    %v348 = vld [vmem:[%s275 + $0x240] sm:$0xff]
    %v349 = vld [vmem:[%s275 + $0x248] sm:$0xff]
    %v350 = vld [vmem:[%s275 + $0x250] sm:$0xff]
    %v351 = vld [vmem:[%s275 + $0x258] sm:$0xff]
    %v352 = vld [vmem:[%s275 + $0x260] sm:$0xff]
    %v353 = vld [vmem:[%s275 + $0x268] sm:$0xff]
    %v354 = vld [vmem:[%s275 + $0x270] sm:$0xff]
    %v355 = vld [vmem:[%s275 + $0x278] sm:$0xff]
    %v356 = vld [vmem:[%s275 + $0x280] sm:$0xff]
    %v357 = vld [vmem:[%s275 + $0x288] sm:$0xff]
    %v358 = vld [vmem:[%s275 + $0x290] sm:$0xff]
    %v359 = vld [vmem:[%s275 + $0x298] sm:$0xff]
    %v360 = vld [vmem:[%s275 + $0x2a0] sm:$0xff]
    %v361 = vld [vmem:[%s275 + $0x2a8] sm:$0xff]
    %v362 = vld [vmem:[%s275 + $0x2b0] sm:$0xff]
    %v363 = vld [vmem:[%s275 + $0x2b8] sm:$0xff]
    %v364 = vld [vmem:[%s275 + $0x2c0] sm:$0xff]
    %v365 = vld [vmem:[%s275 + $0x2c8] sm:$0xff]
    %v366 = vld [vmem:[%s275 + $0x2d0] sm:$0xff]
    %v367 = vld [vmem:[%s275 + $0x2d8] sm:$0xff]
    %v368 = vld [vmem:[%s275 + $0x2e0] sm:$0xff]
    %v369 = vld [vmem:[%s275 + $0x2e8] sm:$0xff]
    %v370 = vld [vmem:[%s275 + $0x2f0] sm:$0xff]
    %v371 = vld [vmem:[%s275 + $0x2f8] sm:$0xff]
    %v372 = vld [vmem:[%s275 + $0x300] sm:$0xff]
    %v373 = vld [vmem:[%s275 + $0x308] sm:$0xff]
    %v374 = vld [vmem:[%s275 + $0x310] sm:$0xff]
    %v375 = vld [vmem:[%s275 + $0x318] sm:$0xff]
    %v376 = vld [vmem:[%s275 + $0x320] sm:$0xff]
    %v377 = vld [vmem:[%s275 + $0x328] sm:$0xff]
    %v378 = vld [vmem:[%s275 + $0x330] sm:$0xff]
    %v379 = vld [vmem:[%s275 + $0x338] sm:$0xff]
    %v380 = vld [vmem:[%s275 + $0x340] sm:$0xff]
    %v381 = vld [vmem:[%s275 + $0x348] sm:$0xff]
    %v382 = vld [vmem:[%s275 + $0x350] sm:$0xff]
    %v383 = vld [vmem:[%s275 + $0x358] sm:$0xff]
    %v384 = vld [vmem:[%s275 + $0x360] sm:$0xff]
    %v385 = vld [vmem:[%s275 + $0x368] sm:$0xff]
    %v386 = vld [vmem:[%s275 + $0x370] sm:$0xff]
    %v387 = vld [vmem:[%s275 + $0x378] sm:$0xff]
    %v388 = vld [vmem:[%s275 + $0x380] sm:$0xff]
    %v389 = vld [vmem:[%s275 + $0x388] sm:$0xff]
    %v390 = vld [vmem:[%s275 + $0x390] sm:$0xff]
    %v391 = vld [vmem:[%s275 + $0x398] sm:$0xff]
    %v392 = vld [vmem:[%s275 + $0x3a0] sm:$0xff]
    %v393 = vld [vmem:[%s275 + $0x3a8] sm:$0xff]
    %v394 = vld [vmem:[%s275 + $0x3b0] sm:$0xff]
    %v395 = vld [vmem:[%s275 + $0x3b8] sm:$0xff]
    %v396 = vld [vmem:[%s275 + $0x3c0] sm:$0xff]
    %v397 = vld [vmem:[%s275 + $0x3c8] sm:$0xff]
    %v398 = vld [vmem:[%s275 + $0x3d0] sm:$0xff]
    %v399 = vld [vmem:[%s275 + $0x3d8] sm:$0xff]
    %v400 = vld [vmem:[%s275 + $0x3e0] sm:$0xff]
    %v401 = vld [vmem:[%s275 + $0x3e8] sm:$0xff]
    %v402 = vld [vmem:[%s275 + $0x3f0] sm:$0xff]
    %v403 = vld [vmem:[%s275 + $0x3f8] sm:$0xff]
    %v404 = vld [vmem:[%s275 + $0x400] sm:$0xff]
    %v405 = vld [vmem:[%s275 + $0x408] sm:$0xff]
    %v406 = vld [vmem:[%s275 + $0x410] sm:$0xff]
    %v407 = vld [vmem:[%s275 + $0x418] sm:$0xff]
    %v408 = vld [vmem:[%s275 + $0x420] sm:$0xff]
    %v409 = vld [vmem:[%s275 + $0x428] sm:$0xff]
    %v410 = vld [vmem:[%s275 + $0x430] sm:$0xff]
    %v411 = vld [vmem:[%s275 + $0x438] sm:$0xff]
    %v412 = vld [vmem:[%s275 + $0x440] sm:$0xff]
    %v413 = vld [vmem:[%s275 + $0x448] sm:$0xff]
    %v414 = vld [vmem:[%s275 + $0x450] sm:$0xff]
    %v415 = vld [vmem:[%s275 + $0x458] sm:$0xff]
    %v416 = vld [vmem:[%s275 + $0x460] sm:$0xff]
    %v417 = vld [vmem:[%s275 + $0x468] sm:$0xff]
    %v418 = vld [vmem:[%s275 + $0x470] sm:$0xff]
    %v419 = vld [vmem:[%s275 + $0x478] sm:$0xff]
    %v420 = vld [vmem:[%s275 + $0x480] sm:$0xff]
    %v421 = vld [vmem:[%s275 + $0x488] sm:$0xff]
    %v422 = vld [vmem:[%s275 + $0x490] sm:$0xff]
    %v423 = vld [vmem:[%s275 + $0x498] sm:$0xff]
    %v424 = vld [vmem:[%s275 + $0x4a0] sm:$0xff]
    %v425 = vld [vmem:[%s275 + $0x4a8] sm:$0xff]
    %v426 = vld [vmem:[%s275 + $0x4b0] sm:$0xff]
    %v427 = vld [vmem:[%s275 + $0x4b8] sm:$0xff]
    %v428 = vld [vmem:[%s275 + $0x4c0] sm:$0xff]
    %v429 = vld [vmem:[%s275 + $0x4c8] sm:$0xff]
    %v430 = vld [vmem:[%s275 + $0x4d0] sm:$0xff]
    %v431 = vld [vmem:[%s275 + $0x4d8] sm:$0xff]
    %v432 = vld [vmem:[%s275 + $0x4e0] sm:$0xff]
    %v433 = vld [vmem:[%s275 + $0x4e8] sm:$0xff]
    %v434 = vld [vmem:[%s275 + $0x4f0] sm:$0xff]
    %v435 = vld [vmem:[%s275 + $0x4f8] sm:$0xff]
    %v436 = vld [vmem:[%s275 + $0x500] sm:$0xff]
    %v437 = vld [vmem:[%s275 + $0x508] sm:$0xff]
    %v438 = vld [vmem:[%s275 + $0x510] sm:$0xff]
    %v439 = vld [vmem:[%s275 + $0x518] sm:$0xff]
    %v440 = vld [vmem:[%s275 + $0x520] sm:$0xff]
    %v441 = vld [vmem:[%s275 + $0x528] sm:$0xff]
    %v442 = vld [vmem:[%s275 + $0x530] sm:$0xff]
    %v443 = vld [vmem:[%s275 + $0x538] sm:$0xff]
    %v444 = vld [vmem:[%s275 + $0x540] sm:$0xff]
    %v445 = vld [vmem:[%s275 + $0x548] sm:$0xff]
    %v446 = vld [vmem:[%s275 + $0x550] sm:$0xff]
    %v447 = vld [vmem:[%s275 + $0x558] sm:$0xff]
    %v448 = vld [vmem:[%s275 + $0x560] sm:$0xff]
    %v449 = vld [vmem:[%s275 + $0x568] sm:$0xff]
    %v450 = vld [vmem:[%s275 + $0x570] sm:$0xff]
    %v451 = vld [vmem:[%s275 + $0x578] sm:$0xff]
    %v452 = vld [vmem:[%s275 + $0x580] sm:$0xff]
    %v453 = vld [vmem:[%s275 + $0x588] sm:$0xff]
    %v454 = vld [vmem:[%s275 + $0x590] sm:$0xff]
    %v455 = vld [vmem:[%s275 + $0x598] sm:$0xff]
    %v456 = vld [vmem:[%s275 + $0x5a0] sm:$0xff]
    %v457 = vld [vmem:[%s275 + $0x5a8] sm:$0xff]
    %v458 = vld [vmem:[%s275 + $0x5b0] sm:$0xff]
    %v459 = vld [vmem:[%s275 + $0x5b8] sm:$0xff]
    %v460 = vld [vmem:[%s275 + $0x5c0] sm:$0xff]
    %v461 = vld [vmem:[%s275 + $0x5c8] sm:$0xff]
    %v462 = vld [vmem:[%s275 + $0x5d0] sm:$0xff]
    %v463 = vld [vmem:[%s275 + $0x5d8] sm:$0xff]
    %v464 = vld [vmem:[%s275 + $0x5e0] sm:$0xff]
    %v465 = vld [vmem:[%s275 + $0x5e8] sm:$0xff]
    %v466 = vld [vmem:[%s275 + $0x5f0] sm:$0xff]
    %v467 = vld [vmem:[%s275 + $0x5f8] sm:$0xff]
    %v468 = vcombine.low %v42, %v50
    %v469 = vcombine.low %v49, %v51
    %v471 = vunpack.c.l.s4 1983009808
    %v472 = vunpack.c.0.s8 %v471
    %v473 = vlaneseq
    %v474 = vshrl.u32 %v473, 7
    %v475 = vsub.s32 %v472, %v474
    %v476 = vrot.slane %v468, %v475
    %v478 = vunpack.c.l.s4 1983009808
    %v479 = vunpack.c.0.s8 %v478
    %v480 = vlaneseq
    %v481 = vshrl.u32 %v480, 7
    %v482 = vsub.s32 %v479, %v481
    %v483 = vrot.slane %v469, %v482
    %v484 = vcombine.low %v476, %v483
    %v485 = vcombine.low %v58, %v66
    %v486 = vcombine.low %v74, %v73
    %v488 = vunpack.c.l.s4 1983009808
    %v489 = vunpack.c.0.s8 %v488
    %v490 = vlaneseq
    %v491 = vshrl.u32 %v490, 7
    %v492 = vsub.s32 %v489, %v491
    %v493 = vrot.slane %v485, %v492
    %v495 = vunpack.c.l.s4 1983009808
    %v496 = vunpack.c.0.s8 %v495
    %v497 = vlaneseq
    %v498 = vshrl.u32 %v497, 7
    %v499 = vsub.s32 %v496, %v498
    %v500 = vrot.slane %v486, %v499
    %v501 = vcombine.low %v493, %v500
    %v502 = vcombine.low %v75, %v82
    %v504 = vunpack.c.l.s4 1983009808
    %v505 = vunpack.c.0.s8 %v504
    %v506 = vlaneseq
    %v507 = vshrl.u32 %v506, 7
    %v508 = vsub.s32 %v505, %v507
    %v509 = vrot.slane %v502, %v508
    %vm510 = vcmask 1046528
    %v511 = vrot.slane %v484, 1
    %v512 = vrot.slane %v501, 1
    %v513 = vsel %vm510, %v511, %v512
    %v514 = vrot.slane %v509, 1
    %v515 = vsel %vm510, %v512, %v514
    %519 = vmatprep.subr.mxu0 %v457
    %520 = vmatpush1.msra.mxu0 %v456
    %521 = vmatprep.subr.mxu0 %v445
    %522 = vmatpush1.msra.mxu0 %v444
    %523 = vmatprep.subr.mxu0 %v433
    %524 = vmatpush1.msra.mxu0 %v432
    %525 = vmatprep.subr.mxu0 %v421
    %526 = vmatpush1.msra.mxu0 %v420
    %527 = vmatprep.subr.mxu0 %v409
    %528 = vmatpush1.msra.mxu0 %v408
    %529 = vmatprep.subr.mxu0 %v397
    %530 = vmatpush1.msra.mxu0 %v396
    %531 = vmatprep.subr.mxu0 %v385
    %532 = vmatpush1.msra.mxu0 %v384
    %533 = vmatprep.subr.mxu0 %v373
    %534 = vmatpush1.msra.mxu0 %v372
    %535 = vmatprep.subr.mxu0 %v361
    %536 = vmatpush1.msra.mxu0 %v360
    %537 = vmatprep.subr.mxu0 %v349
    %538 = vmatpush1.msra.mxu0 %v348
    %539 = vmatprep.subr.mxu0 %v337
    %540 = vmatpush1.msra.mxu0 %v336
    %541 = vmatprep.subr.mxu0 %v325
    %542 = vmatpush1.msra.mxu0 %v324
    %543 = vmatprep.subr.mxu0 %v313
    %544 = vmatpush1.msra.mxu0 %v312
    %545 = vmatprep.subr.mxu0 %v301
    %546 = vmatpush1.msra.mxu0 %v300
    %547 = vmatprep.subr.mxu0 %v289
    %548 = vmatpush1.msra.mxu0 %v288
    %549 = vmatprep.subr.mxu0 %v277
    %550 = vmatpush1.msra.mxu0 %v276
    %551 = vmatprep.subr.mxu0 0.0
    %552 = vmatpush2.msra.mxu0 0.0
    %553 = vmatprep.subr.mxu0 0.0
    %554 = vmatpush2.msra.mxu0 0.0
    %555 = vmatprep.subr.mxu0 0.0
    %556 = vmatpush2.msra.mxu0 0.0
    %557 = vmatprep.subr.mxu0 0.0
    %558 = vmatpush2.msra.mxu0 0.0
    %559 = vmatprep.subr.mxu0 0.0
    %560 = vmatpush2.msra.mxu0 0.0
    %561 = vmatprep.subr.mxu0 0.0
    %562 = vmatpush2.msra.mxu0 0.0
    %563 = vmatprep.subr.mxu0 0.0
    %564 = vmatpush2.msra.mxu0 0.0
    %565 = vmatprep.subr.mxu0 0.0
    %566 = vmatpush2.msra.mxu0 0.0
    %567 = vmatprep.subr.mxu0 0.0
    %568 = vmatpush2.msra.mxu0 0.0
    %569 = vmatprep.subr.mxu0 0.0
    %570 = vmatpush2.msra.mxu0 0.0
    %571 = vmatprep.subr.mxu0 0.0
    %572 = vmatpush2.msra.mxu0 0.0
    %573 = vmatprep.subr.mxu0 0.0
    %574 = vmatpush2.msra.mxu0 0.0
    %575 = vmatprep.subr.mxu0 0.0
    %576 = vmatpush2.msra.mxu0 0.0
    %577 = vmatprep.subr.mxu0 0.0
    %578 = vmatpush2.msra.mxu0 0.0
    %579 = vmatprep.subr.mxu0 0.0
    %580 = vmatpush2.msra.mxu0 0.0
    %581 = vmatprep.subr.mxu0 0.0
    %582 = vmatpush2.msra.mxu0 0.0
    %583 = vmatprep.mubr.f32.mxu0 0.0
    %584 = vmatmul.mubr.f32.gmra.mxu0 %v513
    %v585 = vpop.f32.mrf.mxu0
    %v586 = vadd.f32 0.0, %v585
    %v587 = vpop.f32.mrf.mxu0
    %v588 = vadd.f32 0.0, %v587
    %589 = vmatprep.mubr.f32.mxu0 0.0
    %590 = vmatmul.mubr.f32.gmra.mxu0 %v515
    %v591 = vpop.f32.mrf.mxu0
    %v592 = vadd.f32 0.0, %v591
    %v593 = vpop.f32.mrf.mxu0
    %v594 = vadd.f32 0.0, %v593
    %595 = vmatprep.mubr.f32.mxu0 0.0
    %596 = vmatmul.mubr.f32.gmra.mxu0 %v514
    %v597 = vpop.f32.mrf.mxu0
    %v598 = vadd.f32 0.0, %v597
    %v599 = vpop.f32.mrf.mxu0
    %v600 = vadd.f32 0.0, %v599
    %601 = vdwg.mxu0
    %602 = vmatprep.subr.mxu0 %v459
    %603 = vmatpush1.msra.mxu0 %v458
    %604 = vmatprep.subr.mxu0 %v447
    %605 = vmatpush1.msra.mxu0 %v446
    %606 = vmatprep.subr.mxu0 %v435
    %607 = vmatpush1.msra.mxu0 %v434
    %608 = vmatprep.subr.mxu0 %v423
    %609 = vmatpush1.msra.mxu0 %v422
    %610 = vmatprep.subr.mxu0 %v411
    %611 = vmatpush1.msra.mxu0 %v410
    %612 = vmatprep.subr.mxu0 %v399
    %613 = vmatpush1.msra.mxu0 %v398
    %614 = vmatprep.subr.mxu0 %v387
    %615 = vmatpush1.msra.mxu0 %v386
    %616 = vmatprep.subr.mxu0 %v375
    %617 = vmatpush1.msra.mxu0 %v374
    %618 = vmatprep.subr.mxu0 %v363
    %619 = vmatpush1.msra.mxu0 %v362
    %620 = vmatprep.subr.mxu0 %v351
    %621 = vmatpush1.msra.mxu0 %v350
    %622 = vmatprep.subr.mxu0 %v339
    %623 = vmatpush1.msra.mxu0 %v338
    %624 = vmatprep.subr.mxu0 %v327
    %625 = vmatpush1.msra.mxu0 %v326
    %626 = vmatprep.subr.mxu0 %v315
    %627 = vmatpush1.msra.mxu0 %v314
    %628 = vmatprep.subr.mxu0 %v303
    %629 = vmatpush1.msra.mxu0 %v302
    %630 = vmatprep.subr.mxu0 %v291
    %631 = vmatpush1.msra.mxu0 %v290
    %632 = vmatprep.subr.mxu0 %v279
    %633 = vmatpush1.msra.mxu0 %v278
    %634 = vmatprep.subr.mxu0 0.0
    %635 = vmatpush2.msra.mxu0 0.0
    %636 = vmatprep.subr.mxu0 0.0
    %637 = vmatpush2.msra.mxu0 0.0
    %638 = vmatprep.subr.mxu0 0.0
    %639 = vmatpush2.msra.mxu0 0.0
    %640 = vmatprep.subr.mxu0 0.0
    %641 = vmatpush2.msra.mxu0 0.0
    %642 = vmatprep.subr.mxu0 0.0
    %643 = vmatpush2.msra.mxu0 0.0
    %644 = vmatprep.subr.mxu0 0.0
    %645 = vmatpush2.msra.mxu0 0.0
    %646 = vmatprep.subr.mxu0 0.0
    %647 = vmatpush2.msra.mxu0 0.0
    %648 = vmatprep.subr.mxu0 0.0
    %649 = vmatpush2.msra.mxu0 0.0
    %650 = vmatprep.subr.mxu0 0.0
    %651 = vmatpush2.msra.mxu0 0.0
    %652 = vmatprep.subr.mxu0 0.0
    %653 = vmatpush2.msra.mxu0 0.0
    %654 = vmatprep.subr.mxu0 0.0
    %655 = vmatpush2.msra.mxu0 0.0
    %656 = vmatprep.subr.mxu0 0.0
    %657 = vmatpush2.msra.mxu0 0.0
    %658 = vmatprep.subr.mxu0 0.0
    %659 = vmatpush2.msra.mxu0 0.0
    %660 = vmatprep.subr.mxu0 0.0
    %661 = vmatpush2.msra.mxu0 0.0
    %662 = vmatprep.subr.mxu0 0.0
    %663 = vmatpush2.msra.mxu0 0.0
    %664 = vmatprep.subr.mxu0 0.0
    %665 = vmatpush2.msra.mxu0 0.0
    %666 = vmatprep.mubr.f32.mxu0 0.0
    %667 = vmatmul.mubr.f32.gmra.mxu0 %v513
    %v668 = vpop.f32.mrf.mxu0
    %v669 = vadd.f32 0.0, %v668
    %v670 = vpop.f32.mrf.mxu0
    %v671 = vadd.f32 0.0, %v670
    %672 = vmatprep.mubr.f32.mxu0 0.0
    %673 = vmatmul.mubr.f32.gmra.mxu0 %v515
    %v674 = vpop.f32.mrf.mxu0
    %v675 = vadd.f32 0.0, %v674
    %v676 = vpop.f32.mrf.mxu0
    %v677 = vadd.f32 0.0, %v676
    %678 = vmatprep.mubr.f32.mxu0 0.0
    %679 = vmatmul.mubr.f32.gmra.mxu0 %v514
    %v680 = vpop.f32.mrf.mxu0
    %v681 = vadd.f32 0.0, %v680
    %v682 = vpop.f32.mrf.mxu0
    %v683 = vadd.f32 0.0, %v682
    %684 = vdwg.mxu0
    %685 = vmatprep.subr.mxu0 %v461
    %686 = vmatpush1.msra.mxu0 %v460
    %687 = vmatprep.subr.mxu0 %v449
    %688 = vmatpush1.msra.mxu0 %v448
    %689 = vmatprep.subr.mxu0 %v437
    %690 = vmatpush1.msra.mxu0 %v436
    %691 = vmatprep.subr.mxu0 %v425
    %692 = vmatpush1.msra.mxu0 %v424
    %693 = vmatprep.subr.mxu0 %v413
    %694 = vmatpush1.msra.mxu0 %v412
    %695 = vmatprep.subr.mxu0 %v401
    %696 = vmatpush1.msra.mxu0 %v400
    %697 = vmatprep.subr.mxu0 %v389
    %698 = vmatpush1.msra.mxu0 %v388
    %699 = vmatprep.subr.mxu0 %v377
    %700 = vmatpush1.msra.mxu0 %v376
    %701 = vmatprep.subr.mxu0 %v365
    %702 = vmatpush1.msra.mxu0 %v364
    %703 = vmatprep.subr.mxu0 %v353
    %704 = vmatpush1.msra.mxu0 %v352
    %705 = vmatprep.subr.mxu0 %v341
    %706 = vmatpush1.msra.mxu0 %v340
    %707 = vmatprep.subr.mxu0 %v329
    %708 = vmatpush1.msra.mxu0 %v328
    %709 = vmatprep.subr.mxu0 %v317
    %710 = vmatpush1.msra.mxu0 %v316
    %711 = vmatprep.subr.mxu0 %v305
    %712 = vmatpush1.msra.mxu0 %v304
    %713 = vmatprep.subr.mxu0 %v293
    %714 = vmatpush1.msra.mxu0 %v292
    %715 = vmatprep.subr.mxu0 %v281
    %716 = vmatpush1.msra.mxu0 %v280
    %717 = vmatprep.subr.mxu0 0.0
    %718 = vmatpush2.msra.mxu0 0.0
    %719 = vmatprep.subr.mxu0 0.0
    %720 = vmatpush2.msra.mxu0 0.0
    %721 = vmatprep.subr.mxu0 0.0
    %722 = vmatpush2.msra.mxu0 0.0
    %723 = vmatprep.subr.mxu0 0.0
    %724 = vmatpush2.msra.mxu0 0.0
    %725 = vmatprep.subr.mxu0 0.0
    %726 = vmatpush2.msra.mxu0 0.0
    %727 = vmatprep.subr.mxu0 0.0
    %728 = vmatpush2.msra.mxu0 0.0
    %729 = vmatprep.subr.mxu0 0.0
    %730 = vmatpush2.msra.mxu0 0.0
    %731 = vmatprep.subr.mxu0 0.0
    %732 = vmatpush2.msra.mxu0 0.0
    %733 = vmatprep.subr.mxu0 0.0
    %734 = vmatpush2.msra.mxu0 0.0
    %735 = vmatprep.subr.mxu0 0.0
    %736 = vmatpush2.msra.mxu0 0.0
    %737 = vmatprep.subr.mxu0 0.0
    %738 = vmatpush2.msra.mxu0 0.0
    %739 = vmatprep.subr.mxu0 0.0
    %740 = vmatpush2.msra.mxu0 0.0
    %741 = vmatprep.subr.mxu0 0.0
    %742 = vmatpush2.msra.mxu0 0.0
    %743 = vmatprep.subr.mxu0 0.0
    %744 = vmatpush2.msra.mxu0 0.0
    %745 = vmatprep.subr.mxu0 0.0
    %746 = vmatpush2.msra.mxu0 0.0
    %747 = vmatprep.subr.mxu0 0.0
    %748 = vmatpush2.msra.mxu0 0.0
    %749 = vmatprep.mubr.f32.mxu0 0.0
    %750 = vmatmul.mubr.f32.gmra.mxu0 %v513
    %v751 = vpop.f32.mrf.mxu0
    %v752 = vadd.f32 0.0, %v751
    %v753 = vpop.f32.mrf.mxu0
    %v754 = vadd.f32 0.0, %v753
    %755 = vmatprep.mubr.f32.mxu0 0.0
    %756 = vmatmul.mubr.f32.gmra.mxu0 %v515
    %v757 = vpop.f32.mrf.mxu0
    %v758 = vadd.f32 0.0, %v757
    %v759 = vpop.f32.mrf.mxu0
    %v760 = vadd.f32 0.0, %v759
    %761 = vmatprep.mubr.f32.mxu0 0.0
    %762 = vmatmul.mubr.f32.gmra.mxu0 %v514
    %v763 = vpop.f32.mrf.mxu0
    %v764 = vadd.f32 0.0, %v763
    %v765 = vpop.f32.mrf.mxu0
    %v766 = vadd.f32 0.0, %v765
    %767 = vdwg.mxu0
    %768 = vmatprep.subr.mxu0 %v463
    %769 = vmatpush1.msra.mxu0 %v462
    %770 = vmatprep.subr.mxu0 %v451
    %771 = vmatpush1.msra.mxu0 %v450
    %772 = vmatprep.subr.mxu0 %v439
    %773 = vmatpush1.msra.mxu0 %v438
    %774 = vmatprep.subr.mxu0 %v427
    %775 = vmatpush1.msra.mxu0 %v426
    %776 = vmatprep.subr.mxu0 %v415
    %777 = vmatpush1.msra.mxu0 %v414
    %778 = vmatprep.subr.mxu0 %v403
    %779 = vmatpush1.msra.mxu0 %v402
    %780 = vmatprep.subr.mxu0 %v391
    %781 = vmatpush1.msra.mxu0 %v390
    %782 = vmatprep.subr.mxu0 %v379
    %783 = vmatpush1.msra.mxu0 %v378
    %784 = vmatprep.subr.mxu0 %v367
    %785 = vmatpush1.msra.mxu0 %v366
    %786 = vmatprep.subr.mxu0 %v355
    %787 = vmatpush1.msra.mxu0 %v354
    %788 = vmatprep.subr.mxu0 %v343
    %789 = vmatpush1.msra.mxu0 %v342
    %790 = vmatprep.subr.mxu0 %v331
    %791 = vmatpush1.msra.mxu0 %v330
    %792 = vmatprep.subr.mxu0 %v319
    %793 = vmatpush1.msra.mxu0 %v318
    %794 = vmatprep.subr.mxu0 %v307
    %795 = vmatpush1.msra.mxu0 %v306
    %796 = vmatprep.subr.mxu0 %v295
    %797 = vmatpush1.msra.mxu0 %v294
    %798 = vmatprep.subr.mxu0 %v283
    %799 = vmatpush1.msra.mxu0 %v282
    %800 = vmatprep.subr.mxu0 0.0
    %801 = vmatpush2.msra.mxu0 0.0
    %802 = vmatprep.subr.mxu0 0.0
    %803 = vmatpush2.msra.mxu0 0.0
    %804 = vmatprep.subr.mxu0 0.0
    %805 = vmatpush2.msra.mxu0 0.0
    %806 = vmatprep.subr.mxu0 0.0
    %807 = vmatpush2.msra.mxu0 0.0
    %808 = vmatprep.subr.mxu0 0.0
    %809 = vmatpush2.msra.mxu0 0.0
    %810 = vmatprep.subr.mxu0 0.0
    %811 = vmatpush2.msra.mxu0 0.0
    %812 = vmatprep.subr.mxu0 0.0
    %813 = vmatpush2.msra.mxu0 0.0
    %814 = vmatprep.subr.mxu0 0.0
    %815 = vmatpush2.msra.mxu0 0.0
    %816 = vmatprep.subr.mxu0 0.0
    %817 = vmatpush2.msra.mxu0 0.0
    %818 = vmatprep.subr.mxu0 0.0
    %819 = vmatpush2.msra.mxu0 0.0
    %820 = vmatprep.subr.mxu0 0.0
    %821 = vmatpush2.msra.mxu0 0.0
    %822 = vmatprep.subr.mxu0 0.0
    %823 = vmatpush2.msra.mxu0 0.0
    %824 = vmatprep.subr.mxu0 0.0
    %825 = vmatpush2.msra.mxu0 0.0
    %826 = vmatprep.subr.mxu0 0.0
    %827 = vmatpush2.msra.mxu0 0.0
    %828 = vmatprep.subr.mxu0 0.0
    %829 = vmatpush2.msra.mxu0 0.0
    %830 = vmatprep.subr.mxu0 0.0
    %831 = vmatpush2.msra.mxu0 0.0
    %832 = vmatprep.mubr.f32.mxu0 0.0
    %833 = vmatmul.mubr.f32.gmra.mxu0 %v513
    %v834 = vpop.f32.mrf.mxu0
    %v835 = vadd.f32 0.0, %v834
    %v836 = vpop.f32.mrf.mxu0
    %v837 = vadd.f32 0.0, %v836
    %838 = vmatprep.mubr.f32.mxu0 0.0
    %839 = vmatmul.mubr.f32.gmra.mxu0 %v515
    %v840 = vpop.f32.mrf.mxu0
    %v841 = vadd.f32 0.0, %v840
    %v842 = vpop.f32.mrf.mxu0
    %v843 = vadd.f32 0.0, %v842
    %844 = vmatprep.mubr.f32.mxu0 0.0
    %845 = vmatmul.mubr.f32.gmra.mxu0 %v514
    %v846 = vpop.f32.mrf.mxu0
    %v847 = vadd.f32 0.0, %v846
    %v848 = vpop.f32.mrf.mxu0
    %v849 = vadd.f32 0.0, %v848
    %850 = vdwg.mxu0
    %851 = vmatprep.subr.mxu0 %v465
    %852 = vmatpush1.msra.mxu0 %v464
    %853 = vmatprep.subr.mxu0 %v453
    %854 = vmatpush1.msra.mxu0 %v452
    %855 = vmatprep.subr.mxu0 %v441
    %856 = vmatpush1.msra.mxu0 %v440
    %857 = vmatprep.subr.mxu0 %v429
    %858 = vmatpush1.msra.mxu0 %v428
    %859 = vmatprep.subr.mxu0 %v417
    %860 = vmatpush1.msra.mxu0 %v416
    %861 = vmatprep.subr.mxu0 %v405
    %862 = vmatpush1.msra.mxu0 %v404
    %863 = vmatprep.subr.mxu0 %v393
    %864 = vmatpush1.msra.mxu0 %v392
    %865 = vmatprep.subr.mxu0 %v381
    %866 = vmatpush1.msra.mxu0 %v380
    %867 = vmatprep.subr.mxu0 %v369
    %868 = vmatpush1.msra.mxu0 %v368
    %869 = vmatprep.subr.mxu0 %v357
    %870 = vmatpush1.msra.mxu0 %v356
    %871 = vmatprep.subr.mxu0 %v345
    %872 = vmatpush1.msra.mxu0 %v344
    %873 = vmatprep.subr.mxu0 %v333
    %874 = vmatpush1.msra.mxu0 %v332
    %875 = vmatprep.subr.mxu0 %v321
    %876 = vmatpush1.msra.mxu0 %v320
    %877 = vmatprep.subr.mxu0 %v309
    %878 = vmatpush1.msra.mxu0 %v308
    %879 = vmatprep.subr.mxu0 %v297
    %880 = vmatpush1.msra.mxu0 %v296
    %881 = vmatprep.subr.mxu0 %v285
    %882 = vmatpush1.msra.mxu0 %v284
    %883 = vmatprep.subr.mxu0 0.0
    %884 = vmatpush2.msra.mxu0 0.0
    %885 = vmatprep.subr.mxu0 0.0
    %886 = vmatpush2.msra.mxu0 0.0
    %887 = vmatprep.subr.mxu0 0.0
    %888 = vmatpush2.msra.mxu0 0.0
    %889 = vmatprep.subr.mxu0 0.0
    %890 = vmatpush2.msra.mxu0 0.0
    %891 = vmatprep.subr.mxu0 0.0
    %892 = vmatpush2.msra.mxu0 0.0
    %893 = vmatprep.subr.mxu0 0.0
    %894 = vmatpush2.msra.mxu0 0.0
    %895 = vmatprep.subr.mxu0 0.0
    %896 = vmatpush2.msra.mxu0 0.0
    %897 = vmatprep.subr.mxu0 0.0
    %898 = vmatpush2.msra.mxu0 0.0
    %899 = vmatprep.subr.mxu0 0.0
    %900 = vmatpush2.msra.mxu0 0.0
    %901 = vmatprep.subr.mxu0 0.0
    %902 = vmatpush2.msra.mxu0 0.0
    %903 = vmatprep.subr.mxu0 0.0
    %904 = vmatpush2.msra.mxu0 0.0
    %905 = vmatprep.subr.mxu0 0.0
    %906 = vmatpush2.msra.mxu0 0.0
    %907 = vmatprep.subr.mxu0 0.0
    %908 = vmatpush2.msra.mxu0 0.0
    %909 = vmatprep.subr.mxu0 0.0
    %910 = vmatpush2.msra.mxu0 0.0
    %911 = vmatprep.subr.mxu0 0.0
    %912 = vmatpush2.msra.mxu0 0.0
    %913 = vmatprep.subr.mxu0 0.0
    %914 = vmatpush2.msra.mxu0 0.0
    %915 = vmatprep.mubr.f32.mxu0 0.0
    %916 = vmatmul.mubr.f32.gmra.mxu0 %v513
    %v917 = vpop.f32.mrf.mxu0
    %v918 = vadd.f32 0.0, %v917
    %v919 = vpop.f32.mrf.mxu0
    %v920 = vadd.f32 0.0, %v919
    %921 = vmatprep.mubr.f32.mxu0 0.0
    %922 = vmatmul.mubr.f32.gmra.mxu0 %v515
    %v923 = vpop.f32.mrf.mxu0
    %v924 = vadd.f32 0.0, %v923
    %v925 = vpop.f32.mrf.mxu0
    %v926 = vadd.f32 0.0, %v925
    %927 = vmatprep.mubr.f32.mxu0 0.0
    %928 = vmatmul.mubr.f32.gmra.mxu0 %v514
    %v929 = vpop.f32.mrf.mxu0
    %v930 = vadd.f32 0.0, %v929
    %v931 = vpop.f32.mrf.mxu0
    %v932 = vadd.f32 0.0, %v931
    %933 = vdwg.mxu0
    %934 = vmatprep.subr.mxu0 %v467
    %935 = vmatpush1.msra.mxu0 %v466
    %936 = vmatprep.subr.mxu0 %v455
    %937 = vmatpush1.msra.mxu0 %v454
    %938 = vmatprep.subr.mxu0 %v443
    %939 = vmatpush1.msra.mxu0 %v442
    %940 = vmatprep.subr.mxu0 %v431
    %941 = vmatpush1.msra.mxu0 %v430
    %942 = vmatprep.subr.mxu0 %v419
    %943 = vmatpush1.msra.mxu0 %v418
    %944 = vmatprep.subr.mxu0 %v407
    %945 = vmatpush1.msra.mxu0 %v406
    %946 = vmatprep.subr.mxu0 %v395
    %947 = vmatpush1.msra.mxu0 %v394
    %948 = vmatprep.subr.mxu0 %v383
    %949 = vmatpush1.msra.mxu0 %v382
    %950 = vmatprep.subr.mxu0 %v371
    %951 = vmatpush1.msra.mxu0 %v370
    %952 = vmatprep.subr.mxu0 %v359
    %953 = vmatpush1.msra.mxu0 %v358
    %954 = vmatprep.subr.mxu0 %v347
    %955 = vmatpush1.msra.mxu0 %v346
    %956 = vmatprep.subr.mxu0 %v335
    %957 = vmatpush1.msra.mxu0 %v334
    %958 = vmatprep.subr.mxu0 %v323
    %959 = vmatpush1.msra.mxu0 %v322
    %960 = vmatprep.subr.mxu0 %v311
    %961 = vmatpush1.msra.mxu0 %v310
    %962 = vmatprep.subr.mxu0 %v299
    %963 = vmatpush1.msra.mxu0 %v298
    %964 = vmatprep.subr.mxu0 %v287
    %965 = vmatpush1.msra.mxu0 %v286
    %966 = vmatprep.subr.mxu0 0.0
    %967 = vmatpush2.msra.mxu0 0.0
    %968 = vmatprep.subr.mxu0 0.0
    %969 = vmatpush2.msra.mxu0 0.0
    %970 = vmatprep.subr.mxu0 0.0
    %971 = vmatpush2.msra.mxu0 0.0
    %972 = vmatprep.subr.mxu0 0.0
    %973 = vmatpush2.msra.mxu0 0.0
    %974 = vmatprep.subr.mxu0 0.0
    %975 = vmatpush2.msra.mxu0 0.0
    %976 = vmatprep.subr.mxu0 0.0
    %977 = vmatpush2.msra.mxu0 0.0
    %978 = vmatprep.subr.mxu0 0.0
    %979 = vmatpush2.msra.mxu0 0.0
    %980 = vmatprep.subr.mxu0 0.0
    %981 = vmatpush2.msra.mxu0 0.0
    %982 = vmatprep.subr.mxu0 0.0
    %983 = vmatpush2.msra.mxu0 0.0
    %984 = vmatprep.subr.mxu0 0.0
    %985 = vmatpush2.msra.mxu0 0.0
    %986 = vmatprep.subr.mxu0 0.0
    %987 = vmatpush2.msra.mxu0 0.0
    %988 = vmatprep.subr.mxu0 0.0
    %989 = vmatpush2.msra.mxu0 0.0
    %990 = vmatprep.subr.mxu0 0.0
    %991 = vmatpush2.msra.mxu0 0.0
    %992 = vmatprep.subr.mxu0 0.0
    %993 = vmatpush2.msra.mxu0 0.0
    %994 = vmatprep.subr.mxu0 0.0
    %995 = vmatpush2.msra.mxu0 0.0
    %996 = vmatprep.subr.mxu0 0.0
    %997 = vmatpush2.msra.mxu0 0.0
    %998 = vmatprep.mubr.f32.mxu0 0.0
    %999 = vmatmul.mubr.f32.gmra.mxu0 %v513
    %v1000 = vpop.f32.mrf.mxu0
    %v1001 = vadd.f32 0.0, %v1000
    %v1002 = vpop.f32.mrf.mxu0
    %v1003 = vadd.f32 0.0, %v1002
    %1004 = vmatprep.mubr.f32.mxu0 0.0
    %1005 = vmatmul.mubr.f32.gmra.mxu0 %v515
    %v1006 = vpop.f32.mrf.mxu0
    %v1007 = vadd.f32 0.0, %v1006
    %v1008 = vpop.f32.mrf.mxu0
    %v1009 = vadd.f32 0.0, %v1008
    %1010 = vmatprep.mubr.f32.mxu0 0.0
    %1011 = vmatmul.mubr.f32.gmra.mxu0 %v514
    %v1012 = vpop.f32.mrf.mxu0
    %v1013 = vadd.f32 0.0, %v1012
    %v1014 = vpop.f32.mrf.mxu0
    %v1015 = vadd.f32 0.0, %v1014
    %1016 = vdwg.mxu0
    %v1018 = vunpack.c.l.s4 1983009808
    %v1019 = vunpack.c.0.s8 %v1018
    %v1020 = vlaneseq
    %v1021 = vshrl.u32 %v1020, 7
    %v1022 = vsub.s32 %v1019, %v1021
    %v1023 = vrot.slane %v75, %v1022
    %1027 = vmatprep.subr.mxu0 %v264
    %1028 = vmatpush1.msra.mxu0 %v263
    %1029 = vmatprep.subr.mxu0 %v252
    %1030 = vmatpush1.msra.mxu0 %v251
    %1031 = vmatprep.subr.mxu0 %v240
    %1032 = vmatpush1.msra.mxu0 %v239
    %1033 = vmatprep.subr.mxu0 %v228
    %1034 = vmatpush1.msra.mxu0 %v227
    %1035 = vmatprep.subr.mxu0 %v216
    %1036 = vmatpush1.msra.mxu0 %v215
    %1037 = vmatprep.subr.mxu0 %v204
    %1038 = vmatpush1.msra.mxu0 %v203
    %1039 = vmatprep.subr.mxu0 %v192
    %1040 = vmatpush1.msra.mxu0 %v191
    %1041 = vmatprep.subr.mxu0 %v180
    %1042 = vmatpush1.msra.mxu0 %v179
    %1043 = vmatprep.subr.mxu0 %v168
    %1044 = vmatpush1.msra.mxu0 %v167
    %1045 = vmatprep.subr.mxu0 %v156
    %1046 = vmatpush1.msra.mxu0 %v155
    %1047 = vmatprep.subr.mxu0 %v144
    %1048 = vmatpush1.msra.mxu0 %v143
    %1049 = vmatprep.subr.mxu0 %v132
    %1050 = vmatpush1.msra.mxu0 %v131
    %1051 = vmatprep.subr.mxu0 %v120
    %1052 = vmatpush1.msra.mxu0 %v119
    %1053 = vmatprep.subr.mxu0 %v108
    %1054 = vmatpush1.msra.mxu0 %v107
    %1055 = vmatprep.subr.mxu0 %v96
    %1056 = vmatpush1.msra.mxu0 %v95
    %1057 = vmatprep.subr.mxu0 %v84
    %1058 = vmatpush1.msra.mxu0 %v83
    %1059 = vmatprep.subr.mxu0 0.0
    %1060 = vmatpush2.msra.mxu0 0.0
    %1061 = vmatprep.subr.mxu0 0.0
    %1062 = vmatpush2.msra.mxu0 0.0
    %1063 = vmatprep.subr.mxu0 0.0
    %1064 = vmatpush2.msra.mxu0 0.0
    %1065 = vmatprep.subr.mxu0 0.0
    %1066 = vmatpush2.msra.mxu0 0.0
    %1067 = vmatprep.subr.mxu0 0.0
    %1068 = vmatpush2.msra.mxu0 0.0
    %1069 = vmatprep.subr.mxu0 0.0
    %1070 = vmatpush2.msra.mxu0 0.0
    %1071 = vmatprep.subr.mxu0 0.0
    %1072 = vmatpush2.msra.mxu0 0.0
    %1073 = vmatprep.subr.mxu0 0.0
    %1074 = vmatpush2.msra.mxu0 0.0
    %1075 = vmatprep.subr.mxu0 0.0
    %1076 = vmatpush2.msra.mxu0 0.0
    %1077 = vmatprep.subr.mxu0 0.0
    %1078 = vmatpush2.msra.mxu0 0.0
    %1079 = vmatprep.subr.mxu0 0.0
    %1080 = vmatpush2.msra.mxu0 0.0
    %1081 = vmatprep.subr.mxu0 0.0
    %1082 = vmatpush2.msra.mxu0 0.0
    %1083 = vmatprep.subr.mxu0 0.0
    %1084 = vmatpush2.msra.mxu0 0.0
    %1085 = vmatprep.subr.mxu0 0.0
    %1086 = vmatpush2.msra.mxu0 0.0
    %1087 = vmatprep.subr.mxu0 0.0
    %1088 = vmatpush2.msra.mxu0 0.0
    %1089 = vmatprep.subr.mxu0 0.0
    %1090 = vmatpush2.msra.mxu0 0.0
    %1091 = vmatprep.mubr.f32.mxu0 0.0
    %1092 = vmatmul.mubr.f32.gmra.mxu0 %v484
    %v1093 = vpop.f32.mrf.mxu0
    %v1094 = vadd.f32 %v586, %v1093
    %v1095 = vpop.f32.mrf.mxu0
    %v1096 = vadd.f32 %v588, %v1095
    %1097 = vmatprep.mubr.f32.mxu0 0.0
    %1098 = vmatmul.mubr.f32.gmra.mxu0 %v501
    %v1099 = vpop.f32.mrf.mxu0
    %v1100 = vadd.f32 %v592, %v1099
    %v1101 = vpop.f32.mrf.mxu0
    %v1102 = vadd.f32 %v594, %v1101
    %1103 = vmatprep.mubr.f32.mxu0 0.0
    %1104 = vmatmul.mubr.f32.gmra.mxu0 %v1023
    %v1105 = vpop.f32.mrf.mxu0
    %v1106 = vadd.f32 %v598, %v1105
    %v1107 = vpop.f32.mrf.mxu0
    %v1108 = vadd.f32 %v600, %v1107
    %1109 = vdwg.mxu0
    %1110 = vmatprep.subr.mxu0 %v266
    %1111 = vmatpush1.msra.mxu0 %v265
    %1112 = vmatprep.subr.mxu0 %v254
    %1113 = vmatpush1.msra.mxu0 %v253
    %1114 = vmatprep.subr.mxu0 %v242
    %1115 = vmatpush1.msra.mxu0 %v241
    %1116 = vmatprep.subr.mxu0 %v230
    %1117 = vmatpush1.msra.mxu0 %v229
    %1118 = vmatprep.subr.mxu0 %v218
    %1119 = vmatpush1.msra.mxu0 %v217
    %1120 = vmatprep.subr.mxu0 %v206
    %1121 = vmatpush1.msra.mxu0 %v205
    %1122 = vmatprep.subr.mxu0 %v194
    %1123 = vmatpush1.msra.mxu0 %v193
    %1124 = vmatprep.subr.mxu0 %v182
    %1125 = vmatpush1.msra.mxu0 %v181
    %1126 = vmatprep.subr.mxu0 %v170
    %1127 = vmatpush1.msra.mxu0 %v169
    %1128 = vmatprep.subr.mxu0 %v158
    %1129 = vmatpush1.msra.mxu0 %v157
    %1130 = vmatprep.subr.mxu0 %v146
    %1131 = vmatpush1.msra.mxu0 %v145
    %1132 = vmatprep.subr.mxu0 %v134
    %1133 = vmatpush1.msra.mxu0 %v133
    %1134 = vmatprep.subr.mxu0 %v122
    %1135 = vmatpush1.msra.mxu0 %v121
    %1136 = vmatprep.subr.mxu0 %v110
    %1137 = vmatpush1.msra.mxu0 %v109
    %1138 = vmatprep.subr.mxu0 %v98
    %1139 = vmatpush1.msra.mxu0 %v97
    %1140 = vmatprep.subr.mxu0 %v86
    %1141 = vmatpush1.msra.mxu0 %v85
    %1142 = vmatprep.subr.mxu0 0.0
    %1143 = vmatpush2.msra.mxu0 0.0
    %1144 = vmatprep.subr.mxu0 0.0
    %1145 = vmatpush2.msra.mxu0 0.0
    %1146 = vmatprep.subr.mxu0 0.0
    %1147 = vmatpush2.msra.mxu0 0.0
    %1148 = vmatprep.subr.mxu0 0.0
    %1149 = vmatpush2.msra.mxu0 0.0
    %1150 = vmatprep.subr.mxu0 0.0
    %1151 = vmatpush2.msra.mxu0 0.0
    %1152 = vmatprep.subr.mxu0 0.0
    %1153 = vmatpush2.msra.mxu0 0.0
    %1154 = vmatprep.subr.mxu0 0.0
    %1155 = vmatpush2.msra.mxu0 0.0
    %1156 = vmatprep.subr.mxu0 0.0
    %1157 = vmatpush2.msra.mxu0 0.0
    %1158 = vmatprep.subr.mxu0 0.0
    %1159 = vmatpush2.msra.mxu0 0.0
    %1160 = vmatprep.subr.mxu0 0.0
    %1161 = vmatpush2.msra.mxu0 0.0
    %1162 = vmatprep.subr.mxu0 0.0
    %1163 = vmatpush2.msra.mxu0 0.0
    %1164 = vmatprep.subr.mxu0 0.0
    %1165 = vmatpush2.msra.mxu0 0.0
    %1166 = vmatprep.subr.mxu0 0.0
    %1167 = vmatpush2.msra.mxu0 0.0
    %1168 = vmatprep.subr.mxu0 0.0
    %1169 = vmatpush2.msra.mxu0 0.0
    %1170 = vmatprep.subr.mxu0 0.0
    %1171 = vmatpush2.msra.mxu0 0.0
    %1172 = vmatprep.subr.mxu0 0.0
    %1173 = vmatpush2.msra.mxu0 0.0
    %1174 = vmatprep.mubr.f32.mxu0 0.0
    %1175 = vmatmul.mubr.f32.gmra.mxu0 %v484
    %v1176 = vpop.f32.mrf.mxu0
    %v1177 = vadd.f32 %v669, %v1176
    %v1178 = vpop.f32.mrf.mxu0
    %v1179 = vadd.f32 %v671, %v1178
    %1180 = vmatprep.mubr.f32.mxu0 0.0
    %1181 = vmatmul.mubr.f32.gmra.mxu0 %v501
    %v1182 = vpop.f32.mrf.mxu0
    %v1183 = vadd.f32 %v675, %v1182
    %v1184 = vpop.f32.mrf.mxu0
    %v1185 = vadd.f32 %v677, %v1184
    %1186 = vmatprep.mubr.f32.mxu0 0.0
    %1187 = vmatmul.mubr.f32.gmra.mxu0 %v1023
    %v1188 = vpop.f32.mrf.mxu0
    %v1189 = vadd.f32 %v681, %v1188
    %v1190 = vpop.f32.mrf.mxu0
    %v1191 = vadd.f32 %v683, %v1190
    %1192 = vdwg.mxu0
    %1193 = vmatprep.subr.mxu0 %v268
    %1194 = vmatpush1.msra.mxu0 %v267
    %1195 = vmatprep.subr.mxu0 %v256
    %1196 = vmatpush1.msra.mxu0 %v255
    %1197 = vmatprep.subr.mxu0 %v244
    %1198 = vmatpush1.msra.mxu0 %v243
    %1199 = vmatprep.subr.mxu0 %v232
    %1200 = vmatpush1.msra.mxu0 %v231
    %1201 = vmatprep.subr.mxu0 %v220
    %1202 = vmatpush1.msra.mxu0 %v219
    %1203 = vmatprep.subr.mxu0 %v208
    %1204 = vmatpush1.msra.mxu0 %v207
    %1205 = vmatprep.subr.mxu0 %v196
    %1206 = vmatpush1.msra.mxu0 %v195
    %1207 = vmatprep.subr.mxu0 %v184
    %1208 = vmatpush1.msra.mxu0 %v183
    %1209 = vmatprep.subr.mxu0 %v172
    %1210 = vmatpush1.msra.mxu0 %v171
    %1211 = vmatprep.subr.mxu0 %v160
    %1212 = vmatpush1.msra.mxu0 %v159
    %1213 = vmatprep.subr.mxu0 %v148
    %1214 = vmatpush1.msra.mxu0 %v147
    %1215 = vmatprep.subr.mxu0 %v136
    %1216 = vmatpush1.msra.mxu0 %v135
    %1217 = vmatprep.subr.mxu0 %v124
    %1218 = vmatpush1.msra.mxu0 %v123
    %1219 = vmatprep.subr.mxu0 %v112
    %1220 = vmatpush1.msra.mxu0 %v111
    %1221 = vmatprep.subr.mxu0 %v100
    %1222 = vmatpush1.msra.mxu0 %v99
    %1223 = vmatprep.subr.mxu0 %v88
    %1224 = vmatpush1.msra.mxu0 %v87
    %1225 = vmatprep.subr.mxu0 0.0
    %1226 = vmatpush2.msra.mxu0 0.0
    %1227 = vmatprep.subr.mxu0 0.0
    %1228 = vmatpush2.msra.mxu0 0.0
    %1229 = vmatprep.subr.mxu0 0.0
    %1230 = vmatpush2.msra.mxu0 0.0
    %1231 = vmatprep.subr.mxu0 0.0
    %1232 = vmatpush2.msra.mxu0 0.0
    %1233 = vmatprep.subr.mxu0 0.0
    %1234 = vmatpush2.msra.mxu0 0.0
    %1235 = vmatprep.subr.mxu0 0.0
    %1236 = vmatpush2.msra.mxu0 0.0
    %1237 = vmatprep.subr.mxu0 0.0
    %1238 = vmatpush2.msra.mxu0 0.0
    %1239 = vmatprep.subr.mxu0 0.0
    %1240 = vmatpush2.msra.mxu0 0.0
    %1241 = vmatprep.subr.mxu0 0.0
    %1242 = vmatpush2.msra.mxu0 0.0
    %1243 = vmatprep.subr.mxu0 0.0
    %1244 = vmatpush2.msra.mxu0 0.0
    %1245 = vmatprep.subr.mxu0 0.0
    %1246 = vmatpush2.msra.mxu0 0.0
    %1247 = vmatprep.subr.mxu0 0.0
    %1248 = vmatpush2.msra.mxu0 0.0
    %1249 = vmatprep.subr.mxu0 0.0
    %1250 = vmatpush2.msra.mxu0 0.0
    %1251 = vmatprep.subr.mxu0 0.0
    %1252 = vmatpush2.msra.mxu0 0.0
    %1253 = vmatprep.subr.mxu0 0.0
    %1254 = vmatpush2.msra.mxu0 0.0
    %1255 = vmatprep.subr.mxu0 0.0
    %1256 = vmatpush2.msra.mxu0 0.0
    %1257 = vmatprep.mubr.f32.mxu0 0.0
    %1258 = vmatmul.mubr.f32.gmra.mxu0 %v484
    %v1259 = vpop.f32.mrf.mxu0
    %v1260 = vadd.f32 %v752, %v1259
    %v1261 = vpop.f32.mrf.mxu0
    %v1262 = vadd.f32 %v754, %v1261
    %1263 = vmatprep.mubr.f32.mxu0 0.0
    %1264 = vmatmul.mubr.f32.gmra.mxu0 %v501
    %v1265 = vpop.f32.mrf.mxu0
    %v1266 = vadd.f32 %v758, %v1265
    %v1267 = vpop.f32.mrf.mxu0
    %v1268 = vadd.f32 %v760, %v1267
    %1269 = vmatprep.mubr.f32.mxu0 0.0
    %1270 = vmatmul.mubr.f32.gmra.mxu0 %v1023
    %v1271 = vpop.f32.mrf.mxu0
    %v1272 = vadd.f32 %v764, %v1271
    %v1273 = vpop.f32.mrf.mxu0
    %v1274 = vadd.f32 %v766, %v1273
    %1275 = vdwg.mxu0
    %1276 = vmatprep.subr.mxu0 %v270
    %1277 = vmatpush1.msra.mxu0 %v269
    %1278 = vmatprep.subr.mxu0 %v258
    %1279 = vmatpush1.msra.mxu0 %v257
    %1280 = vmatprep.subr.mxu0 %v246
    %1281 = vmatpush1.msra.mxu0 %v245
    %1282 = vmatprep.subr.mxu0 %v234
    %1283 = vmatpush1.msra.mxu0 %v233
    %1284 = vmatprep.subr.mxu0 %v222
    %1285 = vmatpush1.msra.mxu0 %v221
    %1286 = vmatprep.subr.mxu0 %v210
    %1287 = vmatpush1.msra.mxu0 %v209
    %1288 = vmatprep.subr.mxu0 %v198
    %1289 = vmatpush1.msra.mxu0 %v197
    %1290 = vmatprep.subr.mxu0 %v186
    %1291 = vmatpush1.msra.mxu0 %v185
    %1292 = vmatprep.subr.mxu0 %v174
    %1293 = vmatpush1.msra.mxu0 %v173
    %1294 = vmatprep.subr.mxu0 %v162
    %1295 = vmatpush1.msra.mxu0 %v161
    %1296 = vmatprep.subr.mxu0 %v150
    %1297 = vmatpush1.msra.mxu0 %v149
    %1298 = vmatprep.subr.mxu0 %v138
    %1299 = vmatpush1.msra.mxu0 %v137
    %1300 = vmatprep.subr.mxu0 %v126
    %1301 = vmatpush1.msra.mxu0 %v125
    %1302 = vmatprep.subr.mxu0 %v114
    %1303 = vmatpush1.msra.mxu0 %v113
    %1304 = vmatprep.subr.mxu0 %v102
    %1305 = vmatpush1.msra.mxu0 %v101
    %1306 = vmatprep.subr.mxu0 %v90
    %1307 = vmatpush1.msra.mxu0 %v89
    %1308 = vmatprep.subr.mxu0 0.0
    %1309 = vmatpush2.msra.mxu0 0.0
    %1310 = vmatprep.subr.mxu0 0.0
    %1311 = vmatpush2.msra.mxu0 0.0
    %1312 = vmatprep.subr.mxu0 0.0
    %1313 = vmatpush2.msra.mxu0 0.0
    %1314 = vmatprep.subr.mxu0 0.0
    %1315 = vmatpush2.msra.mxu0 0.0
    %1316 = vmatprep.subr.mxu0 0.0
    %1317 = vmatpush2.msra.mxu0 0.0
    %1318 = vmatprep.subr.mxu0 0.0
    %1319 = vmatpush2.msra.mxu0 0.0
    %1320 = vmatprep.subr.mxu0 0.0
    %1321 = vmatpush2.msra.mxu0 0.0
    %1322 = vmatprep.subr.mxu0 0.0
    %1323 = vmatpush2.msra.mxu0 0.0
    %1324 = vmatprep.subr.mxu0 0.0
    %1325 = vmatpush2.msra.mxu0 0.0
    %1326 = vmatprep.subr.mxu0 0.0
    %1327 = vmatpush2.msra.mxu0 0.0
    %1328 = vmatprep.subr.mxu0 0.0
    %1329 = vmatpush2.msra.mxu0 0.0
    %1330 = vmatprep.subr.mxu0 0.0
    %1331 = vmatpush2.msra.mxu0 0.0
    %1332 = vmatprep.subr.mxu0 0.0
    %1333 = vmatpush2.msra.mxu0 0.0
    %1334 = vmatprep.subr.mxu0 0.0
    %1335 = vmatpush2.msra.mxu0 0.0
    %1336 = vmatprep.subr.mxu0 0.0
    %1337 = vmatpush2.msra.mxu0 0.0
    %1338 = vmatprep.subr.mxu0 0.0
    %1339 = vmatpush2.msra.mxu0 0.0
    %1340 = vmatprep.mubr.f32.mxu0 0.0
    %1341 = vmatmul.mubr.f32.gmra.mxu0 %v484
    %v1342 = vpop.f32.mrf.mxu0
    %v1343 = vadd.f32 %v835, %v1342
    %v1344 = vpop.f32.mrf.mxu0
    %v1345 = vadd.f32 %v837, %v1344
    %1346 = vmatprep.mubr.f32.mxu0 0.0
    %1347 = vmatmul.mubr.f32.gmra.mxu0 %v501
    %v1348 = vpop.f32.mrf.mxu0
    %v1349 = vadd.f32 %v841, %v1348
    %v1350 = vpop.f32.mrf.mxu0
    %v1351 = vadd.f32 %v843, %v1350
    %1352 = vmatprep.mubr.f32.mxu0 0.0
    %1353 = vmatmul.mubr.f32.gmra.mxu0 %v1023
    %v1354 = vpop.f32.mrf.mxu0
    %v1355 = vadd.f32 %v847, %v1354
    %v1356 = vpop.f32.mrf.mxu0
    %v1357 = vadd.f32 %v849, %v1356
    %1358 = vdwg.mxu0
    %1359 = vmatprep.subr.mxu0 %v272
    %1360 = vmatpush1.msra.mxu0 %v271
    %1361 = vmatprep.subr.mxu0 %v260
    %1362 = vmatpush1.msra.mxu0 %v259
    %1363 = vmatprep.subr.mxu0 %v248
    %1364 = vmatpush1.msra.mxu0 %v247
    %1365 = vmatprep.subr.mxu0 %v236
    %1366 = vmatpush1.msra.mxu0 %v235
    %1367 = vmatprep.subr.mxu0 %v224
    %1368 = vmatpush1.msra.mxu0 %v223
    %1369 = vmatprep.subr.mxu0 %v212
    %1370 = vmatpush1.msra.mxu0 %v211
    %1371 = vmatprep.subr.mxu0 %v200
    %1372 = vmatpush1.msra.mxu0 %v199
    %1373 = vmatprep.subr.mxu0 %v188
    %1374 = vmatpush1.msra.mxu0 %v187
    %1375 = vmatprep.subr.mxu0 %v176
    %1376 = vmatpush1.msra.mxu0 %v175
    %1377 = vmatprep.subr.mxu0 %v164
    %1378 = vmatpush1.msra.mxu0 %v163
    %1379 = vmatprep.subr.mxu0 %v152
    %1380 = vmatpush1.msra.mxu0 %v151
    %1381 = vmatprep.subr.mxu0 %v140
    %1382 = vmatpush1.msra.mxu0 %v139
    %1383 = vmatprep.subr.mxu0 %v128
    %1384 = vmatpush1.msra.mxu0 %v127
    %1385 = vmatprep.subr.mxu0 %v116
    %1386 = vmatpush1.msra.mxu0 %v115
    %1387 = vmatprep.subr.mxu0 %v104
    %1388 = vmatpush1.msra.mxu0 %v103
    %1389 = vmatprep.subr.mxu0 %v92
    %1390 = vmatpush1.msra.mxu0 %v91
    %1391 = vmatprep.subr.mxu0 0.0
    %1392 = vmatpush2.msra.mxu0 0.0
    %1393 = vmatprep.subr.mxu0 0.0
    %1394 = vmatpush2.msra.mxu0 0.0
    %1395 = vmatprep.subr.mxu0 0.0
    %1396 = vmatpush2.msra.mxu0 0.0
    %1397 = vmatprep.subr.mxu0 0.0
    %1398 = vmatpush2.msra.mxu0 0.0
    %1399 = vmatprep.subr.mxu0 0.0
    %1400 = vmatpush2.msra.mxu0 0.0
    %1401 = vmatprep.subr.mxu0 0.0
    %1402 = vmatpush2.msra.mxu0 0.0
    %1403 = vmatprep.subr.mxu0 0.0
    %1404 = vmatpush2.msra.mxu0 0.0
    %1405 = vmatprep.subr.mxu0 0.0
    %1406 = vmatpush2.msra.mxu0 0.0
    %1407 = vmatprep.subr.mxu0 0.0
    %1408 = vmatpush2.msra.mxu0 0.0
    %1409 = vmatprep.subr.mxu0 0.0
    %1410 = vmatpush2.msra.mxu0 0.0
    %1411 = vmatprep.subr.mxu0 0.0
    %1412 = vmatpush2.msra.mxu0 0.0
    %1413 = vmatprep.subr.mxu0 0.0
    %1414 = vmatpush2.msra.mxu0 0.0
    %1415 = vmatprep.subr.mxu0 0.0
    %1416 = vmatpush2.msra.mxu0 0.0
    %1417 = vmatprep.subr.mxu0 0.0
    %1418 = vmatpush2.msra.mxu0 0.0
    %1419 = vmatprep.subr.mxu0 0.0
    %1420 = vmatpush2.msra.mxu0 0.0
    %1421 = vmatprep.subr.mxu0 0.0
    %1422 = vmatpush2.msra.mxu0 0.0
    %1423 = vmatprep.mubr.f32.mxu0 0.0
    %1424 = vmatmul.mubr.f32.gmra.mxu0 %v484
    %v1425 = vpop.f32.mrf.mxu0
    %v1426 = vadd.f32 %v918, %v1425
    %v1427 = vpop.f32.mrf.mxu0
    %v1428 = vadd.f32 %v920, %v1427
    %1429 = vmatprep.mubr.f32.mxu0 0.0
    %1430 = vmatmul.mubr.f32.gmra.mxu0 %v501
    %v1431 = vpop.f32.mrf.mxu0
    %v1432 = vadd.f32 %v924, %v1431
    %v1433 = vpop.f32.mrf.mxu0
    %v1434 = vadd.f32 %v926, %v1433
    %1435 = vmatprep.mubr.f32.mxu0 0.0
    %1436 = vmatmul.mubr.f32.gmra.mxu0 %v1023
    %v1437 = vpop.f32.mrf.mxu0
    %v1438 = vadd.f32 %v930, %v1437
    %v1439 = vpop.f32.mrf.mxu0
    %v1440 = vadd.f32 %v932, %v1439
    %1441 = vdwg.mxu0
    %1442 = vmatprep.subr.mxu0 %v274
    %1443 = vmatpush1.msra.mxu0 %v273
    %1444 = vmatprep.subr.mxu0 %v262
    %1445 = vmatpush1.msra.mxu0 %v261
    %1446 = vmatprep.subr.mxu0 %v250
    %1447 = vmatpush1.msra.mxu0 %v249
    %1448 = vmatprep.subr.mxu0 %v238
    %1449 = vmatpush1.msra.mxu0 %v237
    %1450 = vmatprep.subr.mxu0 %v226
    %1451 = vmatpush1.msra.mxu0 %v225
    %1452 = vmatprep.subr.mxu0 %v214
    %1453 = vmatpush1.msra.mxu0 %v213
    %1454 = vmatprep.subr.mxu0 %v202
    %1455 = vmatpush1.msra.mxu0 %v201
    %1456 = vmatprep.subr.mxu0 %v190
    %1457 = vmatpush1.msra.mxu0 %v189
    %1458 = vmatprep.subr.mxu0 %v178
    %1459 = vmatpush1.msra.mxu0 %v177
    %1460 = vmatprep.subr.mxu0 %v166
    %1461 = vmatpush1.msra.mxu0 %v165
    %1462 = vmatprep.subr.mxu0 %v154
    %1463 = vmatpush1.msra.mxu0 %v153
    %1464 = vmatprep.subr.mxu0 %v142
    %1465 = vmatpush1.msra.mxu0 %v141
    %1466 = vmatprep.subr.mxu0 %v130
    %1467 = vmatpush1.msra.mxu0 %v129
    %1468 = vmatprep.subr.mxu0 %v118
    %1469 = vmatpush1.msra.mxu0 %v117
    %1470 = vmatprep.subr.mxu0 %v106
    %1471 = vmatpush1.msra.mxu0 %v105
    %1472 = vmatprep.subr.mxu0 %v94
    %1473 = vmatpush1.msra.mxu0 %v93
    %1474 = vmatprep.subr.mxu0 0.0
    %1475 = vmatpush2.msra.mxu0 0.0
    %1476 = vmatprep.subr.mxu0 0.0
    %1477 = vmatpush2.msra.mxu0 0.0
    %1478 = vmatprep.subr.mxu0 0.0
    %1479 = vmatpush2.msra.mxu0 0.0
    %1480 = vmatprep.subr.mxu0 0.0
    %1481 = vmatpush2.msra.mxu0 0.0
    %1482 = vmatprep.subr.mxu0 0.0
    %1483 = vmatpush2.msra.mxu0 0.0
    %1484 = vmatprep.subr.mxu0 0.0
    %1485 = vmatpush2.msra.mxu0 0.0
    %1486 = vmatprep.subr.mxu0 0.0
    %1487 = vmatpush2.msra.mxu0 0.0
    %1488 = vmatprep.subr.mxu0 0.0
    %1489 = vmatpush2.msra.mxu0 0.0
    %1490 = vmatprep.subr.mxu0 0.0
    %1491 = vmatpush2.msra.mxu0 0.0
    %1492 = vmatprep.subr.mxu0 0.0
    %1493 = vmatpush2.msra.mxu0 0.0
    %1494 = vmatprep.subr.mxu0 0.0
    %1495 = vmatpush2.msra.mxu0 0.0
    %1496 = vmatprep.subr.mxu0 0.0
    %1497 = vmatpush2.msra.mxu0 0.0
    %1498 = vmatprep.subr.mxu0 0.0
    %1499 = vmatpush2.msra.mxu0 0.0
    %1500 = vmatprep.subr.mxu0 0.0
    %1501 = vmatpush2.msra.mxu0 0.0
    %1502 = vmatprep.subr.mxu0 0.0
    %1503 = vmatpush2.msra.mxu0 0.0
    %1504 = vmatprep.subr.mxu0 0.0
    %1505 = vmatpush2.msra.mxu0 0.0
    %1506 = vmatprep.mubr.f32.mxu0 0.0
    %1507 = vmatmul.mubr.f32.gmra.mxu0 %v484
    %v1508 = vpop.f32.mrf.mxu0
    %v1509 = vadd.f32 %v1001, %v1508
    %v1510 = vpop.f32.mrf.mxu0
    %v1511 = vadd.f32 %v1003, %v1510
    %1512 = vmatprep.mubr.f32.mxu0 0.0
    %1513 = vmatmul.mubr.f32.gmra.mxu0 %v501
    %v1514 = vpop.f32.mrf.mxu0
    %v1515 = vadd.f32 %v1007, %v1514
    %v1516 = vpop.f32.mrf.mxu0
    %v1517 = vadd.f32 %v1009, %v1516
    %1518 = vmatprep.mubr.f32.mxu0 0.0
    %1519 = vmatmul.mubr.f32.gmra.mxu0 %v1023
    %v1520 = vpop.f32.mrf.mxu0
    %v1521 = vadd.f32 %v1013, %v1520
    %v1522 = vpop.f32.mrf.mxu0
    %v1523 = vadd.f32 %v1015, %v1522
    %1524 = vdwg.mxu0
    %s1525 = scalar_lea.vmem %s1, 3072
    %v1526 = vld [vmem:[%s1525] sm:$0xff]
    %v1527 = vld [vmem:[%s1525 + $0x8] sm:$0xff]
    %v1528 = vld [vmem:[%s1525 + $0x10] sm:$0xff]
    %v1529 = vld [vmem:[%s1525 + $0x18] sm:$0xff]
    %v1530 = vld [vmem:[%s1525 + $0x20] sm:$0xff]
    %v1531 = vld [vmem:[%s1525 + $0x28] sm:$0xff]
    %v1532 = vld [vmem:[%s1525 + $0x30] sm:$0xff]
    %v1533 = vld [vmem:[%s1525 + $0x38] sm:$0xff]
    %v1534 = vld [vmem:[%s1525 + $0x40] sm:$0xff]
    %v1535 = vld [vmem:[%s1525 + $0x48] sm:$0xff]
    %v1536 = vld [vmem:[%s1525 + $0x50] sm:$0xff]
    %v1537 = vld [vmem:[%s1525 + $0x58] sm:$0xff]
    %v1538 = vld [vmem:[%s1525 + $0x60] sm:$0xff]
    %v1539 = vld [vmem:[%s1525 + $0x68] sm:$0xff]
    %v1540 = vld [vmem:[%s1525 + $0x70] sm:$0xff]
    %v1541 = vld [vmem:[%s1525 + $0x78] sm:$0xff]
    %v1542 = vld [vmem:[%s1525 + $0x80] sm:$0xff]
    %v1543 = vld [vmem:[%s1525 + $0x88] sm:$0xff]
    %v1544 = vld [vmem:[%s1525 + $0x90] sm:$0xff]
    %v1545 = vld [vmem:[%s1525 + $0x98] sm:$0xff]
    %v1546 = vld [vmem:[%s1525 + $0xa0] sm:$0xff]
    %v1547 = vld [vmem:[%s1525 + $0xa8] sm:$0xff]
    %v1548 = vld [vmem:[%s1525 + $0xb0] sm:$0xff]
    %v1549 = vld [vmem:[%s1525 + $0xb8] sm:$0xff]
    %v1550 = vld [vmem:[%s1525 + $0xc0] sm:$0xff]
    %v1551 = vld [vmem:[%s1525 + $0xc8] sm:$0xff]
    %v1552 = vld [vmem:[%s1525 + $0xd0] sm:$0xff]
    %v1553 = vld [vmem:[%s1525 + $0xd8] sm:$0xff]
    %v1554 = vld [vmem:[%s1525 + $0xe0] sm:$0xff]
    %v1555 = vld [vmem:[%s1525 + $0xe8] sm:$0xff]
    %v1556 = vld [vmem:[%s1525 + $0xf0] sm:$0xff]
    %v1557 = vld [vmem:[%s1525 + $0xf8] sm:$0xff]
    %v1558 = vld [vmem:[%s1525 + $0x100] sm:$0xff]
    %v1559 = vld [vmem:[%s1525 + $0x108] sm:$0xff]
    %v1560 = vld [vmem:[%s1525 + $0x110] sm:$0xff]
    %v1561 = vld [vmem:[%s1525 + $0x118] sm:$0xff]
    %v1562 = vld [vmem:[%s1525 + $0x120] sm:$0xff]
    %v1563 = vld [vmem:[%s1525 + $0x128] sm:$0xff]
    %v1564 = vld [vmem:[%s1525 + $0x130] sm:$0xff]
    %v1565 = vld [vmem:[%s1525 + $0x138] sm:$0xff]
    %v1566 = vld [vmem:[%s1525 + $0x140] sm:$0xff]
    %v1567 = vld [vmem:[%s1525 + $0x148] sm:$0xff]
    %v1568 = vld [vmem:[%s1525 + $0x150] sm:$0xff]
    %v1569 = vld [vmem:[%s1525 + $0x158] sm:$0xff]
    %v1570 = vld [vmem:[%s1525 + $0x160] sm:$0xff]
    %v1571 = vld [vmem:[%s1525 + $0x168] sm:$0xff]
    %v1572 = vld [vmem:[%s1525 + $0x170] sm:$0xff]
    %v1573 = vld [vmem:[%s1525 + $0x178] sm:$0xff]
    %v1574 = vld [vmem:[%s1525 + $0x180] sm:$0xff]
    %v1575 = vld [vmem:[%s1525 + $0x188] sm:$0xff]
    %v1576 = vld [vmem:[%s1525 + $0x190] sm:$0xff]
    %v1577 = vld [vmem:[%s1525 + $0x198] sm:$0xff]
    %v1578 = vld [vmem:[%s1525 + $0x1a0] sm:$0xff]
    %v1579 = vld [vmem:[%s1525 + $0x1a8] sm:$0xff]
    %v1580 = vld [vmem:[%s1525 + $0x1b0] sm:$0xff]
    %v1581 = vld [vmem:[%s1525 + $0x1b8] sm:$0xff]
    %v1582 = vld [vmem:[%s1525 + $0x1c0] sm:$0xff]
    %v1583 = vld [vmem:[%s1525 + $0x1c8] sm:$0xff]
    %v1584 = vld [vmem:[%s1525 + $0x1d0] sm:$0xff]
    %v1585 = vld [vmem:[%s1525 + $0x1d8] sm:$0xff]
    %v1586 = vld [vmem:[%s1525 + $0x1e0] sm:$0xff]
    %v1587 = vld [vmem:[%s1525 + $0x1e8] sm:$0xff]
    %v1588 = vld [vmem:[%s1525 + $0x1f0] sm:$0xff]
    %v1589 = vld [vmem:[%s1525 + $0x1f8] sm:$0xff]
    %v1590 = vld [vmem:[%s1525 + $0x200] sm:$0xff]
    %v1591 = vld [vmem:[%s1525 + $0x208] sm:$0xff]
    %v1592 = vld [vmem:[%s1525 + $0x210] sm:$0xff]
    %v1593 = vld [vmem:[%s1525 + $0x218] sm:$0xff]
    %v1594 = vld [vmem:[%s1525 + $0x220] sm:$0xff]
    %v1595 = vld [vmem:[%s1525 + $0x228] sm:$0xff]
    %v1596 = vld [vmem:[%s1525 + $0x230] sm:$0xff]
    %v1597 = vld [vmem:[%s1525 + $0x238] sm:$0xff]
    %v1598 = vld [vmem:[%s1525 + $0x240] sm:$0xff]
    %v1599 = vld [vmem:[%s1525 + $0x248] sm:$0xff]
    %v1600 = vld [vmem:[%s1525 + $0x250] sm:$0xff]
    %v1601 = vld [vmem:[%s1525 + $0x258] sm:$0xff]
    %v1602 = vld [vmem:[%s1525 + $0x260] sm:$0xff]
    %v1603 = vld [vmem:[%s1525 + $0x268] sm:$0xff]
    %v1604 = vld [vmem:[%s1525 + $0x270] sm:$0xff]
    %v1605 = vld [vmem:[%s1525 + $0x278] sm:$0xff]
    %v1606 = vld [vmem:[%s1525 + $0x280] sm:$0xff]
    %v1607 = vld [vmem:[%s1525 + $0x288] sm:$0xff]
    %v1608 = vld [vmem:[%s1525 + $0x290] sm:$0xff]
    %v1609 = vld [vmem:[%s1525 + $0x298] sm:$0xff]
    %v1610 = vld [vmem:[%s1525 + $0x2a0] sm:$0xff]
    %v1611 = vld [vmem:[%s1525 + $0x2a8] sm:$0xff]
    %v1612 = vld [vmem:[%s1525 + $0x2b0] sm:$0xff]
    %v1613 = vld [vmem:[%s1525 + $0x2b8] sm:$0xff]
    %v1614 = vld [vmem:[%s1525 + $0x2c0] sm:$0xff]
    %v1615 = vld [vmem:[%s1525 + $0x2c8] sm:$0xff]
    %v1616 = vld [vmem:[%s1525 + $0x2d0] sm:$0xff]
    %v1617 = vld [vmem:[%s1525 + $0x2d8] sm:$0xff]
    %v1618 = vld [vmem:[%s1525 + $0x2e0] sm:$0xff]
    %v1619 = vld [vmem:[%s1525 + $0x2e8] sm:$0xff]
    %v1620 = vld [vmem:[%s1525 + $0x2f0] sm:$0xff]
    %v1621 = vld [vmem:[%s1525 + $0x2f8] sm:$0xff]
    %v1622 = vld [vmem:[%s1525 + $0x300] sm:$0xff]
    %v1623 = vld [vmem:[%s1525 + $0x308] sm:$0xff]
    %v1624 = vld [vmem:[%s1525 + $0x310] sm:$0xff]
    %v1625 = vld [vmem:[%s1525 + $0x318] sm:$0xff]
    %v1626 = vld [vmem:[%s1525 + $0x320] sm:$0xff]
    %v1627 = vld [vmem:[%s1525 + $0x328] sm:$0xff]
    %v1628 = vld [vmem:[%s1525 + $0x330] sm:$0xff]
    %v1629 = vld [vmem:[%s1525 + $0x338] sm:$0xff]
    %v1630 = vld [vmem:[%s1525 + $0x340] sm:$0xff]
    %v1631 = vld [vmem:[%s1525 + $0x348] sm:$0xff]
    %v1632 = vld [vmem:[%s1525 + $0x350] sm:$0xff]
    %v1633 = vld [vmem:[%s1525 + $0x358] sm:$0xff]
    %v1634 = vld [vmem:[%s1525 + $0x360] sm:$0xff]
    %v1635 = vld [vmem:[%s1525 + $0x368] sm:$0xff]
    %v1636 = vld [vmem:[%s1525 + $0x370] sm:$0xff]
    %v1637 = vld [vmem:[%s1525 + $0x378] sm:$0xff]
    %v1638 = vld [vmem:[%s1525 + $0x380] sm:$0xff]
    %v1639 = vld [vmem:[%s1525 + $0x388] sm:$0xff]
    %v1640 = vld [vmem:[%s1525 + $0x390] sm:$0xff]
    %v1641 = vld [vmem:[%s1525 + $0x398] sm:$0xff]
    %v1642 = vld [vmem:[%s1525 + $0x3a0] sm:$0xff]
    %v1643 = vld [vmem:[%s1525 + $0x3a8] sm:$0xff]
    %v1644 = vld [vmem:[%s1525 + $0x3b0] sm:$0xff]
    %v1645 = vld [vmem:[%s1525 + $0x3b8] sm:$0xff]
    %v1646 = vld [vmem:[%s1525 + $0x3c0] sm:$0xff]
    %v1647 = vld [vmem:[%s1525 + $0x3c8] sm:$0xff]
    %v1648 = vld [vmem:[%s1525 + $0x3d0] sm:$0xff]
    %v1649 = vld [vmem:[%s1525 + $0x3d8] sm:$0xff]
    %v1650 = vld [vmem:[%s1525 + $0x3e0] sm:$0xff]
    %v1651 = vld [vmem:[%s1525 + $0x3e8] sm:$0xff]
    %v1652 = vld [vmem:[%s1525 + $0x3f0] sm:$0xff]
    %v1653 = vld [vmem:[%s1525 + $0x3f8] sm:$0xff]
    %v1654 = vld [vmem:[%s1525 + $0x400] sm:$0xff]
    %v1655 = vld [vmem:[%s1525 + $0x408] sm:$0xff]
    %v1656 = vld [vmem:[%s1525 + $0x410] sm:$0xff]
    %v1657 = vld [vmem:[%s1525 + $0x418] sm:$0xff]
    %v1658 = vld [vmem:[%s1525 + $0x420] sm:$0xff]
    %v1659 = vld [vmem:[%s1525 + $0x428] sm:$0xff]
    %v1660 = vld [vmem:[%s1525 + $0x430] sm:$0xff]
    %v1661 = vld [vmem:[%s1525 + $0x438] sm:$0xff]
    %v1662 = vld [vmem:[%s1525 + $0x440] sm:$0xff]
    %v1663 = vld [vmem:[%s1525 + $0x448] sm:$0xff]
    %v1664 = vld [vmem:[%s1525 + $0x450] sm:$0xff]
    %v1665 = vld [vmem:[%s1525 + $0x458] sm:$0xff]
    %v1666 = vld [vmem:[%s1525 + $0x460] sm:$0xff]
    %v1667 = vld [vmem:[%s1525 + $0x468] sm:$0xff]
    %v1668 = vld [vmem:[%s1525 + $0x470] sm:$0xff]
    %v1669 = vld [vmem:[%s1525 + $0x478] sm:$0xff]
    %v1670 = vld [vmem:[%s1525 + $0x480] sm:$0xff]
    %v1671 = vld [vmem:[%s1525 + $0x488] sm:$0xff]
    %v1672 = vld [vmem:[%s1525 + $0x490] sm:$0xff]
    %v1673 = vld [vmem:[%s1525 + $0x498] sm:$0xff]
    %v1674 = vld [vmem:[%s1525 + $0x4a0] sm:$0xff]
    %v1675 = vld [vmem:[%s1525 + $0x4a8] sm:$0xff]
    %v1676 = vld [vmem:[%s1525 + $0x4b0] sm:$0xff]
    %v1677 = vld [vmem:[%s1525 + $0x4b8] sm:$0xff]
    %v1678 = vld [vmem:[%s1525 + $0x4c0] sm:$0xff]
    %v1679 = vld [vmem:[%s1525 + $0x4c8] sm:$0xff]
    %v1680 = vld [vmem:[%s1525 + $0x4d0] sm:$0xff]
    %v1681 = vld [vmem:[%s1525 + $0x4d8] sm:$0xff]
    %v1682 = vld [vmem:[%s1525 + $0x4e0] sm:$0xff]
    %v1683 = vld [vmem:[%s1525 + $0x4e8] sm:$0xff]
    %v1684 = vld [vmem:[%s1525 + $0x4f0] sm:$0xff]
    %v1685 = vld [vmem:[%s1525 + $0x4f8] sm:$0xff]
    %v1686 = vld [vmem:[%s1525 + $0x500] sm:$0xff]
    %v1687 = vld [vmem:[%s1525 + $0x508] sm:$0xff]
    %v1688 = vld [vmem:[%s1525 + $0x510] sm:$0xff]
    %v1689 = vld [vmem:[%s1525 + $0x518] sm:$0xff]
    %v1690 = vld [vmem:[%s1525 + $0x520] sm:$0xff]
    %v1691 = vld [vmem:[%s1525 + $0x528] sm:$0xff]
    %v1692 = vld [vmem:[%s1525 + $0x530] sm:$0xff]
    %v1693 = vld [vmem:[%s1525 + $0x538] sm:$0xff]
    %v1694 = vld [vmem:[%s1525 + $0x540] sm:$0xff]
    %v1695 = vld [vmem:[%s1525 + $0x548] sm:$0xff]
    %v1696 = vld [vmem:[%s1525 + $0x550] sm:$0xff]
    %v1697 = vld [vmem:[%s1525 + $0x558] sm:$0xff]
    %v1698 = vld [vmem:[%s1525 + $0x560] sm:$0xff]
    %v1699 = vld [vmem:[%s1525 + $0x568] sm:$0xff]
    %v1700 = vld [vmem:[%s1525 + $0x570] sm:$0xff]
    %v1701 = vld [vmem:[%s1525 + $0x578] sm:$0xff]
    %v1702 = vld [vmem:[%s1525 + $0x580] sm:$0xff]
    %v1703 = vld [vmem:[%s1525 + $0x588] sm:$0xff]
    %v1704 = vld [vmem:[%s1525 + $0x590] sm:$0xff]
    %v1705 = vld [vmem:[%s1525 + $0x598] sm:$0xff]
    %v1706 = vld [vmem:[%s1525 + $0x5a0] sm:$0xff]
    %v1707 = vld [vmem:[%s1525 + $0x5a8] sm:$0xff]
    %v1708 = vld [vmem:[%s1525 + $0x5b0] sm:$0xff]
    %v1709 = vld [vmem:[%s1525 + $0x5b8] sm:$0xff]
    %v1710 = vld [vmem:[%s1525 + $0x5c0] sm:$0xff]
    %v1711 = vld [vmem:[%s1525 + $0x5c8] sm:$0xff]
    %v1712 = vld [vmem:[%s1525 + $0x5d0] sm:$0xff]
    %v1713 = vld [vmem:[%s1525 + $0x5d8] sm:$0xff]
    %v1714 = vld [vmem:[%s1525 + $0x5e0] sm:$0xff]
    %v1715 = vld [vmem:[%s1525 + $0x5e8] sm:$0xff]
    %v1716 = vld [vmem:[%s1525 + $0x5f0] sm:$0xff]
    %v1717 = vld [vmem:[%s1525 + $0x5f8] sm:$0xff]
    %v1718 = vcombine.low %v50, %v49
    %v1719 = vcombine.low %v51, %v58
    %v1721 = vunpack.c.l.s4 1983009808
    %v1722 = vunpack.c.0.s8 %v1721
    %v1723 = vlaneseq
    %v1724 = vshrl.u32 %v1723, 7
    %v1725 = vsub.s32 %v1722, %v1724
    %v1726 = vrot.slane %v1718, %v1725
    %v1728 = vunpack.c.l.s4 1983009808
    %v1729 = vunpack.c.0.s8 %v1728
    %v1730 = vlaneseq
    %v1731 = vshrl.u32 %v1730, 7
    %v1732 = vsub.s32 %v1729, %v1731
    %v1733 = vrot.slane %v1719, %v1732
    %v1734 = vcombine.low %v1726, %v1733
    %v1735 = vcombine.low %v66, %v74
    %v1736 = vcombine.low %v73, %v75
    %v1738 = vunpack.c.l.s4 1983009808
    %v1739 = vunpack.c.0.s8 %v1738
    %v1740 = vlaneseq
    %v1741 = vshrl.u32 %v1740, 7
    %v1742 = vsub.s32 %v1739, %v1741
    %v1743 = vrot.slane %v1735, %v1742
    %v1745 = vunpack.c.l.s4 1983009808
    %v1746 = vunpack.c.0.s8 %v1745
    %v1747 = vlaneseq
    %v1748 = vshrl.u32 %v1747, 7
    %v1749 = vsub.s32 %v1746, %v1748
    %v1750 = vrot.slane %v1736, %v1749
    %v1751 = vcombine.low %v1743, %v1750
    %v1753 = vunpack.c.l.s4 1983009808
    %v1754 = vunpack.c.0.s8 %v1753
    %v1755 = vlaneseq
    %v1756 = vshrl.u32 %v1755, 7
    %v1757 = vsub.s32 %v1754, %v1756
    %v1758 = vrot.slane %v82, %v1757
    %1762 = vmatprep.subr.mxu0 %v1707
    %1763 = vmatpush1.msra.mxu0 %v1706
    %1764 = vmatprep.subr.mxu0 %v1695
    %1765 = vmatpush1.msra.mxu0 %v1694
    %1766 = vmatprep.subr.mxu0 %v1683
    %1767 = vmatpush1.msra.mxu0 %v1682
    %1768 = vmatprep.subr.mxu0 %v1671
    %1769 = vmatpush1.msra.mxu0 %v1670
    %1770 = vmatprep.subr.mxu0 %v1659
    %1771 = vmatpush1.msra.mxu0 %v1658
    %1772 = vmatprep.subr.mxu0 %v1647
    %1773 = vmatpush1.msra.mxu0 %v1646
    %1774 = vmatprep.subr.mxu0 %v1635
    %1775 = vmatpush1.msra.mxu0 %v1634
    %1776 = vmatprep.subr.mxu0 %v1623
    %1777 = vmatpush1.msra.mxu0 %v1622
    %1778 = vmatprep.subr.mxu0 %v1611
    %1779 = vmatpush1.msra.mxu0 %v1610
    %1780 = vmatprep.subr.mxu0 %v1599
    %1781 = vmatpush1.msra.mxu0 %v1598
    %1782 = vmatprep.subr.mxu0 %v1587
    %1783 = vmatpush1.msra.mxu0 %v1586
    %1784 = vmatprep.subr.mxu0 %v1575
    %1785 = vmatpush1.msra.mxu0 %v1574
    %1786 = vmatprep.subr.mxu0 %v1563
    %1787 = vmatpush1.msra.mxu0 %v1562
    %1788 = vmatprep.subr.mxu0 %v1551
    %1789 = vmatpush1.msra.mxu0 %v1550
    %1790 = vmatprep.subr.mxu0 %v1539
    %1791 = vmatpush1.msra.mxu0 %v1538
    %1792 = vmatprep.subr.mxu0 %v1527
    %1793 = vmatpush1.msra.mxu0 %v1526
    %1794 = vmatprep.subr.mxu0 0.0
    %1795 = vmatpush2.msra.mxu0 0.0
    %1796 = vmatprep.subr.mxu0 0.0
    %1797 = vmatpush2.msra.mxu0 0.0
    %1798 = vmatprep.subr.mxu0 0.0
    %1799 = vmatpush2.msra.mxu0 0.0
    %1800 = vmatprep.subr.mxu0 0.0
    %1801 = vmatpush2.msra.mxu0 0.0
    %1802 = vmatprep.subr.mxu0 0.0
    %1803 = vmatpush2.msra.mxu0 0.0
    %1804 = vmatprep.subr.mxu0 0.0
    %1805 = vmatpush2.msra.mxu0 0.0
    %1806 = vmatprep.subr.mxu0 0.0
    %1807 = vmatpush2.msra.mxu0 0.0
    %1808 = vmatprep.subr.mxu0 0.0
    %1809 = vmatpush2.msra.mxu0 0.0
    %1810 = vmatprep.subr.mxu0 0.0
    %1811 = vmatpush2.msra.mxu0 0.0
    %1812 = vmatprep.subr.mxu0 0.0
    %1813 = vmatpush2.msra.mxu0 0.0
    %1814 = vmatprep.subr.mxu0 0.0
    %1815 = vmatpush2.msra.mxu0 0.0
    %1816 = vmatprep.subr.mxu0 0.0
    %1817 = vmatpush2.msra.mxu0 0.0
    %1818 = vmatprep.subr.mxu0 0.0
    %1819 = vmatpush2.msra.mxu0 0.0
    %1820 = vmatprep.subr.mxu0 0.0
    %1821 = vmatpush2.msra.mxu0 0.0
    %1822 = vmatprep.subr.mxu0 0.0
    %1823 = vmatpush2.msra.mxu0 0.0
    %1824 = vmatprep.subr.mxu0 0.0
    %1825 = vmatpush2.msra.mxu0 0.0
    %1826 = vmatprep.mubr.f32.mxu0 0.0
    %1827 = vmatmul.mubr.f32.gmra.mxu0 %v1734
    %v1828 = vpop.f32.mrf.mxu0
    %v1829 = vadd.f32 0.0, %v1828
    %v1830 = vpop.f32.mrf.mxu0
    %v1831 = vadd.f32 0.0, %v1830
    %1832 = vmatprep.mubr.f32.mxu0 0.0
    %1833 = vmatmul.mubr.f32.gmra.mxu0 %v1751
    %v1834 = vpop.f32.mrf.mxu0
    %v1835 = vadd.f32 0.0, %v1834
    %v1836 = vpop.f32.mrf.mxu0
    %v1837 = vadd.f32 0.0, %v1836
    %1838 = vmatprep.mubr.f32.mxu0 0.0
    %1839 = vmatmul.mubr.f32.gmra.mxu0 %v1758
    %v1840 = vpop.f32.mrf.mxu0
    %v1841 = vadd.f32 0.0, %v1840
    %v1842 = vpop.f32.mrf.mxu0
    %v1843 = vadd.f32 0.0, %v1842
    %1844 = vdwg.mxu0
    %1845 = vmatprep.subr.mxu0 %v1709
    %1846 = vmatpush1.msra.mxu0 %v1708
    %1847 = vmatprep.subr.mxu0 %v1697
    %1848 = vmatpush1.msra.mxu0 %v1696
    %1849 = vmatprep.subr.mxu0 %v1685
    %1850 = vmatpush1.msra.mxu0 %v1684
    %1851 = vmatprep.subr.mxu0 %v1673
    %1852 = vmatpush1.msra.mxu0 %v1672
    %1853 = vmatprep.subr.mxu0 %v1661
    %1854 = vmatpush1.msra.mxu0 %v1660
    %1855 = vmatprep.subr.mxu0 %v1649
    %1856 = vmatpush1.msra.mxu0 %v1648
    %1857 = vmatprep.subr.mxu0 %v1637
    %1858 = vmatpush1.msra.mxu0 %v1636
    %1859 = vmatprep.subr.mxu0 %v1625
    %1860 = vmatpush1.msra.mxu0 %v1624
    %1861 = vmatprep.subr.mxu0 %v1613
    %1862 = vmatpush1.msra.mxu0 %v1612
    %1863 = vmatprep.subr.mxu0 %v1601
    %1864 = vmatpush1.msra.mxu0 %v1600
    %1865 = vmatprep.subr.mxu0 %v1589
    %1866 = vmatpush1.msra.mxu0 %v1588
    %1867 = vmatprep.subr.mxu0 %v1577
    %1868 = vmatpush1.msra.mxu0 %v1576
    %1869 = vmatprep.subr.mxu0 %v1565
    %1870 = vmatpush1.msra.mxu0 %v1564
    %1871 = vmatprep.subr.mxu0 %v1553
    %1872 = vmatpush1.msra.mxu0 %v1552
    %1873 = vmatprep.subr.mxu0 %v1541
    %1874 = vmatpush1.msra.mxu0 %v1540
    %1875 = vmatprep.subr.mxu0 %v1529
    %1876 = vmatpush1.msra.mxu0 %v1528
    %1877 = vmatprep.subr.mxu0 0.0
    %1878 = vmatpush2.msra.mxu0 0.0
    %1879 = vmatprep.subr.mxu0 0.0
    %1880 = vmatpush2.msra.mxu0 0.0
    %1881 = vmatprep.subr.mxu0 0.0
    %1882 = vmatpush2.msra.mxu0 0.0
    %1883 = vmatprep.subr.mxu0 0.0
    %1884 = vmatpush2.msra.mxu0 0.0
    %1885 = vmatprep.subr.mxu0 0.0
    %1886 = vmatpush2.msra.mxu0 0.0
    %1887 = vmatprep.subr.mxu0 0.0
    %1888 = vmatpush2.msra.mxu0 0.0
    %1889 = vmatprep.subr.mxu0 0.0
    %1890 = vmatpush2.msra.mxu0 0.0
    %1891 = vmatprep.subr.mxu0 0.0
    %1892 = vmatpush2.msra.mxu0 0.0
    %1893 = vmatprep.subr.mxu0 0.0
    %1894 = vmatpush2.msra.mxu0 0.0
    %1895 = vmatprep.subr.mxu0 0.0
    %1896 = vmatpush2.msra.mxu0 0.0
    %1897 = vmatprep.subr.mxu0 0.0
    %1898 = vmatpush2.msra.mxu0 0.0
    %1899 = vmatprep.subr.mxu0 0.0
    %1900 = vmatpush2.msra.mxu0 0.0
    %1901 = vmatprep.subr.mxu0 0.0
    %1902 = vmatpush2.msra.mxu0 0.0
    %1903 = vmatprep.subr.mxu0 0.0
    %1904 = vmatpush2.msra.mxu0 0.0
    %1905 = vmatprep.subr.mxu0 0.0
    %1906 = vmatpush2.msra.mxu0 0.0
    %1907 = vmatprep.subr.mxu0 0.0
    %1908 = vmatpush2.msra.mxu0 0.0
    %1909 = vmatprep.mubr.f32.mxu0 0.0
    %1910 = vmatmul.mubr.f32.gmra.mxu0 %v1734
    %v1911 = vpop.f32.mrf.mxu0
    %v1912 = vadd.f32 0.0, %v1911
    %v1913 = vpop.f32.mrf.mxu0
    %v1914 = vadd.f32 0.0, %v1913
    %1915 = vmatprep.mubr.f32.mxu0 0.0
    %1916 = vmatmul.mubr.f32.gmra.mxu0 %v1751
    %v1917 = vpop.f32.mrf.mxu0
    %v1918 = vadd.f32 0.0, %v1917
    %v1919 = vpop.f32.mrf.mxu0
    %v1920 = vadd.f32 0.0, %v1919
    %1921 = vmatprep.mubr.f32.mxu0 0.0
    %1922 = vmatmul.mubr.f32.gmra.mxu0 %v1758
    %v1923 = vpop.f32.mrf.mxu0
    %v1924 = vadd.f32 0.0, %v1923
    %v1925 = vpop.f32.mrf.mxu0
    %v1926 = vadd.f32 0.0, %v1925
    %1927 = vdwg.mxu0
    %1928 = vmatprep.subr.mxu0 %v1711
    %1929 = vmatpush1.msra.mxu0 %v1710
    %1930 = vmatprep.subr.mxu0 %v1699
    %1931 = vmatpush1.msra.mxu0 %v1698
    %1932 = vmatprep.subr.mxu0 %v1687
    %1933 = vmatpush1.msra.mxu0 %v1686
    %1934 = vmatprep.subr.mxu0 %v1675
    %1935 = vmatpush1.msra.mxu0 %v1674
    %1936 = vmatprep.subr.mxu0 %v1663
    %1937 = vmatpush1.msra.mxu0 %v1662
    %1938 = vmatprep.subr.mxu0 %v1651
    %1939 = vmatpush1.msra.mxu0 %v1650
    %1940 = vmatprep.subr.mxu0 %v1639
    %1941 = vmatpush1.msra.mxu0 %v1638
    %1942 = vmatprep.subr.mxu0 %v1627
    %1943 = vmatpush1.msra.mxu0 %v1626
    %1944 = vmatprep.subr.mxu0 %v1615
    %1945 = vmatpush1.msra.mxu0 %v1614
    %1946 = vmatprep.subr.mxu0 %v1603
    %1947 = vmatpush1.msra.mxu0 %v1602
    %1948 = vmatprep.subr.mxu0 %v1591
    %1949 = vmatpush1.msra.mxu0 %v1590
    %1950 = vmatprep.subr.mxu0 %v1579
    %1951 = vmatpush1.msra.mxu0 %v1578
    %1952 = vmatprep.subr.mxu0 %v1567
    %1953 = vmatpush1.msra.mxu0 %v1566
    %1954 = vmatprep.subr.mxu0 %v1555
    %1955 = vmatpush1.msra.mxu0 %v1554
    %1956 = vmatprep.subr.mxu0 %v1543
    %1957 = vmatpush1.msra.mxu0 %v1542
    %1958 = vmatprep.subr.mxu0 %v1531
    %1959 = vmatpush1.msra.mxu0 %v1530
    %1960 = vmatprep.subr.mxu0 0.0
    %1961 = vmatpush2.msra.mxu0 0.0
    %1962 = vmatprep.subr.mxu0 0.0
    %1963 = vmatpush2.msra.mxu0 0.0
    %1964 = vmatprep.subr.mxu0 0.0
    %1965 = vmatpush2.msra.mxu0 0.0
    %1966 = vmatprep.subr.mxu0 0.0
    %1967 = vmatpush2.msra.mxu0 0.0
    %1968 = vmatprep.subr.mxu0 0.0
    %1969 = vmatpush2.msra.mxu0 0.0
    %1970 = vmatprep.subr.mxu0 0.0
    %1971 = vmatpush2.msra.mxu0 0.0
    %1972 = vmatprep.subr.mxu0 0.0
    %1973 = vmatpush2.msra.mxu0 0.0
    %1974 = vmatprep.subr.mxu0 0.0
    %1975 = vmatpush2.msra.mxu0 0.0
    %1976 = vmatprep.subr.mxu0 0.0
    %1977 = vmatpush2.msra.mxu0 0.0
    %1978 = vmatprep.subr.mxu0 0.0
    %1979 = vmatpush2.msra.mxu0 0.0
    %1980 = vmatprep.subr.mxu0 0.0
    %1981 = vmatpush2.msra.mxu0 0.0
    %1982 = vmatprep.subr.mxu0 0.0
    %1983 = vmatpush2.msra.mxu0 0.0
    %1984 = vmatprep.subr.mxu0 0.0
    %1985 = vmatpush2.msra.mxu0 0.0
    %1986 = vmatprep.subr.mxu0 0.0
    %1987 = vmatpush2.msra.mxu0 0.0
    %1988 = vmatprep.subr.mxu0 0.0
    %1989 = vmatpush2.msra.mxu0 0.0
    %1990 = vmatprep.subr.mxu0 0.0
    %1991 = vmatpush2.msra.mxu0 0.0
    %1992 = vmatprep.mubr.f32.mxu0 0.0
    %1993 = vmatmul.mubr.f32.gmra.mxu0 %v1734
    %v1994 = vpop.f32.mrf.mxu0
    %v1995 = vadd.f32 0.0, %v1994
    %v1996 = vpop.f32.mrf.mxu0
    %v1997 = vadd.f32 0.0, %v1996
    %1998 = vmatprep.mubr.f32.mxu0 0.0
    %1999 = vmatmul.mubr.f32.gmra.mxu0 %v1751
    %v2000 = vpop.f32.mrf.mxu0
    %v2001 = vadd.f32 0.0, %v2000
    %v2002 = vpop.f32.mrf.mxu0
    %v2003 = vadd.f32 0.0, %v2002
    %2004 = vmatprep.mubr.f32.mxu0 0.0
    %2005 = vmatmul.mubr.f32.gmra.mxu0 %v1758
    %v2006 = vpop.f32.mrf.mxu0
    %v2007 = vadd.f32 0.0, %v2006
    %v2008 = vpop.f32.mrf.mxu0
    %v2009 = vadd.f32 0.0, %v2008
    %2010 = vdwg.mxu0
    %2011 = vmatprep.subr.mxu0 %v1713
    %2012 = vmatpush1.msra.mxu0 %v1712
    %2013 = vmatprep.subr.mxu0 %v1701
    %2014 = vmatpush1.msra.mxu0 %v1700
    %2015 = vmatprep.subr.mxu0 %v1689
    %2016 = vmatpush1.msra.mxu0 %v1688
    %2017 = vmatprep.subr.mxu0 %v1677
    %2018 = vmatpush1.msra.mxu0 %v1676
    %2019 = vmatprep.subr.mxu0 %v1665
    %2020 = vmatpush1.msra.mxu0 %v1664
    %2021 = vmatprep.subr.mxu0 %v1653
    %2022 = vmatpush1.msra.mxu0 %v1652
    %2023 = vmatprep.subr.mxu0 %v1641
    %2024 = vmatpush1.msra.mxu0 %v1640
    %2025 = vmatprep.subr.mxu0 %v1629
    %2026 = vmatpush1.msra.mxu0 %v1628
    %2027 = vmatprep.subr.mxu0 %v1617
    %2028 = vmatpush1.msra.mxu0 %v1616
    %2029 = vmatprep.subr.mxu0 %v1605
    %2030 = vmatpush1.msra.mxu0 %v1604
    %2031 = vmatprep.subr.mxu0 %v1593
    %2032 = vmatpush1.msra.mxu0 %v1592
    %2033 = vmatprep.subr.mxu0 %v1581
    %2034 = vmatpush1.msra.mxu0 %v1580
    %2035 = vmatprep.subr.mxu0 %v1569
    %2036 = vmatpush1.msra.mxu0 %v1568
    %2037 = vmatprep.subr.mxu0 %v1557
    %2038 = vmatpush1.msra.mxu0 %v1556
    %2039 = vmatprep.subr.mxu0 %v1545
    %2040 = vmatpush1.msra.mxu0 %v1544
    %2041 = vmatprep.subr.mxu0 %v1533
    %2042 = vmatpush1.msra.mxu0 %v1532
    %2043 = vmatprep.subr.mxu0 0.0
    %2044 = vmatpush2.msra.mxu0 0.0
    %2045 = vmatprep.subr.mxu0 0.0
    %2046 = vmatpush2.msra.mxu0 0.0
    %2047 = vmatprep.subr.mxu0 0.0
    %2048 = vmatpush2.msra.mxu0 0.0
    %2049 = vmatprep.subr.mxu0 0.0
    %2050 = vmatpush2.msra.mxu0 0.0
    %2051 = vmatprep.subr.mxu0 0.0
    %2052 = vmatpush2.msra.mxu0 0.0
    %2053 = vmatprep.subr.mxu0 0.0
    %2054 = vmatpush2.msra.mxu0 0.0
    %2055 = vmatprep.subr.mxu0 0.0
    %2056 = vmatpush2.msra.mxu0 0.0
    %2057 = vmatprep.subr.mxu0 0.0
    %2058 = vmatpush2.msra.mxu0 0.0
    %2059 = vmatprep.subr.mxu0 0.0
    %2060 = vmatpush2.msra.mxu0 0.0
    %2061 = vmatprep.subr.mxu0 0.0
    %2062 = vmatpush2.msra.mxu0 0.0
    %2063 = vmatprep.subr.mxu0 0.0
    %2064 = vmatpush2.msra.mxu0 0.0
    %2065 = vmatprep.subr.mxu0 0.0
    %2066 = vmatpush2.msra.mxu0 0.0
    %2067 = vmatprep.subr.mxu0 0.0
    %2068 = vmatpush2.msra.mxu0 0.0
    %2069 = vmatprep.subr.mxu0 0.0
    %2070 = vmatpush2.msra.mxu0 0.0
    %2071 = vmatprep.subr.mxu0 0.0
    %2072 = vmatpush2.msra.mxu0 0.0
    %2073 = vmatprep.subr.mxu0 0.0
    %2074 = vmatpush2.msra.mxu0 0.0
    %2075 = vmatprep.mubr.f32.mxu0 0.0
    %2076 = vmatmul.mubr.f32.gmra.mxu0 %v1734
    %v2077 = vpop.f32.mrf.mxu0
    %v2078 = vadd.f32 0.0, %v2077
    %v2079 = vpop.f32.mrf.mxu0
    %v2080 = vadd.f32 0.0, %v2079
    %2081 = vmatprep.mubr.f32.mxu0 0.0
    %2082 = vmatmul.mubr.f32.gmra.mxu0 %v1751
    %v2083 = vpop.f32.mrf.mxu0
    %v2084 = vadd.f32 0.0, %v2083
    %v2085 = vpop.f32.mrf.mxu0
    %v2086 = vadd.f32 0.0, %v2085
    %2087 = vmatprep.mubr.f32.mxu0 0.0
    %2088 = vmatmul.mubr.f32.gmra.mxu0 %v1758
    %v2089 = vpop.f32.mrf.mxu0
    %v2090 = vadd.f32 0.0, %v2089
    %v2091 = vpop.f32.mrf.mxu0
    %v2092 = vadd.f32 0.0, %v2091
    %2093 = vdwg.mxu0
    %2094 = vmatprep.subr.mxu0 %v1715
    %2095 = vmatpush1.msra.mxu0 %v1714
    %2096 = vmatprep.subr.mxu0 %v1703
    %2097 = vmatpush1.msra.mxu0 %v1702
    %2098 = vmatprep.subr.mxu0 %v1691
    %2099 = vmatpush1.msra.mxu0 %v1690
    %2100 = vmatprep.subr.mxu0 %v1679
    %2101 = vmatpush1.msra.mxu0 %v1678
    %2102 = vmatprep.subr.mxu0 %v1667
    %2103 = vmatpush1.msra.mxu0 %v1666
    %2104 = vmatprep.subr.mxu0 %v1655
    %2105 = vmatpush1.msra.mxu0 %v1654
    %2106 = vmatprep.subr.mxu0 %v1643
    %2107 = vmatpush1.msra.mxu0 %v1642
    %2108 = vmatprep.subr.mxu0 %v1631
    %2109 = vmatpush1.msra.mxu0 %v1630
    %2110 = vmatprep.subr.mxu0 %v1619
    %2111 = vmatpush1.msra.mxu0 %v1618
    %2112 = vmatprep.subr.mxu0 %v1607
    %2113 = vmatpush1.msra.mxu0 %v1606
    %2114 = vmatprep.subr.mxu0 %v1595
    %2115 = vmatpush1.msra.mxu0 %v1594
    %2116 = vmatprep.subr.mxu0 %v1583
    %2117 = vmatpush1.msra.mxu0 %v1582
    %2118 = vmatprep.subr.mxu0 %v1571
    %2119 = vmatpush1.msra.mxu0 %v1570
    %2120 = vmatprep.subr.mxu0 %v1559
    %2121 = vmatpush1.msra.mxu0 %v1558
    %2122 = vmatprep.subr.mxu0 %v1547
    %2123 = vmatpush1.msra.mxu0 %v1546
    %2124 = vmatprep.subr.mxu0 %v1535
    %2125 = vmatpush1.msra.mxu0 %v1534
    %2126 = vmatprep.subr.mxu0 0.0
    %2127 = vmatpush2.msra.mxu0 0.0
    %2128 = vmatprep.subr.mxu0 0.0
    %2129 = vmatpush2.msra.mxu0 0.0
    %2130 = vmatprep.subr.mxu0 0.0
    %2131 = vmatpush2.msra.mxu0 0.0
    %2132 = vmatprep.subr.mxu0 0.0
    %2133 = vmatpush2.msra.mxu0 0.0
    %2134 = vmatprep.subr.mxu0 0.0
    %2135 = vmatpush2.msra.mxu0 0.0
    %2136 = vmatprep.subr.mxu0 0.0
    %2137 = vmatpush2.msra.mxu0 0.0
    %2138 = vmatprep.subr.mxu0 0.0
    %2139 = vmatpush2.msra.mxu0 0.0
    %2140 = vmatprep.subr.mxu0 0.0
    %2141 = vmatpush2.msra.mxu0 0.0
    %2142 = vmatprep.subr.mxu0 0.0
    %2143 = vmatpush2.msra.mxu0 0.0
    %2144 = vmatprep.subr.mxu0 0.0
    %2145 = vmatpush2.msra.mxu0 0.0
    %2146 = vmatprep.subr.mxu0 0.0
    %2147 = vmatpush2.msra.mxu0 0.0
    %2148 = vmatprep.subr.mxu0 0.0
    %2149 = vmatpush2.msra.mxu0 0.0
    %2150 = vmatprep.subr.mxu0 0.0
    %2151 = vmatpush2.msra.mxu0 0.0
    %2152 = vmatprep.subr.mxu0 0.0
    %2153 = vmatpush2.msra.mxu0 0.0
    %2154 = vmatprep.subr.mxu0 0.0
    %2155 = vmatpush2.msra.mxu0 0.0
    %2156 = vmatprep.subr.mxu0 0.0
    %2157 = vmatpush2.msra.mxu0 0.0
    %2158 = vmatprep.mubr.f32.mxu0 0.0
    %2159 = vmatmul.mubr.f32.gmra.mxu0 %v1734
    %v2160 = vpop.f32.mrf.mxu0
    %v2161 = vadd.f32 0.0, %v2160
    %v2162 = vpop.f32.mrf.mxu0
    %v2163 = vadd.f32 0.0, %v2162
    %2164 = vmatprep.mubr.f32.mxu0 0.0
    %2165 = vmatmul.mubr.f32.gmra.mxu0 %v1751
    %v2166 = vpop.f32.mrf.mxu0
    %v2167 = vadd.f32 0.0, %v2166
    %v2168 = vpop.f32.mrf.mxu0
    %v2169 = vadd.f32 0.0, %v2168
    %2170 = vmatprep.mubr.f32.mxu0 0.0
    %2171 = vmatmul.mubr.f32.gmra.mxu0 %v1758
    %v2172 = vpop.f32.mrf.mxu0
    %v2173 = vadd.f32 0.0, %v2172
    %v2174 = vpop.f32.mrf.mxu0
    %v2175 = vadd.f32 0.0, %v2174
    %2176 = vdwg.mxu0
    %2177 = vmatprep.subr.mxu0 %v1717
    %2178 = vmatpush1.msra.mxu0 %v1716
    %2179 = vmatprep.subr.mxu0 %v1705
    %2180 = vmatpush1.msra.mxu0 %v1704
    %2181 = vmatprep.subr.mxu0 %v1693
    %2182 = vmatpush1.msra.mxu0 %v1692
    %2183 = vmatprep.subr.mxu0 %v1681
    %2184 = vmatpush1.msra.mxu0 %v1680
    %2185 = vmatprep.subr.mxu0 %v1669
    %2186 = vmatpush1.msra.mxu0 %v1668
    %2187 = vmatprep.subr.mxu0 %v1657
    %2188 = vmatpush1.msra.mxu0 %v1656
    %2189 = vmatprep.subr.mxu0 %v1645
    %2190 = vmatpush1.msra.mxu0 %v1644
    %2191 = vmatprep.subr.mxu0 %v1633
    %2192 = vmatpush1.msra.mxu0 %v1632
    %2193 = vmatprep.subr.mxu0 %v1621
    %2194 = vmatpush1.msra.mxu0 %v1620
    %2195 = vmatprep.subr.mxu0 %v1609
    %2196 = vmatpush1.msra.mxu0 %v1608
    %2197 = vmatprep.subr.mxu0 %v1597
    %2198 = vmatpush1.msra.mxu0 %v1596
    %2199 = vmatprep.subr.mxu0 %v1585
    %2200 = vmatpush1.msra.mxu0 %v1584
    %2201 = vmatprep.subr.mxu0 %v1573
    %2202 = vmatpush1.msra.mxu0 %v1572
    %2203 = vmatprep.subr.mxu0 %v1561
    %2204 = vmatpush1.msra.mxu0 %v1560
    %2205 = vmatprep.subr.mxu0 %v1549
    %2206 = vmatpush1.msra.mxu0 %v1548
    %2207 = vmatprep.subr.mxu0 %v1537
    %2208 = vmatpush1.msra.mxu0 %v1536
    %2209 = vmatprep.subr.mxu0 0.0
    %2210 = vmatpush2.msra.mxu0 0.0
    %2211 = vmatprep.subr.mxu0 0.0
    %2212 = vmatpush2.msra.mxu0 0.0
    %2213 = vmatprep.subr.mxu0 0.0
    %2214 = vmatpush2.msra.mxu0 0.0
    %2215 = vmatprep.subr.mxu0 0.0
    %2216 = vmatpush2.msra.mxu0 0.0
    %2217 = vmatprep.subr.mxu0 0.0
    %2218 = vmatpush2.msra.mxu0 0.0
    %2219 = vmatprep.subr.mxu0 0.0
    %2220 = vmatpush2.msra.mxu0 0.0
    %2221 = vmatprep.subr.mxu0 0.0
    %2222 = vmatpush2.msra.mxu0 0.0
    %2223 = vmatprep.subr.mxu0 0.0
    %2224 = vmatpush2.msra.mxu0 0.0
    %2225 = vmatprep.subr.mxu0 0.0
    %2226 = vmatpush2.msra.mxu0 0.0
    %2227 = vmatprep.subr.mxu0 0.0
    %2228 = vmatpush2.msra.mxu0 0.0
    %2229 = vmatprep.subr.mxu0 0.0
    %2230 = vmatpush2.msra.mxu0 0.0
    %2231 = vmatprep.subr.mxu0 0.0
    %2232 = vmatpush2.msra.mxu0 0.0
    %2233 = vmatprep.subr.mxu0 0.0
    %2234 = vmatpush2.msra.mxu0 0.0
    %2235 = vmatprep.subr.mxu0 0.0
    %2236 = vmatpush2.msra.mxu0 0.0
    %2237 = vmatprep.subr.mxu0 0.0
    %2238 = vmatpush2.msra.mxu0 0.0
    %2239 = vmatprep.subr.mxu0 0.0
    %2240 = vmatpush2.msra.mxu0 0.0
    %2241 = vmatprep.mubr.f32.mxu0 0.0
    %2242 = vmatmul.mubr.f32.gmra.mxu0 %v1734
    %v2243 = vpop.f32.mrf.mxu0
    %v2244 = vadd.f32 0.0, %v2243
    %v2245 = vpop.f32.mrf.mxu0
    %v2246 = vadd.f32 0.0, %v2245
    %2247 = vmatprep.mubr.f32.mxu0 0.0
    %2248 = vmatmul.mubr.f32.gmra.mxu0 %v1751
    %v2249 = vpop.f32.mrf.mxu0
    %v2250 = vadd.f32 0.0, %v2249
    %v2251 = vpop.f32.mrf.mxu0
    %v2252 = vadd.f32 0.0, %v2251
    %2253 = vmatprep.mubr.f32.mxu0 0.0
    %2254 = vmatmul.mubr.f32.gmra.mxu0 %v1758
    %v2255 = vpop.f32.mrf.mxu0
    %v2256 = vadd.f32 0.0, %v2255
    %v2257 = vpop.f32.mrf.mxu0
    %v2258 = vadd.f32 0.0, %v2257
    %2259 = vdwg.mxu0
    %v2260 = vadd.f32 %v1094, %v1829
    %v2261 = vadd.f32 %v1096, %v1831
    %v2262 = vadd.f32 %v1177, %v1912
    %v2263 = vadd.f32 %v1179, %v1914
    %v2264 = vadd.f32 %v1260, %v1995
    %v2265 = vadd.f32 %v1262, %v1997
    %v2266 = vadd.f32 %v1343, %v2078
    %v2267 = vadd.f32 %v1345, %v2080
    %v2268 = vadd.f32 %v1426, %v2161
    %v2269 = vadd.f32 %v1428, %v2163
    %v2270 = vadd.f32 %v1509, %v2244
    %v2271 = vadd.f32 %v1511, %v2246
    %v2272 = vadd.f32 %v1100, %v1835
    %v2273 = vadd.f32 %v1102, %v1837
    %v2274 = vadd.f32 %v1183, %v1918
    %v2275 = vadd.f32 %v1185, %v1920
    %v2276 = vadd.f32 %v1266, %v2001
    %v2277 = vadd.f32 %v1268, %v2003
    %v2278 = vadd.f32 %v1349, %v2084
    %v2279 = vadd.f32 %v1351, %v2086
    %v2280 = vadd.f32 %v1432, %v2167
    %v2281 = vadd.f32 %v1434, %v2169
    %v2282 = vadd.f32 %v1515, %v2250
    %v2283 = vadd.f32 %v1517, %v2252
    %v2284 = vadd.f32 %v1106, %v1841
    %v2285 = vadd.f32 %v1108, %v1843
    %v2286 = vadd.f32 %v1189, %v1924
    %v2287 = vadd.f32 %v1191, %v1926
    %v2288 = vadd.f32 %v1272, %v2007
    %v2289 = vadd.f32 %v1274, %v2009
    %v2290 = vadd.f32 %v1355, %v2090
    %v2291 = vadd.f32 %v1357, %v2092
    %v2292 = vadd.f32 %v1438, %v2173
    %v2293 = vadd.f32 %v1440, %v2175
    %v2294 = vadd.f32 %v1521, %v2256
    %v2295 = vadd.f32 %v1523, %v2258
    %v2296 = vld [vmem:[%s2] sm:$0xff]
    %v2297 = vld [vmem:[%s2 + $0x8] sm:$0xf]
    %v2300 = vlaneseq
    %v2301 = vshrl.u32 %v2300, 7
    %v2302 = vsub.s32 0, %v2301
    %v2303 = vrot.slane %v2296, %v2302
    %v2304 = vlaneseq
    %v2305 = vshrl.u32 %v2304, 7
    %v2306 = vsub.s32 1, %v2305
    %v2307 = vrot.slane %v2296, %v2306
    %v2308 = vlaneseq
    %v2309 = vshrl.u32 %v2308, 7
    %v2310 = vsub.s32 2, %v2309
    %v2311 = vrot.slane %v2296, %v2310
    %v2312 = vlaneseq
    %v2313 = vshrl.u32 %v2312, 7
    %v2314 = vsub.s32 3, %v2313
    %v2315 = vrot.slane %v2296, %v2314
    %v2316 = vlaneseq
    %v2317 = vshrl.u32 %v2316, 7
    %v2318 = vsub.s32 4, %v2317
    %v2319 = vrot.slane %v2296, %v2318
    %v2320 = vlaneseq
    %v2321 = vshrl.u32 %v2320, 7
    %v2322 = vsub.s32 5, %v2321
    %v2323 = vrot.slane %v2296, %v2322
    %v2324 = vlaneseq
    %v2325 = vshrl.u32 %v2324, 7
    %v2326 = vsub.s32 6, %v2325
    %v2327 = vrot.slane %v2296, %v2326
    %v2328 = vlaneseq
    %v2329 = vshrl.u32 %v2328, 7
    %v2330 = vsub.s32 7, %v2329
    %v2331 = vrot.slane %v2296, %v2330
    %v2332 = vlaneseq
    %v2333 = vshrl.u32 %v2332, 7
    %v2334 = vsub.s32 0, %v2333
    %v2335 = vrot.slane %v2297, %v2334
    %v2336 = vlaneseq
    %v2337 = vshrl.u32 %v2336, 7
    %v2338 = vsub.s32 1, %v2337
    %v2339 = vrot.slane %v2297, %v2338
    %v2340 = vlaneseq
    %v2341 = vshrl.u32 %v2340, 7
    %v2342 = vsub.s32 2, %v2341
    %v2343 = vrot.slane %v2297, %v2342
    %v2344 = vlaneseq
    %v2345 = vshrl.u32 %v2344, 7
    %v2346 = vsub.s32 3, %v2345
    %v2347 = vrot.slane %v2297, %v2346
    %v2360 = vadd.f32 %v2260, %v2303
    %v2361 = vadd.f32 %v2261, %v2307
    %v2362 = vadd.f32 %v2262, %v2311
    %v2363 = vadd.f32 %v2263, %v2315
    %v2364 = vadd.f32 %v2264, %v2319
    %v2365 = vadd.f32 %v2265, %v2323
    %v2366 = vadd.f32 %v2266, %v2327
    %v2367 = vadd.f32 %v2267, %v2331
    %v2368 = vadd.f32 %v2268, %v2335
    %v2369 = vadd.f32 %v2269, %v2339
    %v2370 = vadd.f32 %v2270, %v2343
    %v2371 = vadd.f32 %v2271, %v2347
    %v2372 = vadd.f32 %v2272, %v2303
    %v2373 = vadd.f32 %v2273, %v2307
    %v2374 = vadd.f32 %v2274, %v2311
    %v2375 = vadd.f32 %v2275, %v2315
    %v2376 = vadd.f32 %v2276, %v2319
    %v2377 = vadd.f32 %v2277, %v2323
    %v2378 = vadd.f32 %v2278, %v2327
    %v2379 = vadd.f32 %v2279, %v2331
    %v2380 = vadd.f32 %v2280, %v2335
    %v2381 = vadd.f32 %v2281, %v2339
    %v2382 = vadd.f32 %v2282, %v2343
    %v2383 = vadd.f32 %v2283, %v2347
    %v2384 = vadd.f32 %v2284, %v2303
    %v2385 = vadd.f32 %v2285, %v2307
    %v2386 = vadd.f32 %v2286, %v2311
    %v2387 = vadd.f32 %v2287, %v2315
    %v2388 = vadd.f32 %v2288, %v2319
    %v2389 = vadd.f32 %v2289, %v2323
    %v2390 = vadd.f32 %v2290, %v2327
    %v2391 = vadd.f32 %v2291, %v2331
    %v2392 = vadd.f32 %v2292, %v2335
    %v2393 = vadd.f32 %v2293, %v2339
    %v2394 = vadd.f32 %v2294, %v2343
    %v2395 = vadd.f32 %v2295, %v2347
    %v2396 = vmax.f32 %v2360, 0.0
    %v2397 = vmax.f32 %v2361, 0.0
    %v2398 = vmax.f32 %v2362, 0.0
    %v2399 = vmax.f32 %v2363, 0.0
    %v2400 = vmax.f32 %v2364, 0.0
    %v2401 = vmax.f32 %v2365, 0.0
    %v2402 = vmax.f32 %v2366, 0.0
    %v2403 = vmax.f32 %v2367, 0.0
    %v2404 = vmax.f32 %v2368, 0.0
    %v2405 = vmax.f32 %v2369, 0.0
    %v2406 = vmax.f32 %v2370, 0.0
    %v2407 = vmax.f32 %v2371, 0.0
    %v2408 = vmax.f32 %v2372, 0.0
    %v2409 = vmax.f32 %v2373, 0.0
    %v2410 = vmax.f32 %v2374, 0.0
    %v2411 = vmax.f32 %v2375, 0.0
    %v2412 = vmax.f32 %v2376, 0.0
    %v2413 = vmax.f32 %v2377, 0.0
    %v2414 = vmax.f32 %v2378, 0.0
    %v2415 = vmax.f32 %v2379, 0.0
    %v2416 = vmax.f32 %v2380, 0.0
    %v2417 = vmax.f32 %v2381, 0.0
    %v2418 = vmax.f32 %v2382, 0.0
    %v2419 = vmax.f32 %v2383, 0.0
    %v2420 = vmax.f32 %v2384, 0.0
    %v2421 = vmax.f32 %v2385, 0.0
    %v2422 = vmax.f32 %v2386, 0.0
    %v2423 = vmax.f32 %v2387, 0.0
    %v2424 = vmax.f32 %v2388, 0.0
    %v2425 = vmax.f32 %v2389, 0.0
    %v2426 = vmax.f32 %v2390, 0.0
    %v2427 = vmax.f32 %v2391, 0.0
    %v2428 = vmax.f32 %v2392, 0.0
    %v2429 = vmax.f32 %v2393, 0.0
    %v2430 = vmax.f32 %v2394, 0.0
    %v2431 = vmax.f32 %v2395, 0.0
    %vm2468 = vcmask 1040384
    %v2469 = vrot.slane %v2396, 7
    %v2470 = vrot.slane %v2397, 7
    %v2471 = vrot.slane %v2398, 7
    %v2472 = vrot.slane %v2399, 7
    %v2473 = vrot.slane %v2400, 7
    %v2474 = vrot.slane %v2401, 7
    %v2475 = vrot.slane %v2402, 7
    %v2476 = vrot.slane %v2403, 7
    %v2477 = vrot.slane %v2404, 7
    %v2478 = vrot.slane %v2405, 7
    %v2479 = vrot.slane %v2406, 7
    %v2480 = vrot.slane %v2407, 7
    %v2481 = vrot.slane %v2408, 7
    %v2482 = vsel %vm2468, %v2469, %v2481
    %v2483 = vrot.slane %v2409, 7
    %v2484 = vsel %vm2468, %v2470, %v2483
    %v2485 = vrot.slane %v2410, 7
    %v2486 = vsel %vm2468, %v2471, %v2485
    %v2487 = vrot.slane %v2411, 7
    %v2488 = vsel %vm2468, %v2472, %v2487
    %v2489 = vrot.slane %v2412, 7
    %v2490 = vsel %vm2468, %v2473, %v2489
    %v2491 = vrot.slane %v2413, 7
    %v2492 = vsel %vm2468, %v2474, %v2491
    %v2493 = vrot.slane %v2414, 7
    %v2494 = vsel %vm2468, %v2475, %v2493
    %v2495 = vrot.slane %v2415, 7
    %v2496 = vsel %vm2468, %v2476, %v2495
    %v2497 = vrot.slane %v2416, 7
    %v2498 = vsel %vm2468, %v2477, %v2497
    %v2499 = vrot.slane %v2417, 7
    %v2500 = vsel %vm2468, %v2478, %v2499
    %v2501 = vrot.slane %v2418, 7
    %v2502 = vsel %vm2468, %v2479, %v2501
    %v2503 = vrot.slane %v2419, 7
    %v2504 = vsel %vm2468, %v2480, %v2503
    %v2505 = vrot.slane %v2420, 7
    %v2506 = vsel %vm2468, %v2481, %v2505
    %v2507 = vrot.slane %v2421, 7
    %v2508 = vsel %vm2468, %v2483, %v2507
    %v2509 = vrot.slane %v2422, 7
    %v2510 = vsel %vm2468, %v2485, %v2509
    %v2511 = vrot.slane %v2423, 7
    %v2512 = vsel %vm2468, %v2487, %v2511
    %v2513 = vrot.slane %v2424, 7
    %v2514 = vsel %vm2468, %v2489, %v2513
    %v2515 = vrot.slane %v2425, 7
    %v2516 = vsel %vm2468, %v2491, %v2515
    %v2517 = vrot.slane %v2426, 7
    %v2518 = vsel %vm2468, %v2493, %v2517
    %v2519 = vrot.slane %v2427, 7
    %v2520 = vsel %vm2468, %v2495, %v2519
    %v2521 = vrot.slane %v2428, 7
    %v2522 = vsel %vm2468, %v2497, %v2521
    %v2523 = vrot.slane %v2429, 7
    %v2524 = vsel %vm2468, %v2499, %v2523
    %v2525 = vrot.slane %v2430, 7
    %v2526 = vsel %vm2468, %v2501, %v2525
    %v2527 = vrot.slane %v2431, 7
    %v2528 = vsel %vm2468, %v2503, %v2527
    %2565 = vst [vmem:[#allocation2] sm:$0xfe] %v2469
    %2566 = vst [vmem:[#allocation2 + $0x8] sm:$0xfe] %v2470
    %2567 = vst [vmem:[#allocation2 + $0x10] sm:$0xfe] %v2471
    %2568 = vst [vmem:[#allocation2 + $0x18] sm:$0xfe] %v2472
    %2569 = vst [vmem:[#allocation2 + $0x20] sm:$0xfe] %v2473
    %2570 = vst [vmem:[#allocation2 + $0x28] sm:$0xfe] %v2474
    %2571 = vst [vmem:[#allocation2 + $0x30] sm:$0xfe] %v2475
    %2572 = vst [vmem:[#allocation2 + $0x38] sm:$0xfe] %v2476
    %2573 = vst [vmem:[#allocation2 + $0x40] sm:$0xfe] %v2477
    %2574 = vst [vmem:[#allocation2 + $0x48] sm:$0xfe] %v2478
    %2575 = vst [vmem:[#allocation2 + $0x50] sm:$0xfe] %v2479
    %2576 = vst [vmem:[#allocation2 + $0x58] sm:$0xfe] %v2480
    %2577 = vst [vmem:[#allocation2 + $0x60] sm:$0xff] %v2482
    %2578 = vst [vmem:[#allocation2 + $0x68] sm:$0xff] %v2484
    %2579 = vst [vmem:[#allocation2 + $0x70] sm:$0xff] %v2486
    %2580 = vst [vmem:[#allocation2 + $0x78] sm:$0xff] %v2488
    %2581 = vst [vmem:[#allocation2 + $0x80] sm:$0xff] %v2490
    %2582 = vst [vmem:[#allocation2 + $0x88] sm:$0xff] %v2492
    %2583 = vst [vmem:[#allocation2 + $0x90] sm:$0xff] %v2494
    %2584 = vst [vmem:[#allocation2 + $0x98] sm:$0xff] %v2496
    %2585 = vst [vmem:[#allocation2 + $0xa0] sm:$0xff] %v2498
    %2586 = vst [vmem:[#allocation2 + $0xa8] sm:$0xff] %v2500
    %2587 = vst [vmem:[#allocation2 + $0xb0] sm:$0xff] %v2502
    %2588 = vst [vmem:[#allocation2 + $0xb8] sm:$0xff] %v2504
    %2589 = vst [vmem:[#allocation2 + $0xc0] sm:$0x7] %v2506
    %2590 = vst [vmem:[#allocation2 + $0xc8] sm:$0x7] %v2508
    %2591 = vst [vmem:[#allocation2 + $0xd0] sm:$0x7] %v2510
    %2592 = vst [vmem:[#allocation2 + $0xd8] sm:$0x7] %v2512
    %2593 = vst [vmem:[#allocation2 + $0xe0] sm:$0x7] %v2514
    %2594 = vst [vmem:[#allocation2 + $0xe8] sm:$0x7] %v2516
    %2595 = vst [vmem:[#allocation2 + $0xf0] sm:$0x7] %v2518
    %2596 = vst [vmem:[#allocation2 + $0xf8] sm:$0x7] %v2520
    %2597 = vst [vmem:[#allocation2 + $0x100] sm:$0x7] %v2522
    %2598 = vst [vmem:[#allocation2 + $0x108] sm:$0x7] %v2524
    %2599 = vst [vmem:[#allocation2 + $0x110] sm:$0x7] %v2526
    %2600 = vst [vmem:[#allocation2 + $0x118] sm:$0x7] %v2528
    %2601 = vst [vmem:[#allocation2] ss:$8 sm:$0xf] 0.0
    %2602 = vst [vmem:[#allocation2] ss:$8 sm:$0xf0] 0.0
    %v2603 = vlaneseq
    %vm2604 = vcmp.ge.s32.totalorder %v2603, 0
    %vm2605 = vcmp.lt.s32.totalorder %v2603, 512
    %vm2606 = vmand %vm2604, %vm2605
    %s2607 = scalar_lea.vmem [#allocation2], 64
    %2608 = vst.msk [vmem:[%s2607] ss:$8 sm:$0xf] %vm2606, 0.0
    %2609 = vst.msk [vmem:[%s2607] ss:$8 sm:$0x0] %vm2606, 0.0
    %s2610 = scalar_lea.vmem [#allocation2], 97
    %2611 = vst [vmem:[%s2610] ss:$8 sm:$0xf] 0.0
    %2612 = vst [vmem:[%s2610] ss:$8 sm:$0xf0] 0.0
    %s2613 = scalar_lea.vmem [#allocation2], 161
    %2614 = vst.msk [vmem:[%s2613] ss:$8 sm:$0xf] %vm2606, 0.0
    %2615 = vst.msk [vmem:[%s2613] ss:$8 sm:$0x0] %vm2606, 0.0
    %s2616 = scalar_lea.vmem [#allocation2], 98
    %2617 = vst [vmem:[%s2616] ss:$8 sm:$0xf] 0.0
    %2618 = vst [vmem:[%s2616] ss:$8 sm:$0xf0] 0.0
    %s2619 = scalar_lea.vmem [#allocation2], 162
    %2620 = vst.msk [vmem:[%s2619] ss:$8 sm:$0xf] %vm2606, 0.0
    %2621 = vst.msk [vmem:[%s2619] ss:$8 sm:$0x0] %vm2606, 0.0
    %s2622 = scalar_lea.vmem [#allocation2], 195
    %2623 = vst [vmem:[%s2622] ss:$8 sm:$0xf] 0.0
    %2624 = vst [vmem:[%s2622] ss:$8 sm:$0xf0] 0.0
    %s2625 = scalar_lea.vmem [#allocation2], 259
    %2626 = vst.msk [vmem:[%s2625] ss:$8 sm:$0xf] %vm2606, 0.0
    %2627 = vst.msk [vmem:[%s2625] ss:$8 sm:$0x0] %vm2606, 0.0
    %v2628 = vld [vmem:[#allocation2] sm:$0xff]
    %v2629 = vld [vmem:[#allocation2 + $0x8] sm:$0xff]
    %v2630 = vld [vmem:[#allocation2 + $0x10] sm:$0xff]
    %v2631 = vld [vmem:[#allocation2 + $0x18] sm:$0xff]
    %v2632 = vld [vmem:[#allocation2 + $0x20] sm:$0xff]
    %v2633 = vld [vmem:[#allocation2 + $0x28] sm:$0xff]
    %v2634 = vld [vmem:[#allocation2 + $0x30] sm:$0xff]
    %v2635 = vld [vmem:[#allocation2 + $0x60] sm:$0xff]
    %v2636 = vld [vmem:[#allocation2 + $0x68] sm:$0xff]
    %v2637 = vld [vmem:[#allocation2 + $0x70] sm:$0xff]
    %v2638 = vld [vmem:[#allocation2 + $0x78] sm:$0xff]
    %v2639 = vld [vmem:[#allocation2 + $0x80] sm:$0xff]
    %v2640 = vld [vmem:[#allocation2 + $0x88] sm:$0xff]
    %v2641 = vld [vmem:[#allocation2 + $0x90] sm:$0xff]
    %v2642 = vld [vmem:[#allocation2 + $0xc0] sm:$0xf]
    %v2643 = vld [vmem:[#allocation2 + $0xc8] sm:$0xf]
    %v2644 = vld [vmem:[#allocation2 + $0xd0] sm:$0xf]
    %v2645 = vld [vmem:[#allocation2 + $0xd8] sm:$0xf]
    %v2646 = vld [vmem:[#allocation2 + $0xe0] sm:$0xf]
    %v2647 = vld [vmem:[#allocation2 + $0xe8] sm:$0xf]
    %v2648 = vld [vmem:[#allocation2 + $0xf0] sm:$0xf]
    %v2649 = vld [vmem:[%s3] sm:$0xff]
    %v2650 = vld [vmem:[%s3 + $0x8] sm:$0xff]
    %v2651 = vld [vmem:[%s3 + $0x10] sm:$0xff]
    %v2652 = vld [vmem:[%s3 + $0x18] sm:$0xff]
    %v2653 = vld [vmem:[%s3 + $0x20] sm:$0xff]
    %v2654 = vld [vmem:[%s3 + $0x28] sm:$0xff]
    %v2655 = vld [vmem:[%s3 + $0x30] sm:$0xff]
    %v2656 = vld [vmem:[%s3 + $0x38] sm:$0xff]
    %v2657 = vld [vmem:[%s3 + $0x40] sm:$0xff]
    %v2658 = vld [vmem:[%s3 + $0x48] sm:$0xff]
    %v2659 = vld [vmem:[%s3 + $0x50] sm:$0xff]
    %v2660 = vld [vmem:[%s3 + $0x58] sm:$0xff]
    %v2661 = vld [vmem:[%s3 + $0x60] sm:$0xff]
    %v2662 = vld [vmem:[%s3 + $0x68] sm:$0xff]
    %v2663 = vld [vmem:[%s3 + $0x70] sm:$0xff]
    %v2664 = vld [vmem:[%s3 + $0x78] sm:$0xff]
    %v2665 = vld [vmem:[%s3 + $0x80] sm:$0xff]
    %v2666 = vld [vmem:[%s3 + $0x88] sm:$0xff]
    %v2667 = vld [vmem:[%s3 + $0x90] sm:$0xff]
    %v2668 = vld [vmem:[%s3 + $0x98] sm:$0xff]
    %v2669 = vld [vmem:[%s3 + $0xa0] sm:$0xff]
    %v2670 = vld [vmem:[%s3 + $0xa8] sm:$0xff]
    %v2671 = vld [vmem:[%s3 + $0xb0] sm:$0xff]
    %v2672 = vld [vmem:[%s3 + $0xb8] sm:$0xff]
    %v2673 = vld [vmem:[%s3 + $0xc0] sm:$0xff]
    %v2674 = vld [vmem:[%s3 + $0xc8] sm:$0xff]
    %v2675 = vld [vmem:[%s3 + $0xd0] sm:$0xff]
    %v2676 = vld [vmem:[%s3 + $0xd8] sm:$0xff]
    %v2677 = vld [vmem:[%s3 + $0xe0] sm:$0xff]
    %v2678 = vld [vmem:[%s3 + $0xe8] sm:$0xff]
    %v2679 = vld [vmem:[%s3 + $0xf0] sm:$0xff]
    %v2680 = vld [vmem:[%s3 + $0xf8] sm:$0xff]
    %v2681 = vld [vmem:[%s3 + $0x100] sm:$0xff]
    %v2682 = vld [vmem:[%s3 + $0x108] sm:$0xff]
    %v2683 = vld [vmem:[%s3 + $0x110] sm:$0xff]
    %v2684 = vld [vmem:[%s3 + $0x118] sm:$0xff]
    %v2685 = vld [vmem:[%s3 + $0x120] sm:$0xff]
    %v2686 = vld [vmem:[%s3 + $0x128] sm:$0xff]
    %v2687 = vld [vmem:[%s3 + $0x130] sm:$0xff]
    %v2688 = vld [vmem:[%s3 + $0x138] sm:$0xff]
    %v2689 = vld [vmem:[%s3 + $0x140] sm:$0xff]
    %v2690 = vld [vmem:[%s3 + $0x148] sm:$0xff]
    %v2691 = vld [vmem:[%s3 + $0x150] sm:$0xff]
    %v2692 = vld [vmem:[%s3 + $0x158] sm:$0xff]
    %v2693 = vld [vmem:[%s3 + $0x160] sm:$0xff]
    %v2694 = vld [vmem:[%s3 + $0x168] sm:$0xff]
    %v2695 = vld [vmem:[%s3 + $0x170] sm:$0xff]
    %v2696 = vld [vmem:[%s3 + $0x178] sm:$0xff]
    %v2697 = vld [vmem:[%s3 + $0x180] sm:$0xff]
    %v2698 = vld [vmem:[%s3 + $0x188] sm:$0xff]
    %v2699 = vld [vmem:[%s3 + $0x190] sm:$0xff]
    %v2700 = vld [vmem:[%s3 + $0x198] sm:$0xff]
    %v2701 = vld [vmem:[%s3 + $0x1a0] sm:$0xff]
    %v2702 = vld [vmem:[%s3 + $0x1a8] sm:$0xff]
    %v2703 = vld [vmem:[%s3 + $0x1b0] sm:$0xff]
    %v2704 = vld [vmem:[%s3 + $0x1b8] sm:$0xff]
    %v2705 = vld [vmem:[%s3 + $0x1c0] sm:$0xff]
    %v2706 = vld [vmem:[%s3 + $0x1c8] sm:$0xff]
    %v2707 = vld [vmem:[%s3 + $0x1d0] sm:$0xff]
    %v2708 = vld [vmem:[%s3 + $0x1d8] sm:$0xff]
    %v2709 = vld [vmem:[%s3 + $0x1e0] sm:$0xff]
    %v2710 = vld [vmem:[%s3 + $0x1e8] sm:$0xff]
    %v2711 = vld [vmem:[%s3 + $0x1f0] sm:$0xff]
    %v2712 = vld [vmem:[%s3 + $0x1f8] sm:$0xff]
    %v2713 = vld [vmem:[%s3 + $0x200] sm:$0xff]
    %v2714 = vld [vmem:[%s3 + $0x208] sm:$0xff]
    %v2715 = vld [vmem:[%s3 + $0x210] sm:$0xff]
    %v2716 = vld [vmem:[%s3 + $0x218] sm:$0xff]
    %v2717 = vld [vmem:[%s3 + $0x220] sm:$0xff]
    %v2718 = vld [vmem:[%s3 + $0x228] sm:$0xff]
    %v2719 = vld [vmem:[%s3 + $0x230] sm:$0xff]
    %v2720 = vld [vmem:[%s3 + $0x238] sm:$0xff]
    %v2721 = vld [vmem:[%s3 + $0x240] sm:$0xff]
    %v2722 = vld [vmem:[%s3 + $0x248] sm:$0xff]
    %v2723 = vld [vmem:[%s3 + $0x250] sm:$0xff]
    %v2724 = vld [vmem:[%s3 + $0x258] sm:$0xff]
    %v2725 = vld [vmem:[%s3 + $0x260] sm:$0xff]
    %v2726 = vld [vmem:[%s3 + $0x268] sm:$0xff]
    %v2727 = vld [vmem:[%s3 + $0x270] sm:$0xff]
    %v2728 = vld [vmem:[%s3 + $0x278] sm:$0xff]
    %v2729 = vld [vmem:[%s3 + $0x280] sm:$0xff]
    %v2730 = vld [vmem:[%s3 + $0x288] sm:$0xff]
    %v2731 = vld [vmem:[%s3 + $0x290] sm:$0xff]
    %v2732 = vld [vmem:[%s3 + $0x298] sm:$0xff]
    %v2733 = vld [vmem:[%s3 + $0x2a0] sm:$0xff]
    %v2734 = vld [vmem:[%s3 + $0x2a8] sm:$0xff]
    %v2735 = vld [vmem:[%s3 + $0x2b0] sm:$0xff]
    %v2736 = vld [vmem:[%s3 + $0x2b8] sm:$0xff]
    %v2737 = vld [vmem:[%s3 + $0x2c0] sm:$0xff]
    %v2738 = vld [vmem:[%s3 + $0x2c8] sm:$0xff]
    %v2739 = vld [vmem:[%s3 + $0x2d0] sm:$0xff]
    %v2740 = vld [vmem:[%s3 + $0x2d8] sm:$0xff]
    %v2741 = vld [vmem:[%s3 + $0x2e0] sm:$0xff]
    %v2742 = vld [vmem:[%s3 + $0x2e8] sm:$0xff]
    %v2743 = vld [vmem:[%s3 + $0x2f0] sm:$0xff]
    %v2744 = vld [vmem:[%s3 + $0x2f8] sm:$0xff]
    %v2745 = vld [vmem:[%s3 + $0x300] sm:$0xff]
    %v2746 = vld [vmem:[%s3 + $0x308] sm:$0xff]
    %v2747 = vld [vmem:[%s3 + $0x310] sm:$0xff]
    %v2748 = vld [vmem:[%s3 + $0x318] sm:$0xff]
    %v2749 = vld [vmem:[%s3 + $0x320] sm:$0xff]
    %v2750 = vld [vmem:[%s3 + $0x328] sm:$0xff]
    %v2751 = vld [vmem:[%s3 + $0x330] sm:$0xff]
    %v2752 = vld [vmem:[%s3 + $0x338] sm:$0xff]
    %v2753 = vld [vmem:[%s3 + $0x340] sm:$0xff]
    %v2754 = vld [vmem:[%s3 + $0x348] sm:$0xff]
    %v2755 = vld [vmem:[%s3 + $0x350] sm:$0xff]
    %v2756 = vld [vmem:[%s3 + $0x358] sm:$0xff]
    %v2757 = vld [vmem:[%s3 + $0x360] sm:$0xff]
    %v2758 = vld [vmem:[%s3 + $0x368] sm:$0xff]
    %v2759 = vld [vmem:[%s3 + $0x370] sm:$0xff]
    %v2760 = vld [vmem:[%s3 + $0x378] sm:$0xff]
    %v2761 = vld [vmem:[%s3 + $0x380] sm:$0xff]
    %v2762 = vld [vmem:[%s3 + $0x388] sm:$0xff]
    %v2763 = vld [vmem:[%s3 + $0x390] sm:$0xff]
    %v2764 = vld [vmem:[%s3 + $0x398] sm:$0xff]
    %v2765 = vld [vmem:[%s3 + $0x3a0] sm:$0xff]
    %v2766 = vld [vmem:[%s3 + $0x3a8] sm:$0xff]
    %v2767 = vld [vmem:[%s3 + $0x3b0] sm:$0xff]
    %v2768 = vld [vmem:[%s3 + $0x3b8] sm:$0xff]
    %v2769 = vld [vmem:[%s3 + $0x3c0] sm:$0xff]
    %v2770 = vld [vmem:[%s3 + $0x3c8] sm:$0xff]
    %v2771 = vld [vmem:[%s3 + $0x3d0] sm:$0xff]
    %v2772 = vld [vmem:[%s3 + $0x3d8] sm:$0xff]
    %v2773 = vld [vmem:[%s3 + $0x3e0] sm:$0xff]
    %v2774 = vld [vmem:[%s3 + $0x3e8] sm:$0xff]
    %v2775 = vld [vmem:[%s3 + $0x3f0] sm:$0xff]
    %v2776 = vld [vmem:[%s3 + $0x3f8] sm:$0xff]
    %v2777 = vld [vmem:[%s3 + $0x400] sm:$0xff]
    %v2778 = vld [vmem:[%s3 + $0x408] sm:$0xff]
    %v2779 = vld [vmem:[%s3 + $0x410] sm:$0xff]
    %v2780 = vld [vmem:[%s3 + $0x418] sm:$0xff]
    %v2781 = vld [vmem:[%s3 + $0x420] sm:$0xff]
    %v2782 = vld [vmem:[%s3 + $0x428] sm:$0xff]
    %v2783 = vld [vmem:[%s3 + $0x430] sm:$0xff]
    %v2784 = vld [vmem:[%s3 + $0x438] sm:$0xff]
    %v2785 = vld [vmem:[%s3 + $0x440] sm:$0xff]
    %v2786 = vld [vmem:[%s3 + $0x448] sm:$0xff]
    %v2787 = vld [vmem:[%s3 + $0x450] sm:$0xff]
    %v2788 = vld [vmem:[%s3 + $0x458] sm:$0xff]
    %v2789 = vld [vmem:[%s3 + $0x460] sm:$0xff]
    %v2790 = vld [vmem:[%s3 + $0x468] sm:$0xff]
    %v2791 = vld [vmem:[%s3 + $0x470] sm:$0xff]
    %v2792 = vld [vmem:[%s3 + $0x478] sm:$0xff]
    %v2793 = vld [vmem:[%s3 + $0x480] sm:$0xff]
    %v2794 = vld [vmem:[%s3 + $0x488] sm:$0xff]
    %v2795 = vld [vmem:[%s3 + $0x490] sm:$0xff]
    %v2796 = vld [vmem:[%s3 + $0x498] sm:$0xff]
    %v2797 = vld [vmem:[%s3 + $0x4a0] sm:$0xff]
    %v2798 = vld [vmem:[%s3 + $0x4a8] sm:$0xff]
    %v2799 = vld [vmem:[%s3 + $0x4b0] sm:$0xff]
    %v2800 = vld [vmem:[%s3 + $0x4b8] sm:$0xff]
    %v2801 = vld [vmem:[%s3 + $0x4c0] sm:$0xff]
    %v2802 = vld [vmem:[%s3 + $0x4c8] sm:$0xff]
    %v2803 = vld [vmem:[%s3 + $0x4d0] sm:$0xff]
    %v2804 = vld [vmem:[%s3 + $0x4d8] sm:$0xff]
    %v2805 = vld [vmem:[%s3 + $0x4e0] sm:$0xff]
    %v2806 = vld [vmem:[%s3 + $0x4e8] sm:$0xff]
    %v2807 = vld [vmem:[%s3 + $0x4f0] sm:$0xff]
    %v2808 = vld [vmem:[%s3 + $0x4f8] sm:$0xff]
    %v2809 = vld [vmem:[%s3 + $0x500] sm:$0xff]
    %v2810 = vld [vmem:[%s3 + $0x508] sm:$0xff]
    %v2811 = vld [vmem:[%s3 + $0x510] sm:$0xff]
    %v2812 = vld [vmem:[%s3 + $0x518] sm:$0xff]
    %v2813 = vld [vmem:[%s3 + $0x520] sm:$0xff]
    %v2814 = vld [vmem:[%s3 + $0x528] sm:$0xff]
    %v2815 = vld [vmem:[%s3 + $0x530] sm:$0xff]
    %v2816 = vld [vmem:[%s3 + $0x538] sm:$0xff]
    %v2817 = vld [vmem:[%s3 + $0x540] sm:$0xff]
    %v2818 = vld [vmem:[%s3 + $0x548] sm:$0xff]
    %v2819 = vld [vmem:[%s3 + $0x550] sm:$0xff]
    %v2820 = vld [vmem:[%s3 + $0x558] sm:$0xff]
    %v2821 = vld [vmem:[%s3 + $0x560] sm:$0xff]
    %v2822 = vld [vmem:[%s3 + $0x568] sm:$0xff]
    %v2823 = vld [vmem:[%s3 + $0x570] sm:$0xff]
    %v2824 = vld [vmem:[%s3 + $0x578] sm:$0xff]
    %v2825 = vld [vmem:[%s3 + $0x580] sm:$0xff]
    %v2826 = vld [vmem:[%s3 + $0x588] sm:$0xff]
    %v2827 = vld [vmem:[%s3 + $0x590] sm:$0xff]
    %v2828 = vld [vmem:[%s3 + $0x598] sm:$0xff]
    %v2829 = vld [vmem:[%s3 + $0x5a0] sm:$0xff]
    %v2830 = vld [vmem:[%s3 + $0x5a8] sm:$0xff]
    %v2831 = vld [vmem:[%s3 + $0x5b0] sm:$0xff]
    %v2832 = vld [vmem:[%s3 + $0x5b8] sm:$0xff]
    %v2833 = vld [vmem:[%s3 + $0x5c0] sm:$0xff]
    %v2834 = vld [vmem:[%s3 + $0x5c8] sm:$0xff]
    %v2835 = vld [vmem:[%s3 + $0x5d0] sm:$0xff]
    %v2836 = vld [vmem:[%s3 + $0x5d8] sm:$0xff]
    %v2837 = vld [vmem:[%s3 + $0x5e0] sm:$0xff]
    %v2838 = vld [vmem:[%s3 + $0x5e8] sm:$0xff]
    %v2839 = vld [vmem:[%s3 + $0x5f0] sm:$0xff]
    %v2840 = vld [vmem:[%s3 + $0x5f8] sm:$0xff]
    %v2841 = vld [vmem:[%s3 + $0x600] sm:$0xff]
    %v2842 = vld [vmem:[%s3 + $0x608] sm:$0xff]
    %v2843 = vld [vmem:[%s3 + $0x610] sm:$0xff]
    %v2844 = vld [vmem:[%s3 + $0x618] sm:$0xff]
    %v2845 = vld [vmem:[%s3 + $0x620] sm:$0xff]
    %v2846 = vld [vmem:[%s3 + $0x628] sm:$0xff]
    %v2847 = vld [vmem:[%s3 + $0x630] sm:$0xff]
    %v2848 = vld [vmem:[%s3 + $0x638] sm:$0xff]
    %v2849 = vld [vmem:[%s3 + $0x640] sm:$0xff]
    %v2850 = vld [vmem:[%s3 + $0x648] sm:$0xff]
    %v2851 = vld [vmem:[%s3 + $0x650] sm:$0xff]
    %v2852 = vld [vmem:[%s3 + $0x658] sm:$0xff]
    %v2853 = vld [vmem:[%s3 + $0x660] sm:$0xff]
    %v2854 = vld [vmem:[%s3 + $0x668] sm:$0xff]
    %v2855 = vld [vmem:[%s3 + $0x670] sm:$0xff]
    %v2856 = vld [vmem:[%s3 + $0x678] sm:$0xff]
    %v2857 = vld [vmem:[%s3 + $0x680] sm:$0xff]
    %v2858 = vld [vmem:[%s3 + $0x688] sm:$0xff]
    %v2859 = vld [vmem:[%s3 + $0x690] sm:$0xff]
    %v2860 = vld [vmem:[%s3 + $0x698] sm:$0xff]
    %v2861 = vld [vmem:[%s3 + $0x6a0] sm:$0xff]
    %v2862 = vld [vmem:[%s3 + $0x6a8] sm:$0xff]
    %v2863 = vld [vmem:[%s3 + $0x6b0] sm:$0xff]
    %v2864 = vld [vmem:[%s3 + $0x6b8] sm:$0xff]
    %v2865 = vld [vmem:[%s3 + $0x6c0] sm:$0xff]
    %v2866 = vld [vmem:[%s3 + $0x6c8] sm:$0xff]
    %v2867 = vld [vmem:[%s3 + $0x6d0] sm:$0xff]
    %v2868 = vld [vmem:[%s3 + $0x6d8] sm:$0xff]
    %v2869 = vld [vmem:[%s3 + $0x6e0] sm:$0xff]
    %v2870 = vld [vmem:[%s3 + $0x6e8] sm:$0xff]
    %v2871 = vld [vmem:[%s3 + $0x6f0] sm:$0xff]
    %v2872 = vld [vmem:[%s3 + $0x6f8] sm:$0xff]
    %v2873 = vld [vmem:[%s3 + $0x700] sm:$0xff]
    %v2874 = vld [vmem:[%s3 + $0x708] sm:$0xff]
    %v2875 = vld [vmem:[%s3 + $0x710] sm:$0xff]
    %v2876 = vld [vmem:[%s3 + $0x718] sm:$0xff]
    %v2877 = vld [vmem:[%s3 + $0x720] sm:$0xff]
    %v2878 = vld [vmem:[%s3 + $0x728] sm:$0xff]
    %v2879 = vld [vmem:[%s3 + $0x730] sm:$0xff]
    %v2880 = vld [vmem:[%s3 + $0x738] sm:$0xff]
    %v2881 = vld [vmem:[%s3 + $0x740] sm:$0xff]
    %v2882 = vld [vmem:[%s3 + $0x748] sm:$0xff]
    %v2883 = vld [vmem:[%s3 + $0x750] sm:$0xff]
    %v2884 = vld [vmem:[%s3 + $0x758] sm:$0xff]
    %v2885 = vld [vmem:[%s3 + $0x760] sm:$0xff]
    %v2886 = vld [vmem:[%s3 + $0x768] sm:$0xff]
    %v2887 = vld [vmem:[%s3 + $0x770] sm:$0xff]
    %v2888 = vld [vmem:[%s3 + $0x778] sm:$0xff]
    %v2889 = vld [vmem:[%s3 + $0x780] sm:$0xff]
    %v2890 = vld [vmem:[%s3 + $0x788] sm:$0xff]
    %v2891 = vld [vmem:[%s3 + $0x790] sm:$0xff]
    %v2892 = vld [vmem:[%s3 + $0x798] sm:$0xff]
    %v2893 = vld [vmem:[%s3 + $0x7a0] sm:$0xff]
    %v2894 = vld [vmem:[%s3 + $0x7a8] sm:$0xff]
    %v2895 = vld [vmem:[%s3 + $0x7b0] sm:$0xff]
    %v2896 = vld [vmem:[%s3 + $0x7b8] sm:$0xff]
    %v2897 = vld [vmem:[%s3 + $0x7c0] sm:$0xff]
    %v2898 = vld [vmem:[%s3 + $0x7c8] sm:$0xff]
    %v2899 = vld [vmem:[%s3 + $0x7d0] sm:$0xff]
    %v2900 = vld [vmem:[%s3 + $0x7d8] sm:$0xff]
    %v2901 = vld [vmem:[%s3 + $0x7e0] sm:$0xff]
    %v2902 = vld [vmem:[%s3 + $0x7e8] sm:$0xff]
    %v2903 = vld [vmem:[%s3 + $0x7f0] sm:$0xff]
    %v2904 = vld [vmem:[%s3 + $0x7f8] sm:$0xff]
    %v2905 = vld [vmem:[%s3 + $0x800] sm:$0xff]
    %v2906 = vld [vmem:[%s3 + $0x808] sm:$0xff]
    %v2907 = vld [vmem:[%s3 + $0x810] sm:$0xff]
    %v2908 = vld [vmem:[%s3 + $0x818] sm:$0xff]
    %v2909 = vld [vmem:[%s3 + $0x820] sm:$0xff]
    %v2910 = vld [vmem:[%s3 + $0x828] sm:$0xff]
    %v2911 = vld [vmem:[%s3 + $0x830] sm:$0xff]
    %v2912 = vld [vmem:[%s3 + $0x838] sm:$0xff]
    %v2913 = vld [vmem:[%s3 + $0x840] sm:$0xff]
    %v2914 = vld [vmem:[%s3 + $0x848] sm:$0xff]
    %v2915 = vld [vmem:[%s3 + $0x850] sm:$0xff]
    %v2916 = vld [vmem:[%s3 + $0x858] sm:$0xff]
    %v2917 = vld [vmem:[%s3 + $0x860] sm:$0xff]
    %v2918 = vld [vmem:[%s3 + $0x868] sm:$0xff]
    %v2919 = vld [vmem:[%s3 + $0x870] sm:$0xff]
    %v2920 = vld [vmem:[%s3 + $0x878] sm:$0xff]
    %v2921 = vld [vmem:[%s3 + $0x880] sm:$0xff]
    %v2922 = vld [vmem:[%s3 + $0x888] sm:$0xff]
    %v2923 = vld [vmem:[%s3 + $0x890] sm:$0xff]
    %v2924 = vld [vmem:[%s3 + $0x898] sm:$0xff]
    %v2925 = vld [vmem:[%s3 + $0x8a0] sm:$0xff]
    %v2926 = vld [vmem:[%s3 + $0x8a8] sm:$0xff]
    %v2927 = vld [vmem:[%s3 + $0x8b0] sm:$0xff]
    %v2928 = vld [vmem:[%s3 + $0x8b8] sm:$0xff]
    %v2929 = vld [vmem:[%s3 + $0x8c0] sm:$0xff]
    %v2930 = vld [vmem:[%s3 + $0x8c8] sm:$0xff]
    %v2931 = vld [vmem:[%s3 + $0x8d0] sm:$0xff]
    %v2932 = vld [vmem:[%s3 + $0x8d8] sm:$0xff]
    %v2933 = vld [vmem:[%s3 + $0x8e0] sm:$0xff]
    %v2934 = vld [vmem:[%s3 + $0x8e8] sm:$0xff]
    %v2935 = vld [vmem:[%s3 + $0x8f0] sm:$0xff]
    %v2936 = vld [vmem:[%s3 + $0x8f8] sm:$0xff]
    %v2937 = vld [vmem:[%s3 + $0x900] sm:$0xff]
    %v2938 = vld [vmem:[%s3 + $0x908] sm:$0xff]
    %v2939 = vld [vmem:[%s3 + $0x910] sm:$0xff]
    %v2940 = vld [vmem:[%s3 + $0x918] sm:$0xff]
    %v2941 = vld [vmem:[%s3 + $0x920] sm:$0xff]
    %v2942 = vld [vmem:[%s3 + $0x928] sm:$0xff]
    %v2943 = vld [vmem:[%s3 + $0x930] sm:$0xff]
    %v2944 = vld [vmem:[%s3 + $0x938] sm:$0xff]
    %v2945 = vld [vmem:[%s3 + $0x940] sm:$0xff]
    %v2946 = vld [vmem:[%s3 + $0x948] sm:$0xff]
    %v2947 = vld [vmem:[%s3 + $0x950] sm:$0xff]
    %v2948 = vld [vmem:[%s3 + $0x958] sm:$0xff]
    %v2949 = vld [vmem:[%s3 + $0x960] sm:$0xff]
    %v2950 = vld [vmem:[%s3 + $0x968] sm:$0xff]
    %v2951 = vld [vmem:[%s3 + $0x970] sm:$0xff]
    %v2952 = vld [vmem:[%s3 + $0x978] sm:$0xff]
    %v2953 = vld [vmem:[%s3 + $0x980] sm:$0xff]
    %v2954 = vld [vmem:[%s3 + $0x988] sm:$0xff]
    %v2955 = vld [vmem:[%s3 + $0x990] sm:$0xff]
    %v2956 = vld [vmem:[%s3 + $0x998] sm:$0xff]
    %v2957 = vld [vmem:[%s3 + $0x9a0] sm:$0xff]
    %v2958 = vld [vmem:[%s3 + $0x9a8] sm:$0xff]
    %v2959 = vld [vmem:[%s3 + $0x9b0] sm:$0xff]
    %v2960 = vld [vmem:[%s3 + $0x9b8] sm:$0xff]
    %v2961 = vld [vmem:[%s3 + $0x9c0] sm:$0xff]
    %v2962 = vld [vmem:[%s3 + $0x9c8] sm:$0xff]
    %v2963 = vld [vmem:[%s3 + $0x9d0] sm:$0xff]
    %v2964 = vld [vmem:[%s3 + $0x9d8] sm:$0xff]
    %v2965 = vld [vmem:[%s3 + $0x9e0] sm:$0xff]
    %v2966 = vld [vmem:[%s3 + $0x9e8] sm:$0xff]
    %v2967 = vld [vmem:[%s3 + $0x9f0] sm:$0xff]
    %v2968 = vld [vmem:[%s3 + $0x9f8] sm:$0xff]
    %v2969 = vld [vmem:[%s3 + $0xa00] sm:$0xff]
    %v2970 = vld [vmem:[%s3 + $0xa08] sm:$0xff]
    %v2971 = vld [vmem:[%s3 + $0xa10] sm:$0xff]
    %v2972 = vld [vmem:[%s3 + $0xa18] sm:$0xff]
    %v2973 = vld [vmem:[%s3 + $0xa20] sm:$0xff]
    %v2974 = vld [vmem:[%s3 + $0xa28] sm:$0xff]
    %v2975 = vld [vmem:[%s3 + $0xa30] sm:$0xff]
    %v2976 = vld [vmem:[%s3 + $0xa38] sm:$0xff]
    %v2977 = vld [vmem:[%s3 + $0xa40] sm:$0xff]
    %v2978 = vld [vmem:[%s3 + $0xa48] sm:$0xff]
    %v2979 = vld [vmem:[%s3 + $0xa50] sm:$0xff]
    %v2980 = vld [vmem:[%s3 + $0xa58] sm:$0xff]
    %v2981 = vld [vmem:[%s3 + $0xa60] sm:$0xff]
    %v2982 = vld [vmem:[%s3 + $0xa68] sm:$0xff]
    %v2983 = vld [vmem:[%s3 + $0xa70] sm:$0xff]
    %v2984 = vld [vmem:[%s3 + $0xa78] sm:$0xff]
    %2985 = vmatprep.subr.mxu0 %v2695
    %2986 = vmatpush1.msra.mxu0 %v2694
    %2987 = vmatprep.subr.mxu0 %v2692
    %2988 = vmatpush1.msra.mxu0 %v2691
    %2989 = vmatprep.subr.mxu0 %v2689
    %2990 = vmatpush1.msra.mxu0 %v2688
    %2991 = vmatprep.subr.mxu0 %v2686
    %2992 = vmatpush1.msra.mxu0 %v2685
    %2993 = vmatprep.subr.mxu0 %v2683
    %2994 = vmatpush1.msra.mxu0 %v2682
    %2995 = vmatprep.subr.mxu0 %v2680
    %2996 = vmatpush1.msra.mxu0 %v2679
    %2997 = vmatprep.subr.mxu0 %v2677
    %2998 = vmatpush1.msra.mxu0 %v2676
    %2999 = vmatprep.subr.mxu0 %v2674
    %3000 = vmatpush1.msra.mxu0 %v2673
    %3001 = vmatprep.subr.mxu0 %v2671
    %3002 = vmatpush1.msra.mxu0 %v2670
    %3003 = vmatprep.subr.mxu0 %v2668
    %3004 = vmatpush1.msra.mxu0 %v2667
    %3005 = vmatprep.subr.mxu0 %v2665
    %3006 = vmatpush1.msra.mxu0 %v2664
    %3007 = vmatprep.subr.mxu0 %v2662
    %3008 = vmatpush1.msra.mxu0 %v2661
    %3009 = vmatprep.subr.mxu0 %v2659
    %3010 = vmatpush1.msra.mxu0 %v2658
    %3011 = vmatprep.subr.mxu0 %v2656
    %3012 = vmatpush1.msra.mxu0 %v2655
    %3013 = vmatprep.subr.mxu0 %v2653
    %3014 = vmatpush1.msra.mxu0 %v2652
    %3015 = vmatprep.subr.mxu0 %v2650
    %3016 = vmatpush1.msra.mxu0 %v2649
    %3017 = vmatprep.subr.mxu0 %v2743
    %3018 = vmatpush2.msra.mxu0 %v2742
    %3019 = vmatprep.subr.mxu0 %v2740
    %3020 = vmatpush2.msra.mxu0 %v2739
    %3021 = vmatprep.subr.mxu0 %v2737
    %3022 = vmatpush2.msra.mxu0 %v2736
    %3023 = vmatprep.subr.mxu0 %v2734
    %3024 = vmatpush2.msra.mxu0 %v2733
    %3025 = vmatprep.subr.mxu0 %v2731
    %3026 = vmatpush2.msra.mxu0 %v2730
    %3027 = vmatprep.subr.mxu0 %v2728
    %3028 = vmatpush2.msra.mxu0 %v2727
    %3029 = vmatprep.subr.mxu0 %v2725
    %3030 = vmatpush2.msra.mxu0 %v2724
    %3031 = vmatprep.subr.mxu0 %v2722
    %3032 = vmatpush2.msra.mxu0 %v2721
    %3033 = vmatprep.subr.mxu0 %v2719
    %3034 = vmatpush2.msra.mxu0 %v2718
    %3035 = vmatprep.subr.mxu0 %v2716
    %3036 = vmatpush2.msra.mxu0 %v2715
    %3037 = vmatprep.subr.mxu0 %v2713
    %3038 = vmatpush2.msra.mxu0 %v2712
    %3039 = vmatprep.subr.mxu0 %v2710
    %3040 = vmatpush2.msra.mxu0 %v2709
    %3041 = vmatprep.subr.mxu0 %v2707
    %3042 = vmatpush2.msra.mxu0 %v2706
    %3043 = vmatprep.subr.mxu0 %v2704
    %3044 = vmatpush2.msra.mxu0 %v2703
    %3045 = vmatprep.subr.mxu0 %v2701
    %3046 = vmatpush2.msra.mxu0 %v2700
    %3047 = vmatprep.subr.mxu0 %v2698
    %3048 = vmatpush2.msra.mxu0 %v2697
    %3049 = vmatprep.mubr.f32.mxu0 %v2629
    %3050 = vmatmul.mubr.f32.gmra.mxu0 %v2628
    %v3051 = vpop.f32.mrf.mxu0
    %v3052 = vadd.f32 0.0, %v3051
    %v3053 = vpop.f32.mrf.mxu0
    %v3054 = vadd.f32 0.0, %v3053
    %3055 = vmatprep.mubr.f32.mxu0 %v2636
    %3056 = vmatmul.mubr.f32.gmra.mxu0 %v2635
    %v3057 = vpop.f32.mrf.mxu0
    %v3058 = vadd.f32 0.0, %v3057
    %v3059 = vpop.f32.mrf.mxu0
    %v3060 = vadd.f32 0.0, %v3059
    %3061 = vmatprep.mubr.f32.mxu0 %v2643
    %3062 = vmatmul.mubr.f32.gmra.mxu0 %v2642
    %v3063 = vpop.f32.mrf.mxu0
    %v3064 = vadd.f32 0.0, %v3063
    %v3065 = vpop.f32.mrf.mxu0
    %v3066 = vadd.f32 0.0, %v3065
    %3067 = vdwg.mxu0
    %3068 = vmatprep.subr.mxu0 %v2791
    %3069 = vmatpush1.msra.mxu0 %v2790
    %3070 = vmatprep.subr.mxu0 %v2788
    %3071 = vmatpush1.msra.mxu0 %v2787
    %3072 = vmatprep.subr.mxu0 %v2785
    %3073 = vmatpush1.msra.mxu0 %v2784
    %3074 = vmatprep.subr.mxu0 %v2782
    %3075 = vmatpush1.msra.mxu0 %v2781
    %3076 = vmatprep.subr.mxu0 %v2779
    %3077 = vmatpush1.msra.mxu0 %v2778
    %3078 = vmatprep.subr.mxu0 %v2776
    %3079 = vmatpush1.msra.mxu0 %v2775
    %3080 = vmatprep.subr.mxu0 %v2773
    %3081 = vmatpush1.msra.mxu0 %v2772
    %3082 = vmatprep.subr.mxu0 %v2770
    %3083 = vmatpush1.msra.mxu0 %v2769
    %3084 = vmatprep.subr.mxu0 %v2767
    %3085 = vmatpush1.msra.mxu0 %v2766
    %3086 = vmatprep.subr.mxu0 %v2764
    %3087 = vmatpush1.msra.mxu0 %v2763
    %3088 = vmatprep.subr.mxu0 %v2761
    %3089 = vmatpush1.msra.mxu0 %v2760
    %3090 = vmatprep.subr.mxu0 %v2758
    %3091 = vmatpush1.msra.mxu0 %v2757
    %3092 = vmatprep.subr.mxu0 %v2755
    %3093 = vmatpush1.msra.mxu0 %v2754
    %3094 = vmatprep.subr.mxu0 %v2752
    %3095 = vmatpush1.msra.mxu0 %v2751
    %3096 = vmatprep.subr.mxu0 %v2749
    %3097 = vmatpush1.msra.mxu0 %v2748
    %3098 = vmatprep.subr.mxu0 %v2746
    %3099 = vmatpush1.msra.mxu0 %v2745
    %3100 = vmatprep.subr.mxu0 %v2839
    %3101 = vmatpush2.msra.mxu0 %v2838
    %3102 = vmatprep.subr.mxu0 %v2836
    %3103 = vmatpush2.msra.mxu0 %v2835
    %3104 = vmatprep.subr.mxu0 %v2833
    %3105 = vmatpush2.msra.mxu0 %v2832
    %3106 = vmatprep.subr.mxu0 %v2830
    %3107 = vmatpush2.msra.mxu0 %v2829
    %3108 = vmatprep.subr.mxu0 %v2827
    %3109 = vmatpush2.msra.mxu0 %v2826
    %3110 = vmatprep.subr.mxu0 %v2824
    %3111 = vmatpush2.msra.mxu0 %v2823
    %3112 = vmatprep.subr.mxu0 %v2821
    %3113 = vmatpush2.msra.mxu0 %v2820
    %3114 = vmatprep.subr.mxu0 %v2818
    %3115 = vmatpush2.msra.mxu0 %v2817
    %3116 = vmatprep.subr.mxu0 %v2815
    %3117 = vmatpush2.msra.mxu0 %v2814
    %3118 = vmatprep.subr.mxu0 %v2812
    %3119 = vmatpush2.msra.mxu0 %v2811
    %3120 = vmatprep.subr.mxu0 %v2809
    %3121 = vmatpush2.msra.mxu0 %v2808
    %3122 = vmatprep.subr.mxu0 %v2806
    %3123 = vmatpush2.msra.mxu0 %v2805
    %3124 = vmatprep.subr.mxu0 %v2803
    %3125 = vmatpush2.msra.mxu0 %v2802
    %3126 = vmatprep.subr.mxu0 %v2800
    %3127 = vmatpush2.msra.mxu0 %v2799
    %3128 = vmatprep.subr.mxu0 %v2797
    %3129 = vmatpush2.msra.mxu0 %v2796
    %3130 = vmatprep.subr.mxu0 %v2794
    %3131 = vmatpush2.msra.mxu0 %v2793
    %3132 = vmatprep.mubr.f32.mxu0 %v2631
    %3133 = vmatmul.mubr.f32.gmra.mxu0 %v2630
    %v3134 = vpop.f32.mrf.mxu0
    %v3135 = vadd.f32 %v3052, %v3134
    %v3136 = vpop.f32.mrf.mxu0
    %v3137 = vadd.f32 %v3054, %v3136
    %3138 = vmatprep.mubr.f32.mxu0 %v2638
    %3139 = vmatmul.mubr.f32.gmra.mxu0 %v2637
    %v3140 = vpop.f32.mrf.mxu0
    %v3141 = vadd.f32 %v3058, %v3140
    %v3142 = vpop.f32.mrf.mxu0
    %v3143 = vadd.f32 %v3060, %v3142
    %3144 = vmatprep.mubr.f32.mxu0 %v2645
    %3145 = vmatmul.mubr.f32.gmra.mxu0 %v2644
    %v3146 = vpop.f32.mrf.mxu0
    %v3147 = vadd.f32 %v3064, %v3146
    %v3148 = vpop.f32.mrf.mxu0
    %v3149 = vadd.f32 %v3066, %v3148
    %3150 = vdwg.mxu0
    %3151 = vmatprep.subr.mxu0 %v2887
    %3152 = vmatpush1.msra.mxu0 %v2886
    %3153 = vmatprep.subr.mxu0 %v2884
    %3154 = vmatpush1.msra.mxu0 %v2883
    %3155 = vmatprep.subr.mxu0 %v2881
    %3156 = vmatpush1.msra.mxu0 %v2880
    %3157 = vmatprep.subr.mxu0 %v2878
    %3158 = vmatpush1.msra.mxu0 %v2877
    %3159 = vmatprep.subr.mxu0 %v2875
    %3160 = vmatpush1.msra.mxu0 %v2874
    %3161 = vmatprep.subr.mxu0 %v2872
    %3162 = vmatpush1.msra.mxu0 %v2871
    %3163 = vmatprep.subr.mxu0 %v2869
    %3164 = vmatpush1.msra.mxu0 %v2868
    %3165 = vmatprep.subr.mxu0 %v2866
    %3166 = vmatpush1.msra.mxu0 %v2865
    %3167 = vmatprep.subr.mxu0 %v2863
    %3168 = vmatpush1.msra.mxu0 %v2862
    %3169 = vmatprep.subr.mxu0 %v2860
    %3170 = vmatpush1.msra.mxu0 %v2859
    %3171 = vmatprep.subr.mxu0 %v2857
    %3172 = vmatpush1.msra.mxu0 %v2856
    %3173 = vmatprep.subr.mxu0 %v2854
    %3174 = vmatpush1.msra.mxu0 %v2853
    %3175 = vmatprep.subr.mxu0 %v2851
    %3176 = vmatpush1.msra.mxu0 %v2850
    %3177 = vmatprep.subr.mxu0 %v2848
    %3178 = vmatpush1.msra.mxu0 %v2847
    %3179 = vmatprep.subr.mxu0 %v2845
    %3180 = vmatpush1.msra.mxu0 %v2844
    %3181 = vmatprep.subr.mxu0 %v2842
    %3182 = vmatpush1.msra.mxu0 %v2841
    %3183 = vmatprep.subr.mxu0 %v2935
    %3184 = vmatpush2.msra.mxu0 %v2934
    %3185 = vmatprep.subr.mxu0 %v2932
    %3186 = vmatpush2.msra.mxu0 %v2931
    %3187 = vmatprep.subr.mxu0 %v2929
    %3188 = vmatpush2.msra.mxu0 %v2928
    %3189 = vmatprep.subr.mxu0 %v2926
    %3190 = vmatpush2.msra.mxu0 %v2925
    %3191 = vmatprep.subr.mxu0 %v2923
    %3192 = vmatpush2.msra.mxu0 %v2922
    %3193 = vmatprep.subr.mxu0 %v2920
    %3194 = vmatpush2.msra.mxu0 %v2919
    %3195 = vmatprep.subr.mxu0 %v2917
    %3196 = vmatpush2.msra.mxu0 %v2916
    %3197 = vmatprep.subr.mxu0 %v2914
    %3198 = vmatpush2.msra.mxu0 %v2913
    %3199 = vmatprep.subr.mxu0 %v2911
    %3200 = vmatpush2.msra.mxu0 %v2910
    %3201 = vmatprep.subr.mxu0 %v2908
    %3202 = vmatpush2.msra.mxu0 %v2907
    %3203 = vmatprep.subr.mxu0 %v2905
    %3204 = vmatpush2.msra.mxu0 %v2904
    %3205 = vmatprep.subr.mxu0 %v2902
    %3206 = vmatpush2.msra.mxu0 %v2901
    %3207 = vmatprep.subr.mxu0 %v2899
    %3208 = vmatpush2.msra.mxu0 %v2898
    %3209 = vmatprep.subr.mxu0 %v2896
    %3210 = vmatpush2.msra.mxu0 %v2895
    %3211 = vmatprep.subr.mxu0 %v2893
    %3212 = vmatpush2.msra.mxu0 %v2892
    %3213 = vmatprep.subr.mxu0 %v2890
    %3214 = vmatpush2.msra.mxu0 %v2889
    %3215 = vmatprep.mubr.f32.mxu0 %v2633
    %3216 = vmatmul.mubr.f32.gmra.mxu0 %v2632
    %v3217 = vpop.f32.mrf.mxu0
    %v3218 = vadd.f32 %v3135, %v3217
    %v3219 = vpop.f32.mrf.mxu0
    %v3220 = vadd.f32 %v3137, %v3219
    %3221 = vmatprep.mubr.f32.mxu0 %v2640
    %3222 = vmatmul.mubr.f32.gmra.mxu0 %v2639
    %v3223 = vpop.f32.mrf.mxu0
    %v3224 = vadd.f32 %v3141, %v3223
    %v3225 = vpop.f32.mrf.mxu0
    %v3226 = vadd.f32 %v3143, %v3225
    %3227 = vmatprep.mubr.f32.mxu0 %v2647
    %3228 = vmatmul.mubr.f32.gmra.mxu0 %v2646
    %v3229 = vpop.f32.mrf.mxu0
    %v3230 = vadd.f32 %v3147, %v3229
    %v3231 = vpop.f32.mrf.mxu0
    %v3232 = vadd.f32 %v3149, %v3231
    %3233 = vdwg.mxu0
    %3234 = vmatprep.subr.mxu0 %v2983
    %3235 = vmatpush1.msra.mxu0 %v2982
    %3236 = vmatprep.subr.mxu0 %v2980
    %3237 = vmatpush1.msra.mxu0 %v2979
    %3238 = vmatprep.subr.mxu0 %v2977
    %3239 = vmatpush1.msra.mxu0 %v2976
    %3240 = vmatprep.subr.mxu0 %v2974
    %3241 = vmatpush1.msra.mxu0 %v2973
    %3242 = vmatprep.subr.mxu0 %v2971
    %3243 = vmatpush1.msra.mxu0 %v2970
    %3244 = vmatprep.subr.mxu0 %v2968
    %3245 = vmatpush1.msra.mxu0 %v2967
    %3246 = vmatprep.subr.mxu0 %v2965
    %3247 = vmatpush1.msra.mxu0 %v2964
    %3248 = vmatprep.subr.mxu0 %v2962
    %3249 = vmatpush1.msra.mxu0 %v2961
    %3250 = vmatprep.subr.mxu0 %v2959
    %3251 = vmatpush1.msra.mxu0 %v2958
    %3252 = vmatprep.subr.mxu0 %v2956
    %3253 = vmatpush1.msra.mxu0 %v2955
    %3254 = vmatprep.subr.mxu0 %v2953
    %3255 = vmatpush1.msra.mxu0 %v2952
    %3256 = vmatprep.subr.mxu0 %v2950
    %3257 = vmatpush1.msra.mxu0 %v2949
    %3258 = vmatprep.subr.mxu0 %v2947
    %3259 = vmatpush1.msra.mxu0 %v2946
    %3260 = vmatprep.subr.mxu0 %v2944
    %3261 = vmatpush1.msra.mxu0 %v2943
    %3262 = vmatprep.subr.mxu0 %v2941
    %3263 = vmatpush1.msra.mxu0 %v2940
    %3264 = vmatprep.subr.mxu0 %v2938
    %3265 = vmatpush1.msra.mxu0 %v2937
    %3266 = vmatprep.subr.mxu0 0.0
    %3267 = vmatpush2.msra.mxu0 0.0
    %3268 = vmatprep.subr.mxu0 0.0
    %3269 = vmatpush2.msra.mxu0 0.0
    %3270 = vmatprep.subr.mxu0 0.0
    %3271 = vmatpush2.msra.mxu0 0.0
    %3272 = vmatprep.subr.mxu0 0.0
    %3273 = vmatpush2.msra.mxu0 0.0
    %3274 = vmatprep.subr.mxu0 0.0
    %3275 = vmatpush2.msra.mxu0 0.0
    %3276 = vmatprep.subr.mxu0 0.0
    %3277 = vmatpush2.msra.mxu0 0.0
    %3278 = vmatprep.subr.mxu0 0.0
    %3279 = vmatpush2.msra.mxu0 0.0
    %3280 = vmatprep.subr.mxu0 0.0
    %3281 = vmatpush2.msra.mxu0 0.0
    %3282 = vmatprep.subr.mxu0 0.0
    %3283 = vmatpush2.msra.mxu0 0.0
    %3284 = vmatprep.subr.mxu0 0.0
    %3285 = vmatpush2.msra.mxu0 0.0
    %3286 = vmatprep.subr.mxu0 0.0
    %3287 = vmatpush2.msra.mxu0 0.0
    %3288 = vmatprep.subr.mxu0 0.0
    %3289 = vmatpush2.msra.mxu0 0.0
    %3290 = vmatprep.subr.mxu0 0.0
    %3291 = vmatpush2.msra.mxu0 0.0
    %3292 = vmatprep.subr.mxu0 0.0
    %3293 = vmatpush2.msra.mxu0 0.0
    %3294 = vmatprep.subr.mxu0 0.0
    %3295 = vmatpush2.msra.mxu0 0.0
    %3296 = vmatprep.subr.mxu0 0.0
    %3297 = vmatpush2.msra.mxu0 0.0
    %3298 = vmatprep.mubr.f32.mxu0 0.0
    %3299 = vmatmul.mubr.f32.gmra.mxu0 %v2634
    %v3300 = vpop.f32.mrf.mxu0
    %v3301 = vadd.f32 %v3218, %v3300
    %v3302 = vpop.f32.mrf.mxu0
    %v3303 = vadd.f32 %v3220, %v3302
    %3304 = vmatprep.mubr.f32.mxu0 0.0
    %3305 = vmatmul.mubr.f32.gmra.mxu0 %v2641
    %v3306 = vpop.f32.mrf.mxu0
    %v3307 = vadd.f32 %v3224, %v3306
    %v3308 = vpop.f32.mrf.mxu0
    %v3309 = vadd.f32 %v3226, %v3308
    %3310 = vmatprep.mubr.f32.mxu0 0.0
    %3311 = vmatmul.mubr.f32.gmra.mxu0 %v2648
    %v3312 = vpop.f32.mrf.mxu0
    %v3313 = vadd.f32 %v3230, %v3312
    %v3314 = vpop.f32.mrf.mxu0
    %v3315 = vadd.f32 %v3232, %v3314
    %3316 = vdwg.mxu0
    %3317 = vmatprep.subr.mxu0 0.0
    %3318 = vmatpush1.msra.mxu0 %v2696
    %3319 = vmatprep.subr.mxu0 0.0
    %3320 = vmatpush1.msra.mxu0 %v2693
    %3321 = vmatprep.subr.mxu0 0.0
    %3322 = vmatpush1.msra.mxu0 %v2690
    %3323 = vmatprep.subr.mxu0 0.0
    %3324 = vmatpush1.msra.mxu0 %v2687
    %3325 = vmatprep.subr.mxu0 0.0
    %3326 = vmatpush1.msra.mxu0 %v2684
    %3327 = vmatprep.subr.mxu0 0.0
    %3328 = vmatpush1.msra.mxu0 %v2681
    %3329 = vmatprep.subr.mxu0 0.0
    %3330 = vmatpush1.msra.mxu0 %v2678
    %3331 = vmatprep.subr.mxu0 0.0
    %3332 = vmatpush1.msra.mxu0 %v2675
    %3333 = vmatprep.subr.mxu0 0.0
    %3334 = vmatpush1.msra.mxu0 %v2672
    %3335 = vmatprep.subr.mxu0 0.0
    %3336 = vmatpush1.msra.mxu0 %v2669
    %3337 = vmatprep.subr.mxu0 0.0
    %3338 = vmatpush1.msra.mxu0 %v2666
    %3339 = vmatprep.subr.mxu0 0.0
    %3340 = vmatpush1.msra.mxu0 %v2663
    %3341 = vmatprep.subr.mxu0 0.0
    %3342 = vmatpush1.msra.mxu0 %v2660
    %3343 = vmatprep.subr.mxu0 0.0
    %3344 = vmatpush1.msra.mxu0 %v2657
    %3345 = vmatprep.subr.mxu0 0.0
    %3346 = vmatpush1.msra.mxu0 %v2654
    %3347 = vmatprep.subr.mxu0 0.0
    %3348 = vmatpush1.msra.mxu0 %v2651
    %3349 = vmatprep.subr.mxu0 0.0
    %3350 = vmatpush2.msra.mxu0 %v2744
    %3351 = vmatprep.subr.mxu0 0.0
    %3352 = vmatpush2.msra.mxu0 %v2741
    %3353 = vmatprep.subr.mxu0 0.0
    %3354 = vmatpush2.msra.mxu0 %v2738
    %3355 = vmatprep.subr.mxu0 0.0
    %3356 = vmatpush2.msra.mxu0 %v2735
    %3357 = vmatprep.subr.mxu0 0.0
    %3358 = vmatpush2.msra.mxu0 %v2732
    %3359 = vmatprep.subr.mxu0 0.0
    %3360 = vmatpush2.msra.mxu0 %v2729
    %3361 = vmatprep.subr.mxu0 0.0
    %3362 = vmatpush2.msra.mxu0 %v2726
    %3363 = vmatprep.subr.mxu0 0.0
    %3364 = vmatpush2.msra.mxu0 %v2723
    %3365 = vmatprep.subr.mxu0 0.0
    %3366 = vmatpush2.msra.mxu0 %v2720
    %3367 = vmatprep.subr.mxu0 0.0
    %3368 = vmatpush2.msra.mxu0 %v2717
    %3369 = vmatprep.subr.mxu0 0.0
    %3370 = vmatpush2.msra.mxu0 %v2714
    %3371 = vmatprep.subr.mxu0 0.0
    %3372 = vmatpush2.msra.mxu0 %v2711
    %3373 = vmatprep.subr.mxu0 0.0
    %3374 = vmatpush2.msra.mxu0 %v2708
    %3375 = vmatprep.subr.mxu0 0.0
    %3376 = vmatpush2.msra.mxu0 %v2705
    %3377 = vmatprep.subr.mxu0 0.0
    %3378 = vmatpush2.msra.mxu0 %v2702
    %3379 = vmatprep.subr.mxu0 0.0
    %3380 = vmatpush2.msra.mxu0 %v2699
    %3381 = vmatprep.mubr.f32.mxu0 %v2629
    %3382 = vmatmul.mubr.f32.gmra.mxu0 %v2628
    %v3383 = vpop.f32.mrf.mxu0
    %v3384 = vadd.f32 0.0, %v3383
    %v3385 = vpop.f32.mrf.mxu0
    %3386 = vmatprep.mubr.f32.mxu0 %v2636
    %3387 = vmatmul.mubr.f32.gmra.mxu0 %v2635
    %v3388 = vpop.f32.mrf.mxu0
    %v3389 = vadd.f32 0.0, %v3388
    %v3390 = vpop.f32.mrf.mxu0
    %3391 = vmatprep.mubr.f32.mxu0 %v2643
    %3392 = vmatmul.mubr.f32.gmra.mxu0 %v2642
    %v3393 = vpop.f32.mrf.mxu0
    %v3394 = vadd.f32 0.0, %v3393
    %v3395 = vpop.f32.mrf.mxu0
    %3396 = vdwg.mxu0
    %3397 = vmatprep.subr.mxu0 0.0
    %3398 = vmatpush1.msra.mxu0 %v2792
    %3399 = vmatprep.subr.mxu0 0.0
    %3400 = vmatpush1.msra.mxu0 %v2789
    %3401 = vmatprep.subr.mxu0 0.0
    %3402 = vmatpush1.msra.mxu0 %v2786
    %3403 = vmatprep.subr.mxu0 0.0
    %3404 = vmatpush1.msra.mxu0 %v2783
    %3405 = vmatprep.subr.mxu0 0.0
    %3406 = vmatpush1.msra.mxu0 %v2780
    %3407 = vmatprep.subr.mxu0 0.0
    %3408 = vmatpush1.msra.mxu0 %v2777
    %3409 = vmatprep.subr.mxu0 0.0
    %3410 = vmatpush1.msra.mxu0 %v2774
    %3411 = vmatprep.subr.mxu0 0.0
    %3412 = vmatpush1.msra.mxu0 %v2771
    %3413 = vmatprep.subr.mxu0 0.0
    %3414 = vmatpush1.msra.mxu0 %v2768
    %3415 = vmatprep.subr.mxu0 0.0
    %3416 = vmatpush1.msra.mxu0 %v2765
    %3417 = vmatprep.subr.mxu0 0.0
    %3418 = vmatpush1.msra.mxu0 %v2762
    %3419 = vmatprep.subr.mxu0 0.0
    %3420 = vmatpush1.msra.mxu0 %v2759
    %3421 = vmatprep.subr.mxu0 0.0
    %3422 = vmatpush1.msra.mxu0 %v2756
    %3423 = vmatprep.subr.mxu0 0.0
    %3424 = vmatpush1.msra.mxu0 %v2753
    %3425 = vmatprep.subr.mxu0 0.0
    %3426 = vmatpush1.msra.mxu0 %v2750
    %3427 = vmatprep.subr.mxu0 0.0
    %3428 = vmatpush1.msra.mxu0 %v2747
    %3429 = vmatprep.subr.mxu0 0.0
    %3430 = vmatpush2.msra.mxu0 %v2840
    %3431 = vmatprep.subr.mxu0 0.0
    %3432 = vmatpush2.msra.mxu0 %v2837
    %3433 = vmatprep.subr.mxu0 0.0
    %3434 = vmatpush2.msra.mxu0 %v2834
    %3435 = vmatprep.subr.mxu0 0.0
    %3436 = vmatpush2.msra.mxu0 %v2831
    %3437 = vmatprep.subr.mxu0 0.0
    %3438 = vmatpush2.msra.mxu0 %v2828
    %3439 = vmatprep.subr.mxu0 0.0
    %3440 = vmatpush2.msra.mxu0 %v2825
    %3441 = vmatprep.subr.mxu0 0.0
    %3442 = vmatpush2.msra.mxu0 %v2822
    %3443 = vmatprep.subr.mxu0 0.0
    %3444 = vmatpush2.msra.mxu0 %v2819
    %3445 = vmatprep.subr.mxu0 0.0
    %3446 = vmatpush2.msra.mxu0 %v2816
    %3447 = vmatprep.subr.mxu0 0.0
    %3448 = vmatpush2.msra.mxu0 %v2813
    %3449 = vmatprep.subr.mxu0 0.0
    %3450 = vmatpush2.msra.mxu0 %v2810
    %3451 = vmatprep.subr.mxu0 0.0
    %3452 = vmatpush2.msra.mxu0 %v2807
    %3453 = vmatprep.subr.mxu0 0.0
    %3454 = vmatpush2.msra.mxu0 %v2804
    %3455 = vmatprep.subr.mxu0 0.0
    %3456 = vmatpush2.msra.mxu0 %v2801
    %3457 = vmatprep.subr.mxu0 0.0
    %3458 = vmatpush2.msra.mxu0 %v2798
    %3459 = vmatprep.subr.mxu0 0.0
    %3460 = vmatpush2.msra.mxu0 %v2795
    %3461 = vmatprep.mubr.f32.mxu0 %v2631
    %3462 = vmatmul.mubr.f32.gmra.mxu0 %v2630
    %v3463 = vpop.f32.mrf.mxu0
    %v3464 = vadd.f32 %v3384, %v3463
    %v3465 = vpop.f32.mrf.mxu0
    %3466 = vmatprep.mubr.f32.mxu0 %v2638
    %3467 = vmatmul.mubr.f32.gmra.mxu0 %v2637
    %v3468 = vpop.f32.mrf.mxu0
    %v3469 = vadd.f32 %v3389, %v3468
    %v3470 = vpop.f32.mrf.mxu0
    %3471 = vmatprep.mubr.f32.mxu0 %v2645
    %3472 = vmatmul.mubr.f32.gmra.mxu0 %v2644
    %v3473 = vpop.f32.mrf.mxu0
    %v3474 = vadd.f32 %v3394, %v3473
    %v3475 = vpop.f32.mrf.mxu0
    %3476 = vdwg.mxu0
    %3477 = vmatprep.subr.mxu0 0.0
    %3478 = vmatpush1.msra.mxu0 %v2888
    %3479 = vmatprep.subr.mxu0 0.0
    %3480 = vmatpush1.msra.mxu0 %v2885
    %3481 = vmatprep.subr.mxu0 0.0
    %3482 = vmatpush1.msra.mxu0 %v2882
    %3483 = vmatprep.subr.mxu0 0.0
    %3484 = vmatpush1.msra.mxu0 %v2879
    %3485 = vmatprep.subr.mxu0 0.0
    %3486 = vmatpush1.msra.mxu0 %v2876
    %3487 = vmatprep.subr.mxu0 0.0
    %3488 = vmatpush1.msra.mxu0 %v2873
    %3489 = vmatprep.subr.mxu0 0.0
    %3490 = vmatpush1.msra.mxu0 %v2870
    %3491 = vmatprep.subr.mxu0 0.0
    %3492 = vmatpush1.msra.mxu0 %v2867
    %3493 = vmatprep.subr.mxu0 0.0
    %3494 = vmatpush1.msra.mxu0 %v2864
    %3495 = vmatprep.subr.mxu0 0.0
    %3496 = vmatpush1.msra.mxu0 %v2861
    %3497 = vmatprep.subr.mxu0 0.0
    %3498 = vmatpush1.msra.mxu0 %v2858
    %3499 = vmatprep.subr.mxu0 0.0
    %3500 = vmatpush1.msra.mxu0 %v2855
    %3501 = vmatprep.subr.mxu0 0.0
    %3502 = vmatpush1.msra.mxu0 %v2852
    %3503 = vmatprep.subr.mxu0 0.0
    %3504 = vmatpush1.msra.mxu0 %v2849
    %3505 = vmatprep.subr.mxu0 0.0
    %3506 = vmatpush1.msra.mxu0 %v2846
    %3507 = vmatprep.subr.mxu0 0.0
    %3508 = vmatpush1.msra.mxu0 %v2843
    %3509 = vmatprep.subr.mxu0 0.0
    %3510 = vmatpush2.msra.mxu0 %v2936
    %3511 = vmatprep.subr.mxu0 0.0
    %3512 = vmatpush2.msra.mxu0 %v2933
    %3513 = vmatprep.subr.mxu0 0.0
    %3514 = vmatpush2.msra.mxu0 %v2930
    %3515 = vmatprep.subr.mxu0 0.0
    %3516 = vmatpush2.msra.mxu0 %v2927
    %3517 = vmatprep.subr.mxu0 0.0
    %3518 = vmatpush2.msra.mxu0 %v2924
    %3519 = vmatprep.subr.mxu0 0.0
    %3520 = vmatpush2.msra.mxu0 %v2921
    %3521 = vmatprep.subr.mxu0 0.0
    %3522 = vmatpush2.msra.mxu0 %v2918
    %3523 = vmatprep.subr.mxu0 0.0
    %3524 = vmatpush2.msra.mxu0 %v2915
    %3525 = vmatprep.subr.mxu0 0.0
    %3526 = vmatpush2.msra.mxu0 %v2912
    %3527 = vmatprep.subr.mxu0 0.0
    %3528 = vmatpush2.msra.mxu0 %v2909
    %3529 = vmatprep.subr.mxu0 0.0
    %3530 = vmatpush2.msra.mxu0 %v2906
    %3531 = vmatprep.subr.mxu0 0.0
    %3532 = vmatpush2.msra.mxu0 %v2903
    %3533 = vmatprep.subr.mxu0 0.0
    %3534 = vmatpush2.msra.mxu0 %v2900
    %3535 = vmatprep.subr.mxu0 0.0
    %3536 = vmatpush2.msra.mxu0 %v2897
    %3537 = vmatprep.subr.mxu0 0.0
    %3538 = vmatpush2.msra.mxu0 %v2894
    %3539 = vmatprep.subr.mxu0 0.0
    %3540 = vmatpush2.msra.mxu0 %v2891
    %3541 = vmatprep.mubr.f32.mxu0 %v2633
    %3542 = vmatmul.mubr.f32.gmra.mxu0 %v2632
    %v3543 = vpop.f32.mrf.mxu0
    %v3544 = vadd.f32 %v3464, %v3543
    %v3545 = vpop.f32.mrf.mxu0
    %3546 = vmatprep.mubr.f32.mxu0 %v2640
    %3547 = vmatmul.mubr.f32.gmra.mxu0 %v2639
    %v3548 = vpop.f32.mrf.mxu0
    %v3549 = vadd.f32 %v3469, %v3548
    %v3550 = vpop.f32.mrf.mxu0
    %3551 = vmatprep.mubr.f32.mxu0 %v2647
    %3552 = vmatmul.mubr.f32.gmra.mxu0 %v2646
    %v3553 = vpop.f32.mrf.mxu0
    %v3554 = vadd.f32 %v3474, %v3553
    %v3555 = vpop.f32.mrf.mxu0
    %3556 = vdwg.mxu0
    %3557 = vmatprep.subr.mxu0 0.0
    %3558 = vmatpush1.msra.mxu0 %v2984
    %3559 = vmatprep.subr.mxu0 0.0
    %3560 = vmatpush1.msra.mxu0 %v2981
    %3561 = vmatprep.subr.mxu0 0.0
    %3562 = vmatpush1.msra.mxu0 %v2978
    %3563 = vmatprep.subr.mxu0 0.0
    %3564 = vmatpush1.msra.mxu0 %v2975
    %3565 = vmatprep.subr.mxu0 0.0
    %3566 = vmatpush1.msra.mxu0 %v2972
    %3567 = vmatprep.subr.mxu0 0.0
    %3568 = vmatpush1.msra.mxu0 %v2969
    %3569 = vmatprep.subr.mxu0 0.0
    %3570 = vmatpush1.msra.mxu0 %v2966
    %3571 = vmatprep.subr.mxu0 0.0
    %3572 = vmatpush1.msra.mxu0 %v2963
    %3573 = vmatprep.subr.mxu0 0.0
    %3574 = vmatpush1.msra.mxu0 %v2960
    %3575 = vmatprep.subr.mxu0 0.0
    %3576 = vmatpush1.msra.mxu0 %v2957
    %3577 = vmatprep.subr.mxu0 0.0
    %3578 = vmatpush1.msra.mxu0 %v2954
    %3579 = vmatprep.subr.mxu0 0.0
    %3580 = vmatpush1.msra.mxu0 %v2951
    %3581 = vmatprep.subr.mxu0 0.0
    %3582 = vmatpush1.msra.mxu0 %v2948
    %3583 = vmatprep.subr.mxu0 0.0
    %3584 = vmatpush1.msra.mxu0 %v2945
    %3585 = vmatprep.subr.mxu0 0.0
    %3586 = vmatpush1.msra.mxu0 %v2942
    %3587 = vmatprep.subr.mxu0 0.0
    %3588 = vmatpush1.msra.mxu0 %v2939
    %3589 = vmatprep.subr.mxu0 0.0
    %3590 = vmatpush2.msra.mxu0 0.0
    %3591 = vmatprep.subr.mxu0 0.0
    %3592 = vmatpush2.msra.mxu0 0.0
    %3593 = vmatprep.subr.mxu0 0.0
    %3594 = vmatpush2.msra.mxu0 0.0
    %3595 = vmatprep.subr.mxu0 0.0
    %3596 = vmatpush2.msra.mxu0 0.0
    %3597 = vmatprep.subr.mxu0 0.0
    %3598 = vmatpush2.msra.mxu0 0.0
    %3599 = vmatprep.subr.mxu0 0.0
    %3600 = vmatpush2.msra.mxu0 0.0
    %3601 = vmatprep.subr.mxu0 0.0
    %3602 = vmatpush2.msra.mxu0 0.0
    %3603 = vmatprep.subr.mxu0 0.0
    %3604 = vmatpush2.msra.mxu0 0.0
    %3605 = vmatprep.subr.mxu0 0.0
    %3606 = vmatpush2.msra.mxu0 0.0
    %3607 = vmatprep.subr.mxu0 0.0
    %3608 = vmatpush2.msra.mxu0 0.0
    %3609 = vmatprep.subr.mxu0 0.0
    %3610 = vmatpush2.msra.mxu0 0.0
    %3611 = vmatprep.subr.mxu0 0.0
    %3612 = vmatpush2.msra.mxu0 0.0
    %3613 = vmatprep.subr.mxu0 0.0
    %3614 = vmatpush2.msra.mxu0 0.0
    %3615 = vmatprep.subr.mxu0 0.0
    %3616 = vmatpush2.msra.mxu0 0.0
    %3617 = vmatprep.subr.mxu0 0.0
    %3618 = vmatpush2.msra.mxu0 0.0
    %3619 = vmatprep.subr.mxu0 0.0
    %3620 = vmatpush2.msra.mxu0 0.0
    %3621 = vmatprep.mubr.f32.mxu0 0.0
    %3622 = vmatmul.mubr.f32.gmra.mxu0 %v2634
    %v3623 = vpop.f32.mrf.mxu0
    %v3624 = vadd.f32 %v3544, %v3623
    %v3625 = vpop.f32.mrf.mxu0
    %3626 = vmatprep.mubr.f32.mxu0 0.0
    %3627 = vmatmul.mubr.f32.gmra.mxu0 %v2641
    %v3628 = vpop.f32.mrf.mxu0
    %v3629 = vadd.f32 %v3549, %v3628
    %v3630 = vpop.f32.mrf.mxu0
    %3631 = vmatprep.mubr.f32.mxu0 0.0
    %3632 = vmatmul.mubr.f32.gmra.mxu0 %v2648
    %v3633 = vpop.f32.mrf.mxu0
    %v3634 = vadd.f32 %v3554, %v3633
    %v3635 = vpop.f32.mrf.mxu0
    %3636 = vdwg.mxu0
    %v3640 = vrot.slane %v3303, 1
    %v3641 = vrot.slane %v3309, 1
    %v3642 = vsel %vm510, %v3640, %v3641
    %v3643 = vrot.slane %v3315, 1
    %v3644 = vsel %vm510, %v3641, %v3643
    %v3648 = vadd.f32 %v3301, %v3642
    %v3649 = vadd.f32 %v3307, %v3644
    %v3650 = vadd.f32 %v3313, %v3643
    %vm3654 = vcmask 1045504
    %v3655 = vrot.slane %v3624, 2
    %v3656 = vrot.slane %v3629, 2
    %v3657 = vsel %vm3654, %v3655, %v3656
    %v3658 = vrot.slane %v3634, 2
    %v3659 = vsel %vm3654, %v3656, %v3658
    %v3663 = vadd.f32 %v3648, %v3657
    %v3664 = vadd.f32 %v3649, %v3659
    %v3665 = vadd.f32 %v3650, %v3658
    %v3666 = vld [vmem:[%s4] sm:$0x1]
    %v3668 = vlaneseq
    %v3669 = vshrl.u32 %v3668, 7
    %v3670 = vsub.s32 0, %v3669
    %v3671 = vrot.slane %v3666, %v3670
    %v3673 = vadd.f32 %v3663, %v3671
    %v3674 = vadd.f32 %v3664, %v3671
    %v3675 = vadd.f32 %v3665, %v3671
    %v3676 = vmax.f32 %v3673, 0.0
    %v3677 = vmax.f32 %v3674, 0.0
    %v3678 = vmax.f32 %v3675, 0.0
    %v3679 = vld [vmem:[#allocation2 + $0x28] sm:$0xff]
    %v3680 = vld [vmem:[#allocation2 + $0x30] sm:$0xff]
    %v3681 = vld [vmem:[#allocation2 + $0x38] sm:$0xff]
    %v3682 = vld [vmem:[#allocation2 + $0x40] sm:$0xff]
    %v3683 = vld [vmem:[#allocation2 + $0x48] sm:$0xff]
    %v3684 = vld [vmem:[#allocation2 + $0x50] sm:$0xff]
    %v3685 = vld [vmem:[#allocation2 + $0x58] sm:$0xff]
    %v3686 = vld [vmem:[#allocation2 + $0x88] sm:$0xff]
    %v3687 = vld [vmem:[#allocation2 + $0x90] sm:$0xff]
    %v3688 = vld [vmem:[#allocation2 + $0x98] sm:$0xff]
    %v3689 = vld [vmem:[#allocation2 + $0xa0] sm:$0xff]
    %v3690 = vld [vmem:[#allocation2 + $0xa8] sm:$0xff]
    %v3691 = vld [vmem:[#allocation2 + $0xb0] sm:$0xff]
    %v3692 = vld [vmem:[#allocation2 + $0xb8] sm:$0xff]
    %v3693 = vld [vmem:[#allocation2 + $0xe8] sm:$0xf]
    %v3694 = vld [vmem:[#allocation2 + $0xf0] sm:$0xf]
    %v3695 = vld [vmem:[#allocation2 + $0xf8] sm:$0xf]
    %v3696 = vld [vmem:[#allocation2 + $0x100] sm:$0xf]
    %v3697 = vld [vmem:[#allocation2 + $0x108] sm:$0xf]
    %v3698 = vld [vmem:[#allocation2 + $0x110] sm:$0xf]
    %v3699 = vld [vmem:[#allocation2 + $0x118] sm:$0xf]
    %3700 = vmatprep.subr.mxu0 %v2695
    %3701 = vmatpush1.msra.mxu0 %v2694
    %3702 = vmatprep.subr.mxu0 %v2692
    %3703 = vmatpush1.msra.mxu0 %v2691
    %3704 = vmatprep.subr.mxu0 %v2689
    %3705 = vmatpush1.msra.mxu0 %v2688
    %3706 = vmatprep.subr.mxu0 %v2686
    %3707 = vmatpush1.msra.mxu0 %v2685
    %3708 = vmatprep.subr.mxu0 %v2683
    %3709 = vmatpush1.msra.mxu0 %v2682
    %3710 = vmatprep.subr.mxu0 %v2680
    %3711 = vmatpush1.msra.mxu0 %v2679
    %3712 = vmatprep.subr.mxu0 %v2677
    %3713 = vmatpush1.msra.mxu0 %v2676
    %3714 = vmatprep.subr.mxu0 %v2674
    %3715 = vmatpush1.msra.mxu0 %v2673
    %3716 = vmatprep.subr.mxu0 %v2671
    %3717 = vmatpush1.msra.mxu0 %v2670
    %3718 = vmatprep.subr.mxu0 %v2668
    %3719 = vmatpush1.msra.mxu0 %v2667
    %3720 = vmatprep.subr.mxu0 %v2665
    %3721 = vmatpush1.msra.mxu0 %v2664
    %3722 = vmatprep.subr.mxu0 %v2662
    %3723 = vmatpush1.msra.mxu0 %v2661
    %3724 = vmatprep.subr.mxu0 %v2659
    %3725 = vmatpush1.msra.mxu0 %v2658
    %3726 = vmatprep.subr.mxu0 %v2656
    %3727 = vmatpush1.msra.mxu0 %v2655
    %3728 = vmatprep.subr.mxu0 %v2653
    %3729 = vmatpush1.msra.mxu0 %v2652
    %3730 = vmatprep.subr.mxu0 %v2650
    %3731 = vmatpush1.msra.mxu0 %v2649
    %3732 = vmatprep.subr.mxu0 %v2743
    %3733 = vmatpush2.msra.mxu0 %v2742
    %3734 = vmatprep.subr.mxu0 %v2740
    %3735 = vmatpush2.msra.mxu0 %v2739
    %3736 = vmatprep.subr.mxu0 %v2737
    %3737 = vmatpush2.msra.mxu0 %v2736
    %3738 = vmatprep.subr.mxu0 %v2734
    %3739 = vmatpush2.msra.mxu0 %v2733
    %3740 = vmatprep.subr.mxu0 %v2731
    %3741 = vmatpush2.msra.mxu0 %v2730
    %3742 = vmatprep.subr.mxu0 %v2728
    %3743 = vmatpush2.msra.mxu0 %v2727
    %3744 = vmatprep.subr.mxu0 %v2725
    %3745 = vmatpush2.msra.mxu0 %v2724
    %3746 = vmatprep.subr.mxu0 %v2722
    %3747 = vmatpush2.msra.mxu0 %v2721
    %3748 = vmatprep.subr.mxu0 %v2719
    %3749 = vmatpush2.msra.mxu0 %v2718
    %3750 = vmatprep.subr.mxu0 %v2716
    %3751 = vmatpush2.msra.mxu0 %v2715
    %3752 = vmatprep.subr.mxu0 %v2713
    %3753 = vmatpush2.msra.mxu0 %v2712
    %3754 = vmatprep.subr.mxu0 %v2710
    %3755 = vmatpush2.msra.mxu0 %v2709
    %3756 = vmatprep.subr.mxu0 %v2707
    %3757 = vmatpush2.msra.mxu0 %v2706
    %3758 = vmatprep.subr.mxu0 %v2704
    %3759 = vmatpush2.msra.mxu0 %v2703
    %3760 = vmatprep.subr.mxu0 %v2701
    %3761 = vmatpush2.msra.mxu0 %v2700
    %3762 = vmatprep.subr.mxu0 %v2698
    %3763 = vmatpush2.msra.mxu0 %v2697
    %3764 = vmatprep.mubr.f32.mxu0 %v3680
    %3765 = vmatmul.mubr.f32.gmra.mxu0 %v3679
    %v3766 = vpop.f32.mrf.mxu0
    %v3767 = vadd.f32 0.0, %v3766
    %v3768 = vpop.f32.mrf.mxu0
    %v3769 = vadd.f32 0.0, %v3768
    %3770 = vmatprep.mubr.f32.mxu0 %v3687
    %3771 = vmatmul.mubr.f32.gmra.mxu0 %v3686
    %v3772 = vpop.f32.mrf.mxu0
    %v3773 = vadd.f32 0.0, %v3772
    %v3774 = vpop.f32.mrf.mxu0
    %v3775 = vadd.f32 0.0, %v3774
    %3776 = vmatprep.mubr.f32.mxu0 %v3694
    %3777 = vmatmul.mubr.f32.gmra.mxu0 %v3693
    %v3778 = vpop.f32.mrf.mxu0
    %v3779 = vadd.f32 0.0, %v3778
    %v3780 = vpop.f32.mrf.mxu0
    %v3781 = vadd.f32 0.0, %v3780
    %3782 = vdwg.mxu0
    %3783 = vmatprep.subr.mxu0 %v2791
    %3784 = vmatpush1.msra.mxu0 %v2790
    %3785 = vmatprep.subr.mxu0 %v2788
    %3786 = vmatpush1.msra.mxu0 %v2787
    %3787 = vmatprep.subr.mxu0 %v2785
    %3788 = vmatpush1.msra.mxu0 %v2784
    %3789 = vmatprep.subr.mxu0 %v2782
    %3790 = vmatpush1.msra.mxu0 %v2781
    %3791 = vmatprep.subr.mxu0 %v2779
    %3792 = vmatpush1.msra.mxu0 %v2778
    %3793 = vmatprep.subr.mxu0 %v2776
    %3794 = vmatpush1.msra.mxu0 %v2775
    %3795 = vmatprep.subr.mxu0 %v2773
    %3796 = vmatpush1.msra.mxu0 %v2772
    %3797 = vmatprep.subr.mxu0 %v2770
    %3798 = vmatpush1.msra.mxu0 %v2769
    %3799 = vmatprep.subr.mxu0 %v2767
    %3800 = vmatpush1.msra.mxu0 %v2766
    %3801 = vmatprep.subr.mxu0 %v2764
    %3802 = vmatpush1.msra.mxu0 %v2763
    %3803 = vmatprep.subr.mxu0 %v2761
    %3804 = vmatpush1.msra.mxu0 %v2760
    %3805 = vmatprep.subr.mxu0 %v2758
    %3806 = vmatpush1.msra.mxu0 %v2757
    %3807 = vmatprep.subr.mxu0 %v2755
    %3808 = vmatpush1.msra.mxu0 %v2754
    %3809 = vmatprep.subr.mxu0 %v2752
    %3810 = vmatpush1.msra.mxu0 %v2751
    %3811 = vmatprep.subr.mxu0 %v2749
    %3812 = vmatpush1.msra.mxu0 %v2748
    %3813 = vmatprep.subr.mxu0 %v2746
    %3814 = vmatpush1.msra.mxu0 %v2745
    %3815 = vmatprep.subr.mxu0 %v2839
    %3816 = vmatpush2.msra.mxu0 %v2838
    %3817 = vmatprep.subr.mxu0 %v2836
    %3818 = vmatpush2.msra.mxu0 %v2835
    %3819 = vmatprep.subr.mxu0 %v2833
    %3820 = vmatpush2.msra.mxu0 %v2832
    %3821 = vmatprep.subr.mxu0 %v2830
    %3822 = vmatpush2.msra.mxu0 %v2829
    %3823 = vmatprep.subr.mxu0 %v2827
    %3824 = vmatpush2.msra.mxu0 %v2826
    %3825 = vmatprep.subr.mxu0 %v2824
    %3826 = vmatpush2.msra.mxu0 %v2823
    %3827 = vmatprep.subr.mxu0 %v2821
    %3828 = vmatpush2.msra.mxu0 %v2820
    %3829 = vmatprep.subr.mxu0 %v2818
    %3830 = vmatpush2.msra.mxu0 %v2817
    %3831 = vmatprep.subr.mxu0 %v2815
    %3832 = vmatpush2.msra.mxu0 %v2814
    %3833 = vmatprep.subr.mxu0 %v2812
    %3834 = vmatpush2.msra.mxu0 %v2811
    %3835 = vmatprep.subr.mxu0 %v2809
    %3836 = vmatpush2.msra.mxu0 %v2808
    %3837 = vmatprep.subr.mxu0 %v2806
    %3838 = vmatpush2.msra.mxu0 %v2805
    %3839 = vmatprep.subr.mxu0 %v2803
    %3840 = vmatpush2.msra.mxu0 %v2802
    %3841 = vmatprep.subr.mxu0 %v2800
    %3842 = vmatpush2.msra.mxu0 %v2799
    %3843 = vmatprep.subr.mxu0 %v2797
    %3844 = vmatpush2.msra.mxu0 %v2796
    %3845 = vmatprep.subr.mxu0 %v2794
    %3846 = vmatpush2.msra.mxu0 %v2793
    %3847 = vmatprep.mubr.f32.mxu0 %v3682
    %3848 = vmatmul.mubr.f32.gmra.mxu0 %v3681
    %v3849 = vpop.f32.mrf.mxu0
    %v3850 = vadd.f32 %v3767, %v3849
    %v3851 = vpop.f32.mrf.mxu0
    %v3852 = vadd.f32 %v3769, %v3851
    %3853 = vmatprep.mubr.f32.mxu0 %v3689
    %3854 = vmatmul.mubr.f32.gmra.mxu0 %v3688
    %v3855 = vpop.f32.mrf.mxu0
    %v3856 = vadd.f32 %v3773, %v3855
    %v3857 = vpop.f32.mrf.mxu0
    %v3858 = vadd.f32 %v3775, %v3857
    %3859 = vmatprep.mubr.f32.mxu0 %v3696
    %3860 = vmatmul.mubr.f32.gmra.mxu0 %v3695
    %v3861 = vpop.f32.mrf.mxu0
    %v3862 = vadd.f32 %v3779, %v3861
    %v3863 = vpop.f32.mrf.mxu0
    %v3864 = vadd.f32 %v3781, %v3863
    %3865 = vdwg.mxu0
    %3866 = vmatprep.subr.mxu0 %v2887
    %3867 = vmatpush1.msra.mxu0 %v2886
    %3868 = vmatprep.subr.mxu0 %v2884
    %3869 = vmatpush1.msra.mxu0 %v2883
    %3870 = vmatprep.subr.mxu0 %v2881
    %3871 = vmatpush1.msra.mxu0 %v2880
    %3872 = vmatprep.subr.mxu0 %v2878
    %3873 = vmatpush1.msra.mxu0 %v2877
    %3874 = vmatprep.subr.mxu0 %v2875
    %3875 = vmatpush1.msra.mxu0 %v2874
    %3876 = vmatprep.subr.mxu0 %v2872
    %3877 = vmatpush1.msra.mxu0 %v2871
    %3878 = vmatprep.subr.mxu0 %v2869
    %3879 = vmatpush1.msra.mxu0 %v2868
    %3880 = vmatprep.subr.mxu0 %v2866
    %3881 = vmatpush1.msra.mxu0 %v2865
    %3882 = vmatprep.subr.mxu0 %v2863
    %3883 = vmatpush1.msra.mxu0 %v2862
    %3884 = vmatprep.subr.mxu0 %v2860
    %3885 = vmatpush1.msra.mxu0 %v2859
    %3886 = vmatprep.subr.mxu0 %v2857
    %3887 = vmatpush1.msra.mxu0 %v2856
    %3888 = vmatprep.subr.mxu0 %v2854
    %3889 = vmatpush1.msra.mxu0 %v2853
    %3890 = vmatprep.subr.mxu0 %v2851
    %3891 = vmatpush1.msra.mxu0 %v2850
    %3892 = vmatprep.subr.mxu0 %v2848
    %3893 = vmatpush1.msra.mxu0 %v2847
    %3894 = vmatprep.subr.mxu0 %v2845
    %3895 = vmatpush1.msra.mxu0 %v2844
    %3896 = vmatprep.subr.mxu0 %v2842
    %3897 = vmatpush1.msra.mxu0 %v2841
    %3898 = vmatprep.subr.mxu0 %v2935
    %3899 = vmatpush2.msra.mxu0 %v2934
    %3900 = vmatprep.subr.mxu0 %v2932
    %3901 = vmatpush2.msra.mxu0 %v2931
    %3902 = vmatprep.subr.mxu0 %v2929
    %3903 = vmatpush2.msra.mxu0 %v2928
    %3904 = vmatprep.subr.mxu0 %v2926
    %3905 = vmatpush2.msra.mxu0 %v2925
    %3906 = vmatprep.subr.mxu0 %v2923
    %3907 = vmatpush2.msra.mxu0 %v2922
    %3908 = vmatprep.subr.mxu0 %v2920
    %3909 = vmatpush2.msra.mxu0 %v2919
    %3910 = vmatprep.subr.mxu0 %v2917
    %3911 = vmatpush2.msra.mxu0 %v2916
    %3912 = vmatprep.subr.mxu0 %v2914
    %3913 = vmatpush2.msra.mxu0 %v2913
    %3914 = vmatprep.subr.mxu0 %v2911
    %3915 = vmatpush2.msra.mxu0 %v2910
    %3916 = vmatprep.subr.mxu0 %v2908
    %3917 = vmatpush2.msra.mxu0 %v2907
    %3918 = vmatprep.subr.mxu0 %v2905
    %3919 = vmatpush2.msra.mxu0 %v2904
    %3920 = vmatprep.subr.mxu0 %v2902
    %3921 = vmatpush2.msra.mxu0 %v2901
    %3922 = vmatprep.subr.mxu0 %v2899
    %3923 = vmatpush2.msra.mxu0 %v2898
    %3924 = vmatprep.subr.mxu0 %v2896
    %3925 = vmatpush2.msra.mxu0 %v2895
    %3926 = vmatprep.subr.mxu0 %v2893
    %3927 = vmatpush2.msra.mxu0 %v2892
    %3928 = vmatprep.subr.mxu0 %v2890
    %3929 = vmatpush2.msra.mxu0 %v2889
    %3930 = vmatprep.mubr.f32.mxu0 %v3684
    %3931 = vmatmul.mubr.f32.gmra.mxu0 %v3683
    %v3932 = vpop.f32.mrf.mxu0
    %v3933 = vadd.f32 %v3850, %v3932
    %v3934 = vpop.f32.mrf.mxu0
    %v3935 = vadd.f32 %v3852, %v3934
    %3936 = vmatprep.mubr.f32.mxu0 %v3691
    %3937 = vmatmul.mubr.f32.gmra.mxu0 %v3690
    %v3938 = vpop.f32.mrf.mxu0
    %v3939 = vadd.f32 %v3856, %v3938
    %v3940 = vpop.f32.mrf.mxu0
    %v3941 = vadd.f32 %v3858, %v3940
    %3942 = vmatprep.mubr.f32.mxu0 %v3698
    %3943 = vmatmul.mubr.f32.gmra.mxu0 %v3697
    %v3944 = vpop.f32.mrf.mxu0
    %v3945 = vadd.f32 %v3862, %v3944
    %v3946 = vpop.f32.mrf.mxu0
    %v3947 = vadd.f32 %v3864, %v3946
    %3948 = vdwg.mxu0
    %3949 = vmatprep.subr.mxu0 %v2983
    %3950 = vmatpush1.msra.mxu0 %v2982
    %3951 = vmatprep.subr.mxu0 %v2980
    %3952 = vmatpush1.msra.mxu0 %v2979
    %3953 = vmatprep.subr.mxu0 %v2977
    %3954 = vmatpush1.msra.mxu0 %v2976
    %3955 = vmatprep.subr.mxu0 %v2974
    %3956 = vmatpush1.msra.mxu0 %v2973
    %3957 = vmatprep.subr.mxu0 %v2971
    %3958 = vmatpush1.msra.mxu0 %v2970
    %3959 = vmatprep.subr.mxu0 %v2968
    %3960 = vmatpush1.msra.mxu0 %v2967
    %3961 = vmatprep.subr.mxu0 %v2965
    %3962 = vmatpush1.msra.mxu0 %v2964
    %3963 = vmatprep.subr.mxu0 %v2962
    %3964 = vmatpush1.msra.mxu0 %v2961
    %3965 = vmatprep.subr.mxu0 %v2959
    %3966 = vmatpush1.msra.mxu0 %v2958
    %3967 = vmatprep.subr.mxu0 %v2956
    %3968 = vmatpush1.msra.mxu0 %v2955
    %3969 = vmatprep.subr.mxu0 %v2953
    %3970 = vmatpush1.msra.mxu0 %v2952
    %3971 = vmatprep.subr.mxu0 %v2950
    %3972 = vmatpush1.msra.mxu0 %v2949
    %3973 = vmatprep.subr.mxu0 %v2947
    %3974 = vmatpush1.msra.mxu0 %v2946
    %3975 = vmatprep.subr.mxu0 %v2944
    %3976 = vmatpush1.msra.mxu0 %v2943
    %3977 = vmatprep.subr.mxu0 %v2941
    %3978 = vmatpush1.msra.mxu0 %v2940
    %3979 = vmatprep.subr.mxu0 %v2938
    %3980 = vmatpush1.msra.mxu0 %v2937
    %3981 = vmatprep.subr.mxu0 0.0
    %3982 = vmatpush2.msra.mxu0 0.0
    %3983 = vmatprep.subr.mxu0 0.0
    %3984 = vmatpush2.msra.mxu0 0.0
    %3985 = vmatprep.subr.mxu0 0.0
    %3986 = vmatpush2.msra.mxu0 0.0
    %3987 = vmatprep.subr.mxu0 0.0
    %3988 = vmatpush2.msra.mxu0 0.0
    %3989 = vmatprep.subr.mxu0 0.0
    %3990 = vmatpush2.msra.mxu0 0.0
    %3991 = vmatprep.subr.mxu0 0.0
    %3992 = vmatpush2.msra.mxu0 0.0
    %3993 = vmatprep.subr.mxu0 0.0
    %3994 = vmatpush2.msra.mxu0 0.0
    %3995 = vmatprep.subr.mxu0 0.0
    %3996 = vmatpush2.msra.mxu0 0.0
    %3997 = vmatprep.subr.mxu0 0.0
    %3998 = vmatpush2.msra.mxu0 0.0
    %3999 = vmatprep.subr.mxu0 0.0
    %4000 = vmatpush2.msra.mxu0 0.0
    %4001 = vmatprep.subr.mxu0 0.0
    %4002 = vmatpush2.msra.mxu0 0.0
    %4003 = vmatprep.subr.mxu0 0.0
    %4004 = vmatpush2.msra.mxu0 0.0
    %4005 = vmatprep.subr.mxu0 0.0
    %4006 = vmatpush2.msra.mxu0 0.0
    %4007 = vmatprep.subr.mxu0 0.0
    %4008 = vmatpush2.msra.mxu0 0.0
    %4009 = vmatprep.subr.mxu0 0.0
    %4010 = vmatpush2.msra.mxu0 0.0
    %4011 = vmatprep.subr.mxu0 0.0
    %4012 = vmatpush2.msra.mxu0 0.0
    %4013 = vmatprep.mubr.f32.mxu0 0.0
    %4014 = vmatmul.mubr.f32.gmra.mxu0 %v3685
    %v4015 = vpop.f32.mrf.mxu0
    %v4016 = vadd.f32 %v3933, %v4015
    %v4017 = vpop.f32.mrf.mxu0
    %v4018 = vadd.f32 %v3935, %v4017
    %4019 = vmatprep.mubr.f32.mxu0 0.0
    %4020 = vmatmul.mubr.f32.gmra.mxu0 %v3692
    %v4021 = vpop.f32.mrf.mxu0
    %v4022 = vadd.f32 %v3939, %v4021
    %v4023 = vpop.f32.mrf.mxu0
    %v4024 = vadd.f32 %v3941, %v4023
    %4025 = vmatprep.mubr.f32.mxu0 0.0
    %4026 = vmatmul.mubr.f32.gmra.mxu0 %v3699
    %v4027 = vpop.f32.mrf.mxu0
    %v4028 = vadd.f32 %v3945, %v4027
    %v4029 = vpop.f32.mrf.mxu0
    %v4030 = vadd.f32 %v3947, %v4029
    %4031 = vdwg.mxu0
    %4032 = vmatprep.subr.mxu0 0.0
    %4033 = vmatpush1.msra.mxu0 %v2696
    %4034 = vmatprep.subr.mxu0 0.0
    %4035 = vmatpush1.msra.mxu0 %v2693
    %4036 = vmatprep.subr.mxu0 0.0
    %4037 = vmatpush1.msra.mxu0 %v2690
    %4038 = vmatprep.subr.mxu0 0.0
    %4039 = vmatpush1.msra.mxu0 %v2687
    %4040 = vmatprep.subr.mxu0 0.0
    %4041 = vmatpush1.msra.mxu0 %v2684
    %4042 = vmatprep.subr.mxu0 0.0
    %4043 = vmatpush1.msra.mxu0 %v2681
    %4044 = vmatprep.subr.mxu0 0.0
    %4045 = vmatpush1.msra.mxu0 %v2678
    %4046 = vmatprep.subr.mxu0 0.0
    %4047 = vmatpush1.msra.mxu0 %v2675
    %4048 = vmatprep.subr.mxu0 0.0
    %4049 = vmatpush1.msra.mxu0 %v2672
    %4050 = vmatprep.subr.mxu0 0.0
    %4051 = vmatpush1.msra.mxu0 %v2669
    %4052 = vmatprep.subr.mxu0 0.0
    %4053 = vmatpush1.msra.mxu0 %v2666
    %4054 = vmatprep.subr.mxu0 0.0
    %4055 = vmatpush1.msra.mxu0 %v2663
    %4056 = vmatprep.subr.mxu0 0.0
    %4057 = vmatpush1.msra.mxu0 %v2660
    %4058 = vmatprep.subr.mxu0 0.0
    %4059 = vmatpush1.msra.mxu0 %v2657
    %4060 = vmatprep.subr.mxu0 0.0
    %4061 = vmatpush1.msra.mxu0 %v2654
    %4062 = vmatprep.subr.mxu0 0.0
    %4063 = vmatpush1.msra.mxu0 %v2651
    %4064 = vmatprep.subr.mxu0 0.0
    %4065 = vmatpush2.msra.mxu0 %v2744
    %4066 = vmatprep.subr.mxu0 0.0
    %4067 = vmatpush2.msra.mxu0 %v2741
    %4068 = vmatprep.subr.mxu0 0.0
    %4069 = vmatpush2.msra.mxu0 %v2738
    %4070 = vmatprep.subr.mxu0 0.0
    %4071 = vmatpush2.msra.mxu0 %v2735
    %4072 = vmatprep.subr.mxu0 0.0
    %4073 = vmatpush2.msra.mxu0 %v2732
    %4074 = vmatprep.subr.mxu0 0.0
    %4075 = vmatpush2.msra.mxu0 %v2729
    %4076 = vmatprep.subr.mxu0 0.0
    %4077 = vmatpush2.msra.mxu0 %v2726
    %4078 = vmatprep.subr.mxu0 0.0
    %4079 = vmatpush2.msra.mxu0 %v2723
    %4080 = vmatprep.subr.mxu0 0.0
    %4081 = vmatpush2.msra.mxu0 %v2720
    %4082 = vmatprep.subr.mxu0 0.0
    %4083 = vmatpush2.msra.mxu0 %v2717
    %4084 = vmatprep.subr.mxu0 0.0
    %4085 = vmatpush2.msra.mxu0 %v2714
    %4086 = vmatprep.subr.mxu0 0.0
    %4087 = vmatpush2.msra.mxu0 %v2711
    %4088 = vmatprep.subr.mxu0 0.0
    %4089 = vmatpush2.msra.mxu0 %v2708
    %4090 = vmatprep.subr.mxu0 0.0
    %4091 = vmatpush2.msra.mxu0 %v2705
    %4092 = vmatprep.subr.mxu0 0.0
    %4093 = vmatpush2.msra.mxu0 %v2702
    %4094 = vmatprep.subr.mxu0 0.0
    %4095 = vmatpush2.msra.mxu0 %v2699
    %4096 = vmatprep.mubr.f32.mxu0 %v3680
    %4097 = vmatmul.mubr.f32.gmra.mxu0 %v3679
    %v4098 = vpop.f32.mrf.mxu0
    %v4099 = vadd.f32 0.0, %v4098
    %v4100 = vpop.f32.mrf.mxu0
    %4101 = vmatprep.mubr.f32.mxu0 %v3687
    %4102 = vmatmul.mubr.f32.gmra.mxu0 %v3686
    %v4103 = vpop.f32.mrf.mxu0
    %v4104 = vadd.f32 0.0, %v4103
    %v4105 = vpop.f32.mrf.mxu0
    %4106 = vmatprep.mubr.f32.mxu0 %v3694
    %4107 = vmatmul.mubr.f32.gmra.mxu0 %v3693
    %v4108 = vpop.f32.mrf.mxu0
    %v4109 = vadd.f32 0.0, %v4108
    %v4110 = vpop.f32.mrf.mxu0
    %4111 = vdwg.mxu0
    %4112 = vmatprep.subr.mxu0 0.0
    %4113 = vmatpush1.msra.mxu0 %v2792
    %4114 = vmatprep.subr.mxu0 0.0
    %4115 = vmatpush1.msra.mxu0 %v2789
    %4116 = vmatprep.subr.mxu0 0.0
    %4117 = vmatpush1.msra.mxu0 %v2786
    %4118 = vmatprep.subr.mxu0 0.0
    %4119 = vmatpush1.msra.mxu0 %v2783
    %4120 = vmatprep.subr.mxu0 0.0
    %4121 = vmatpush1.msra.mxu0 %v2780
    %4122 = vmatprep.subr.mxu0 0.0
    %4123 = vmatpush1.msra.mxu0 %v2777
    %4124 = vmatprep.subr.mxu0 0.0
    %4125 = vmatpush1.msra.mxu0 %v2774
    %4126 = vmatprep.subr.mxu0 0.0
    %4127 = vmatpush1.msra.mxu0 %v2771
    %4128 = vmatprep.subr.mxu0 0.0
    %4129 = vmatpush1.msra.mxu0 %v2768
    %4130 = vmatprep.subr.mxu0 0.0
    %4131 = vmatpush1.msra.mxu0 %v2765
    %4132 = vmatprep.subr.mxu0 0.0
    %4133 = vmatpush1.msra.mxu0 %v2762
    %4134 = vmatprep.subr.mxu0 0.0
    %4135 = vmatpush1.msra.mxu0 %v2759
    %4136 = vmatprep.subr.mxu0 0.0
    %4137 = vmatpush1.msra.mxu0 %v2756
    %4138 = vmatprep.subr.mxu0 0.0
    %4139 = vmatpush1.msra.mxu0 %v2753
    %4140 = vmatprep.subr.mxu0 0.0
    %4141 = vmatpush1.msra.mxu0 %v2750
    %4142 = vmatprep.subr.mxu0 0.0
    %4143 = vmatpush1.msra.mxu0 %v2747
    %4144 = vmatprep.subr.mxu0 0.0
    %4145 = vmatpush2.msra.mxu0 %v2840
    %4146 = vmatprep.subr.mxu0 0.0
    %4147 = vmatpush2.msra.mxu0 %v2837
    %4148 = vmatprep.subr.mxu0 0.0
    %4149 = vmatpush2.msra.mxu0 %v2834
    %4150 = vmatprep.subr.mxu0 0.0
    %4151 = vmatpush2.msra.mxu0 %v2831
    %4152 = vmatprep.subr.mxu0 0.0
    %4153 = vmatpush2.msra.mxu0 %v2828
    %4154 = vmatprep.subr.mxu0 0.0
    %4155 = vmatpush2.msra.mxu0 %v2825
    %4156 = vmatprep.subr.mxu0 0.0
    %4157 = vmatpush2.msra.mxu0 %v2822
    %4158 = vmatprep.subr.mxu0 0.0
    %4159 = vmatpush2.msra.mxu0 %v2819
    %4160 = vmatprep.subr.mxu0 0.0
    %4161 = vmatpush2.msra.mxu0 %v2816
    %4162 = vmatprep.subr.mxu0 0.0
    %4163 = vmatpush2.msra.mxu0 %v2813
    %4164 = vmatprep.subr.mxu0 0.0
    %4165 = vmatpush2.msra.mxu0 %v2810
    %4166 = vmatprep.subr.mxu0 0.0
    %4167 = vmatpush2.msra.mxu0 %v2807
    %4168 = vmatprep.subr.mxu0 0.0
    %4169 = vmatpush2.msra.mxu0 %v2804
    %4170 = vmatprep.subr.mxu0 0.0
    %4171 = vmatpush2.msra.mxu0 %v2801
    %4172 = vmatprep.subr.mxu0 0.0
    %4173 = vmatpush2.msra.mxu0 %v2798
    %4174 = vmatprep.subr.mxu0 0.0
    %4175 = vmatpush2.msra.mxu0 %v2795
    %4176 = vmatprep.mubr.f32.mxu0 %v3682
    %4177 = vmatmul.mubr.f32.gmra.mxu0 %v3681
    %v4178 = vpop.f32.mrf.mxu0
    %v4179 = vadd.f32 %v4099, %v4178
    %v4180 = vpop.f32.mrf.mxu0
    %4181 = vmatprep.mubr.f32.mxu0 %v3689
    %4182 = vmatmul.mubr.f32.gmra.mxu0 %v3688
    %v4183 = vpop.f32.mrf.mxu0
    %v4184 = vadd.f32 %v4104, %v4183
    %v4185 = vpop.f32.mrf.mxu0
    %4186 = vmatprep.mubr.f32.mxu0 %v3696
    %4187 = vmatmul.mubr.f32.gmra.mxu0 %v3695
    %v4188 = vpop.f32.mrf.mxu0
    %v4189 = vadd.f32 %v4109, %v4188
    %v4190 = vpop.f32.mrf.mxu0
    %4191 = vdwg.mxu0
    %4192 = vmatprep.subr.mxu0 0.0
    %4193 = vmatpush1.msra.mxu0 %v2888
    %4194 = vmatprep.subr.mxu0 0.0
    %4195 = vmatpush1.msra.mxu0 %v2885
    %4196 = vmatprep.subr.mxu0 0.0
    %4197 = vmatpush1.msra.mxu0 %v2882
    %4198 = vmatprep.subr.mxu0 0.0
    %4199 = vmatpush1.msra.mxu0 %v2879
    %4200 = vmatprep.subr.mxu0 0.0
    %4201 = vmatpush1.msra.mxu0 %v2876
    %4202 = vmatprep.subr.mxu0 0.0
    %4203 = vmatpush1.msra.mxu0 %v2873
    %4204 = vmatprep.subr.mxu0 0.0
    %4205 = vmatpush1.msra.mxu0 %v2870
    %4206 = vmatprep.subr.mxu0 0.0
    %4207 = vmatpush1.msra.mxu0 %v2867
    %4208 = vmatprep.subr.mxu0 0.0
    %4209 = vmatpush1.msra.mxu0 %v2864
    %4210 = vmatprep.subr.mxu0 0.0
    %4211 = vmatpush1.msra.mxu0 %v2861
    %4212 = vmatprep.subr.mxu0 0.0
    %4213 = vmatpush1.msra.mxu0 %v2858
    %4214 = vmatprep.subr.mxu0 0.0
    %4215 = vmatpush1.msra.mxu0 %v2855
    %4216 = vmatprep.subr.mxu0 0.0
    %4217 = vmatpush1.msra.mxu0 %v2852
    %4218 = vmatprep.subr.mxu0 0.0
    %4219 = vmatpush1.msra.mxu0 %v2849
    %4220 = vmatprep.subr.mxu0 0.0
    %4221 = vmatpush1.msra.mxu0 %v2846
    %4222 = vmatprep.subr.mxu0 0.0
    %4223 = vmatpush1.msra.mxu0 %v2843
    %4224 = vmatprep.subr.mxu0 0.0
    %4225 = vmatpush2.msra.mxu0 %v2936
    %4226 = vmatprep.subr.mxu0 0.0
    %4227 = vmatpush2.msra.mxu0 %v2933
    %4228 = vmatprep.subr.mxu0 0.0
    %4229 = vmatpush2.msra.mxu0 %v2930
    %4230 = vmatprep.subr.mxu0 0.0
    %4231 = vmatpush2.msra.mxu0 %v2927
    %4232 = vmatprep.subr.mxu0 0.0
    %4233 = vmatpush2.msra.mxu0 %v2924
    %4234 = vmatprep.subr.mxu0 0.0
    %4235 = vmatpush2.msra.mxu0 %v2921
    %4236 = vmatprep.subr.mxu0 0.0
    %4237 = vmatpush2.msra.mxu0 %v2918
    %4238 = vmatprep.subr.mxu0 0.0
    %4239 = vmatpush2.msra.mxu0 %v2915
    %4240 = vmatprep.subr.mxu0 0.0
    %4241 = vmatpush2.msra.mxu0 %v2912
    %4242 = vmatprep.subr.mxu0 0.0
    %4243 = vmatpush2.msra.mxu0 %v2909
    %4244 = vmatprep.subr.mxu0 0.0
    %4245 = vmatpush2.msra.mxu0 %v2906
    %4246 = vmatprep.subr.mxu0 0.0
    %4247 = vmatpush2.msra.mxu0 %v2903
    %4248 = vmatprep.subr.mxu0 0.0
    %4249 = vmatpush2.msra.mxu0 %v2900
    %4250 = vmatprep.subr.mxu0 0.0
    %4251 = vmatpush2.msra.mxu0 %v2897
    %4252 = vmatprep.subr.mxu0 0.0
    %4253 = vmatpush2.msra.mxu0 %v2894
    %4254 = vmatprep.subr.mxu0 0.0
    %4255 = vmatpush2.msra.mxu0 %v2891
    %4256 = vmatprep.mubr.f32.mxu0 %v3684
    %4257 = vmatmul.mubr.f32.gmra.mxu0 %v3683
    %v4258 = vpop.f32.mrf.mxu0
    %v4259 = vadd.f32 %v4179, %v4258
    %v4260 = vpop.f32.mrf.mxu0
    %4261 = vmatprep.mubr.f32.mxu0 %v3691
    %4262 = vmatmul.mubr.f32.gmra.mxu0 %v3690
    %v4263 = vpop.f32.mrf.mxu0
    %v4264 = vadd.f32 %v4184, %v4263
    %v4265 = vpop.f32.mrf.mxu0
    %4266 = vmatprep.mubr.f32.mxu0 %v3698
    %4267 = vmatmul.mubr.f32.gmra.mxu0 %v3697
    %v4268 = vpop.f32.mrf.mxu0
    %v4269 = vadd.f32 %v4189, %v4268
    %v4270 = vpop.f32.mrf.mxu0
    %4271 = vdwg.mxu0
    %4272 = vmatprep.subr.mxu0 0.0
    %4273 = vmatpush1.msra.mxu0 %v2984
    %4274 = vmatprep.subr.mxu0 0.0
    %4275 = vmatpush1.msra.mxu0 %v2981
    %4276 = vmatprep.subr.mxu0 0.0
    %4277 = vmatpush1.msra.mxu0 %v2978
    %4278 = vmatprep.subr.mxu0 0.0
    %4279 = vmatpush1.msra.mxu0 %v2975
    %4280 = vmatprep.subr.mxu0 0.0
    %4281 = vmatpush1.msra.mxu0 %v2972
    %4282 = vmatprep.subr.mxu0 0.0
    %4283 = vmatpush1.msra.mxu0 %v2969
    %4284 = vmatprep.subr.mxu0 0.0
    %4285 = vmatpush1.msra.mxu0 %v2966
    %4286 = vmatprep.subr.mxu0 0.0
    %4287 = vmatpush1.msra.mxu0 %v2963
    %4288 = vmatprep.subr.mxu0 0.0
    %4289 = vmatpush1.msra.mxu0 %v2960
    %4290 = vmatprep.subr.mxu0 0.0
    %4291 = vmatpush1.msra.mxu0 %v2957
    %4292 = vmatprep.subr.mxu0 0.0
    %4293 = vmatpush1.msra.mxu0 %v2954
    %4294 = vmatprep.subr.mxu0 0.0
    %4295 = vmatpush1.msra.mxu0 %v2951
    %4296 = vmatprep.subr.mxu0 0.0
    %4297 = vmatpush1.msra.mxu0 %v2948
    %4298 = vmatprep.subr.mxu0 0.0
    %4299 = vmatpush1.msra.mxu0 %v2945
    %4300 = vmatprep.subr.mxu0 0.0
    %4301 = vmatpush1.msra.mxu0 %v2942
    %4302 = vmatprep.subr.mxu0 0.0
    %4303 = vmatpush1.msra.mxu0 %v2939
    %4304 = vmatprep.subr.mxu0 0.0
    %4305 = vmatpush2.msra.mxu0 0.0
    %4306 = vmatprep.subr.mxu0 0.0
    %4307 = vmatpush2.msra.mxu0 0.0
    %4308 = vmatprep.subr.mxu0 0.0
    %4309 = vmatpush2.msra.mxu0 0.0
    %4310 = vmatprep.subr.mxu0 0.0
    %4311 = vmatpush2.msra.mxu0 0.0
    %4312 = vmatprep.subr.mxu0 0.0
    %4313 = vmatpush2.msra.mxu0 0.0
    %4314 = vmatprep.subr.mxu0 0.0
    %4315 = vmatpush2.msra.mxu0 0.0
    %4316 = vmatprep.subr.mxu0 0.0
    %4317 = vmatpush2.msra.mxu0 0.0
    %4318 = vmatprep.subr.mxu0 0.0
    %4319 = vmatpush2.msra.mxu0 0.0
    %4320 = vmatprep.subr.mxu0 0.0
    %4321 = vmatpush2.msra.mxu0 0.0
    %4322 = vmatprep.subr.mxu0 0.0
    %4323 = vmatpush2.msra.mxu0 0.0
    %4324 = vmatprep.subr.mxu0 0.0
    %4325 = vmatpush2.msra.mxu0 0.0
    %4326 = vmatprep.subr.mxu0 0.0
    %4327 = vmatpush2.msra.mxu0 0.0
    %4328 = vmatprep.subr.mxu0 0.0
    %4329 = vmatpush2.msra.mxu0 0.0
    %4330 = vmatprep.subr.mxu0 0.0
    %4331 = vmatpush2.msra.mxu0 0.0
    %4332 = vmatprep.subr.mxu0 0.0
    %4333 = vmatpush2.msra.mxu0 0.0
    %4334 = vmatprep.subr.mxu0 0.0
    %4335 = vmatpush2.msra.mxu0 0.0
    %4336 = vmatprep.mubr.f32.mxu0 0.0
    %4337 = vmatmul.mubr.f32.gmra.mxu0 %v3685
    %v4338 = vpop.f32.mrf.mxu0
    %v4339 = vadd.f32 %v4259, %v4338
    %v4340 = vpop.f32.mrf.mxu0
    %4341 = vmatprep.mubr.f32.mxu0 0.0
    %4342 = vmatmul.mubr.f32.gmra.mxu0 %v3692
    %v4343 = vpop.f32.mrf.mxu0
    %v4344 = vadd.f32 %v4264, %v4343
    %v4345 = vpop.f32.mrf.mxu0
    %4346 = vmatprep.mubr.f32.mxu0 0.0
    %4347 = vmatmul.mubr.f32.gmra.mxu0 %v3699
    %v4348 = vpop.f32.mrf.mxu0
    %v4349 = vadd.f32 %v4269, %v4348
    %v4350 = vpop.f32.mrf.mxu0
    %4351 = vdwg.mxu0
    %v4355 = vrot.slane %v4018, 1
    %v4356 = vrot.slane %v4024, 1
    %v4357 = vsel %vm510, %v4355, %v4356
    %v4358 = vrot.slane %v4030, 1
    %v4359 = vsel %vm510, %v4356, %v4358
    %v4363 = vadd.f32 %v4016, %v4357
    %v4364 = vadd.f32 %v4022, %v4359
    %v4365 = vadd.f32 %v4028, %v4358
    %v4369 = vrot.slane %v4339, 2
    %v4370 = vrot.slane %v4344, 2
    %v4371 = vsel %vm3654, %v4369, %v4370
    %v4372 = vrot.slane %v4349, 2
    %v4373 = vsel %vm3654, %v4370, %v4372
    %v4377 = vadd.f32 %v4363, %v4371
    %v4378 = vadd.f32 %v4364, %v4373
    %v4379 = vadd.f32 %v4365, %v4372
    %v4380 = vadd.f32 %v4377, %v3671
    %v4381 = vadd.f32 %v4378, %v3671
    %v4382 = vadd.f32 %v4379, %v3671
    %v4383 = vmax.f32 %v4380, 0.0
    %v4384 = vmax.f32 %v4381, 0.0
    %v4385 = vmax.f32 %v4382, 0.0
    %v4386 = vld [vmem:[%s5] sm:$0xff]
    %v4387 = vld [vmem:[%s5 + $0x8] sm:$0xff]
    %v4388 = vld [vmem:[%s5 + $0x10] sm:$0xff]
    %v4389 = vld [vmem:[%s5 + $0x18] sm:$0xff]
    %v4390 = vld [vmem:[%s5 + $0x20] sm:$0xff]
    %v4391 = vld [vmem:[%s5 + $0x28] sm:$0xff]
    %v4392 = vld [vmem:[%s5 + $0x30] sm:$0xff]
    %v4393 = vld [vmem:[%s5 + $0x38] sm:$0xff]
    %v4394 = vld [vmem:[%s5 + $0x40] sm:$0xff]
    %v4395 = vld [vmem:[%s5 + $0x48] sm:$0xff]
    %v4396 = vld [vmem:[%s5 + $0x50] sm:$0xff]
    %v4397 = vld [vmem:[%s5 + $0x58] sm:$0xff]
    %v4398 = vld [vmem:[%s5 + $0x60] sm:$0xff]
    %v4399 = vld [vmem:[%s5 + $0x68] sm:$0xff]
    %v4400 = vld [vmem:[%s5 + $0x70] sm:$0xff]
    %v4401 = vld [vmem:[%s5 + $0x78] sm:$0xff]
    %v4402 = vld [vmem:[%s5 + $0x80] sm:$0xff]
    %v4403 = vld [vmem:[%s5 + $0x88] sm:$0xff]
    %v4404 = vld [vmem:[%s5 + $0x90] sm:$0xff]
    %v4405 = vld [vmem:[%s5 + $0x98] sm:$0xff]
    %v4406 = vld [vmem:[%s5 + $0xa0] sm:$0xff]
    %v4407 = vld [vmem:[%s5 + $0xa8] sm:$0xff]
    %v4408 = vld [vmem:[%s5 + $0xb0] sm:$0xff]
    %v4409 = vld [vmem:[%s5 + $0xb8] sm:$0xff]
    %v4410 = vld [vmem:[%s5 + $0xc0] sm:$0xff]
    %v4411 = vld [vmem:[%s5 + $0xc8] sm:$0xff]
    %v4412 = vld [vmem:[%s5 + $0xd0] sm:$0xff]
    %v4413 = vld [vmem:[%s5 + $0xd8] sm:$0xff]
    %v4414 = vld [vmem:[%s5 + $0xe0] sm:$0xff]
    %v4415 = vld [vmem:[%s5 + $0xe8] sm:$0xff]
    %v4416 = vld [vmem:[%s5 + $0xf0] sm:$0xff]
    %v4417 = vld [vmem:[%s5 + $0xf8] sm:$0xff]
    %v4418 = vld [vmem:[%s6] sm:$0x1]
    %v4420 = vlaneseq
    %v4421 = vshrl.u32 %v4420, 7
    %v4422 = vsub.s32 0, %v4421
    %v4423 = vrot.slane %v4418, %v4422
    %4425 = vmatprep.subr.mxu0 0.0
    %4426 = vmatpush1.msra.mxu0 %v4401
    %4427 = vmatprep.subr.mxu0 0.0
    %4428 = vmatpush1.msra.mxu0 %v4400
    %4429 = vmatprep.subr.mxu0 0.0
    %4430 = vmatpush1.msra.mxu0 %v4399
    %4431 = vmatprep.subr.mxu0 0.0
    %4432 = vmatpush1.msra.mxu0 %v4398
    %4433 = vmatprep.subr.mxu0 0.0
    %4434 = vmatpush1.msra.mxu0 %v4397
    %4435 = vmatprep.subr.mxu0 0.0
    %4436 = vmatpush1.msra.mxu0 %v4396
    %4437 = vmatprep.subr.mxu0 0.0
    %4438 = vmatpush1.msra.mxu0 %v4395
    %4439 = vmatprep.subr.mxu0 0.0
    %4440 = vmatpush1.msra.mxu0 %v4394
    %4441 = vmatprep.subr.mxu0 0.0
    %4442 = vmatpush1.msra.mxu0 %v4393
    %4443 = vmatprep.subr.mxu0 0.0
    %4444 = vmatpush1.msra.mxu0 %v4392
    %4445 = vmatprep.subr.mxu0 0.0
    %4446 = vmatpush1.msra.mxu0 %v4391
    %4447 = vmatprep.subr.mxu0 0.0
    %4448 = vmatpush1.msra.mxu0 %v4390
    %4449 = vmatprep.subr.mxu0 0.0
    %4450 = vmatpush1.msra.mxu0 %v4389
    %4451 = vmatprep.subr.mxu0 0.0
    %4452 = vmatpush1.msra.mxu0 %v4388
    %4453 = vmatprep.subr.mxu0 0.0
    %4454 = vmatpush1.msra.mxu0 %v4387
    %4455 = vmatprep.subr.mxu0 0.0
    %4456 = vmatpush1.msra.mxu0 %v4386
    %4457 = vmatprep.subr.mxu0 0.0
    %4458 = vmatpush2.msra.mxu0 %v4417
    %4459 = vmatprep.subr.mxu0 0.0
    %4460 = vmatpush2.msra.mxu0 %v4416
    %4461 = vmatprep.subr.mxu0 0.0
    %4462 = vmatpush2.msra.mxu0 %v4415
    %4463 = vmatprep.subr.mxu0 0.0
    %4464 = vmatpush2.msra.mxu0 %v4414
    %4465 = vmatprep.subr.mxu0 0.0
    %4466 = vmatpush2.msra.mxu0 %v4413
    %4467 = vmatprep.subr.mxu0 0.0
    %4468 = vmatpush2.msra.mxu0 %v4412
    %4469 = vmatprep.subr.mxu0 0.0
    %4470 = vmatpush2.msra.mxu0 %v4411
    %4471 = vmatprep.subr.mxu0 0.0
    %4472 = vmatpush2.msra.mxu0 %v4410
    %4473 = vmatprep.subr.mxu0 0.0
    %4474 = vmatpush2.msra.mxu0 %v4409
    %4475 = vmatprep.subr.mxu0 0.0
    %4476 = vmatpush2.msra.mxu0 %v4408
    %4477 = vmatprep.subr.mxu0 0.0
    %4478 = vmatpush2.msra.mxu0 %v4407
    %4479 = vmatprep.subr.mxu0 0.0
    %4480 = vmatpush2.msra.mxu0 %v4406
    %4481 = vmatprep.subr.mxu0 0.0
    %4482 = vmatpush2.msra.mxu0 %v4405
    %4483 = vmatprep.subr.mxu0 0.0
    %4484 = vmatpush2.msra.mxu0 %v4404
    %4485 = vmatprep.subr.mxu0 0.0
    %4486 = vmatpush2.msra.mxu0 %v4403
    %4487 = vmatprep.subr.mxu0 0.0
    %4488 = vmatpush2.msra.mxu0 %v4402
    %4489 = vmatprep.mubr.f32.mxu0 %v4383
    %4490 = vmatmul.mubr.f32.gmra.mxu0 %v3676
    %v4491 = vpop.f32.mrf.mxu0
    %v4492 = vadd.f32 %v4423, %v4491
    %v4493 = vpop.f32.mrf.mxu0
    %4494 = vmatprep.mubr.f32.mxu0 %v4384
    %4495 = vmatmul.mubr.f32.gmra.mxu0 %v3677
    %v4496 = vpop.f32.mrf.mxu0
    %v4497 = vadd.f32 %v4423, %v4496
    %v4498 = vpop.f32.mrf.mxu0
    %4499 = vmatprep.mubr.f32.mxu0 %v4385
    %4500 = vmatmul.mubr.f32.gmra.mxu0 %v3678
    %v4501 = vpop.f32.mrf.mxu0
    %v4502 = vadd.f32 %v4423, %v4501
    %v4503 = vpop.f32.mrf.mxu0
    %4504 = vdwg.mxu0
    %4505 = vst [vmem:[#allocation3] sm:$0xff] %v4492
    %s4506 = scalar_lea.vmem [#allocation3], 8
    %4507 = vst [vmem:[%s4506 - $0x2] sm:$0xfc] %v4497
    %4508 = vst [vmem:[%s4506 + $0x6] sm:$0x3] %v4502
    // Predicated region
    $region30: #{conv2d_encoder_forward.1} parent=1 // pred_check
      _
    $region31: #{conv2d_encoder_forward.1} parent=1 // pred_check_branch
      %4510 = sbr.rel (0) target = $region33
    $region32: #{conv2d_encoder_forward.1} parent=1 // pred_region
      %s4512 = ssub.s32 256, 256
      %4513 = vsyncadd [#allocation4], %s4512
      %s4514 = sshll.u32 [#allocation3], 4
      %s4515 = int_to_ptr.vmem [resolvable:$true] %s4514
      %4520 = dma.vmem_to_hbm [thread:$0]  %s4515, 256, %s7, [#allocation4], 128, 128, 8
    $region33: #{conv2d_encoder_forward.1} parent=1 // pred_fallthru
      _
    // Predicated region
    $region34: #{conv2d_encoder_forward.1} parent=1 // pred_check
      _
    $region35: #{conv2d_encoder_forward.1} parent=1 // pred_check_branch
      %4522 = sbr.rel (0) target = $region37
    $region36: #{conv2d_encoder_forward.1} parent=1 // pred_region
      %4523 = dma.done [#allocation4], 256
    $region37: #{conv2d_encoder_forward.1} parent=1 // pred_fallthru
      _
    %4524 = vsyncpa [#allocation4], 1

</llo_original>
